<compile_context>
chip_gen: v7x
topology: tpu7x:2x2x1
jax: 0.10.0
libtpu: 0.0.40
codegen_flags: <defaults>
</compile_context>

<pallas_src>
import functools
import math

import jax
import jax.numpy as jnp
from jax.experimental import pallas as pl
from jax.experimental.pallas import tpu as pltpu

LANES = 128
VMEM_LIMIT_BYTES = 48 * 1024 * 1024   # < v7x 64 MiB physical, > scoped defaults
# Adjacency / state operands for the HBM-bound matmuls.  f32 accumulation is kept
# everywhere via preferred_element_type.
OPERAND_DTYPE = jnp.bfloat16
# TODO(synk): on v7x the adjacency could additionally be stored as fp8 (e4m3);
# not applied here pending an accuracy check.


def _round_up(x, m):
    return ((x + m - 1) // m) * m


def _pick_tile(n):
    # 512-tiles reach ~85%+ of HBM roofline on large graphs; 128 is the minimum
    # lane/MXU tile for small problems (demo graph pads to 128).
    if n >= 1024:
        return 512
    if n >= 256:
        return 256
    return 128


def _pad2(x, rows, cols):
    r, c = x.shape
    return jnp.pad(x, ((0, rows - r), (0, cols - c)))


# --------------------------------------------------------------------------
# Kernel 1: tiled dense matmul (stand-in for torch.sparse.mm)
#   Accumulates directly into the f32 output ref (no scratch).
# --------------------------------------------------------------------------

def _matmul_kernel(a_ref, b_ref, o_ref):
    @pl.when(pl.program_id(2) == 0)
    def _init():
        o_ref[...] = jnp.zeros_like(o_ref)

    o_ref[...] += jnp.dot(a_ref[...], b_ref[...],
                          preferred_element_type=jnp.float32)


def graph_matmul(a, b, *, tm, tk, tn=LANES):
    """(M,K) @ (K,N) -> (M,N) f32; all dims pre-padded to tile multiples."""
    m, k = a.shape
    k2, n = b.shape
    assert k == k2 and m % tm == 0 and k % tk == 0 and n % tn == 0
    a = a.astype(OPERAND_DTYPE)
    b = b.astype(OPERAND_DTYPE)
    grid = (m // tm, n // tn, k // tk)
    return pl.pallas_call(
        _matmul_kernel,
        out_shape=jax.ShapeDtypeStruct((m, n), jnp.float32),
        grid_spec=pltpu.PrefetchScalarGridSpec(
            num_scalar_prefetch=0,
            grid=grid,
            in_specs=[pl.BlockSpec((tm, tk), lambda i, j, kk: (i, kk)),
                      pl.BlockSpec((tk, tn), lambda i, j, kk: (kk, j))],
            out_specs=pl.BlockSpec((tm, tn), lambda i, j, kk: (i, j))),
        compiler_params=pltpu.CompilerParams(
            dimension_semantics=("parallel", "parallel", "arbitrary"),
            vmem_limit_bytes=VMEM_LIMIT_BYTES),
    )(a, b)


# --------------------------------------------------------------------------
# Kernel 2: fused personality-routed propagation (lane-stacked).
#   E_stack is (N, P*dp), slab p already masked by m_p (row mask from the
#   previous layer, or hoisted into the wrapper for layer 1), so
#     E_new[p] = m_p ⊙ (A @ E_stack[:, p])
#   is ONE wide matmul per A tile plus a cheap per-slab VPU mask in finalize.
#   The across-p sum is emitted as a second lane-dense output.
# --------------------------------------------------------------------------

def _personality_prop_kernel(a_ref, e_ref, mrow_ref, outp_ref, outsum_ref,
                             *, n_personalities, dp):
    k = pl.program_id(1)

    @pl.when(k == 0)
    def _init():
        outp_ref[...] = jnp.zeros_like(outp_ref)

    # single wide MXU accumulate: (tm, tk) @ (tk, P*dp)
    outp_ref[...] += jnp.dot(a_ref[...], e_ref[...],
                             preferred_element_type=jnp.float32)

    @pl.when(k == pl.num_programs(1) - 1)
    def _finalize():
        acc = outp_ref[...]                      # (tm, P*dp)
        total = None
        for p in range(n_personalities):         # static unroll, P is tiny
            res = acc[:, p * dp:(p + 1) * dp] * mrow_ref[p]   # output-row mask
            outp_ref[:, p * dp:(p + 1) * dp] = res
            total = res if total is None else total + res
        outsum_ref[...] = total


def personality_propagate(a_pad, e_stacked, masks, *, n_personalities, dp, tm, tk):
    np_, pdp = e_stacked.shape
    assert pdp == n_personalities * dp
    assert a_pad.shape == (np_, np_) and np_ % tm == 0 and np_ % tk == 0
    a = a_pad.astype(OPERAND_DTYPE)
    e = e_stacked.astype(OPERAND_DTYPE)
    kernel = functools.partial(_personality_prop_kernel,
                               n_personalities=n_personalities, dp=dp)
    grid = (np_ // tm, np_ // tk)
    new_states, ui_sum = pl.pallas_call(
        kernel,
        out_shape=(jax.ShapeDtypeStruct((np_, pdp), jnp.float32),
                   jax.ShapeDtypeStruct((np_, dp), jnp.float32)),
        grid_spec=pltpu.PrefetchScalarGridSpec(
            num_scalar_prefetch=0,
            grid=grid,
            in_specs=[
                pl.BlockSpec((tm, tk), lambda i, k: (i, k)),            # A tile
                pl.BlockSpec((tk, pdp), lambda i, k: (k, 0)),           # E (lane-stacked)
                pl.BlockSpec((n_personalities, tm, 1), lambda i, k: (0, i, 0)),  # row masks
            ],
            out_specs=(
                pl.BlockSpec((tm, pdp), lambda i, k: (i, 0)),           # per-p states
                pl.BlockSpec((tm, dp), lambda i, k: (i, 0)),            # sum over p
            )),
        compiler_params=pltpu.CompilerParams(
            dimension_semantics=("parallel", "arbitrary"),
            vmem_limit_bytes=VMEM_LIMIT_BYTES),
    )(a, e, masks)
    return new_states, ui_sum


# --------------------------------------------------------------------------
# Kernel 3: ANewFusionModel
#   cat(x,y,x*y) is pre-packed in the wrapper (lane-compact), the kernel runs
#   fc1 -> tanh -> fc2 -> tanh -> fc3 and emits per-tile per-lane sum-of-squares
#   partials (so the grid axis can be parallel).  The global L2 normalisation
#   factor is computed in the wrapper and folded into the tiny consumers.
# --------------------------------------------------------------------------

def _fusion_kernel(cat_ref, w1_ref, b1_ref, w2_ref, b2_ref, w3_ref, b3_ref,
                   t3_ref, ss_ref, *, n_valid_rows, block_rows):
    i = pl.program_id(0)
    cat = cat_ref[...]
    t1 = jnp.tanh(jnp.dot(cat, w1_ref[...], preferred_element_type=jnp.float32)
                  + b1_ref[...])
    t2 = jnp.tanh(jnp.dot(t1, w2_ref[...], preferred_element_type=jnp.float32)
                  + b2_ref[...])
    t3 = jnp.dot(t2, w3_ref[...], preferred_element_type=jnp.float32) + b3_ref[...]
    # zero node-padding rows so they pollute neither the output nor the norm
    row = i * block_rows + jax.lax.broadcasted_iota(jnp.int32, t3.shape, 0)
    t3 = jnp.where(row < n_valid_rows, t3, 0.0)
    t3_ref[...] = t3
    # per-lane, per-tile partial sum of squares (cross-lane reduce done in XLA)
    ss_ref[0] = jnp.sum(t3 * t3, axis=0, keepdims=True)


def graph_comb(x, y, fusion_packed, *, d, n_valid_rows, tm):
    """Returns (t3_unnormalised, inv_norm).  Reference output == t3 * inv_norm."""
    w1, b1, w2, b2, w3, b3 = fusion_packed
    n, dp = x.shape
    assert n % tm == 0 and y.shape == (n, dp)
    cat_p = w1.shape[0]
    # lane-compact [x | y | x*y] built once in XLA (only the real d lanes)
    xr = x[:, :d]
    yr = y[:, :d]
    cat = jnp.concatenate([xr, yr, xr * yr], axis=1)
    cat = jnp.pad(cat, ((0, 0), (0, cat_p - 3 * d))).astype(jnp.float32)

    grid_m = n // tm
    kernel = functools.partial(_fusion_kernel,
                               n_valid_rows=n_valid_rows, block_rows=tm)
    t3, ss = pl.pallas_call(
        kernel,
        out_shape=(jax.ShapeDtypeStruct((n, dp), jnp.float32),
                   jax.ShapeDtypeStruct((grid_m, 1, dp), jnp.float32)),
        grid_spec=pltpu.PrefetchScalarGridSpec(
            num_scalar_prefetch=0,
            grid=(grid_m,),
            in_specs=[pl.BlockSpec((tm, cat_p), lambda i: (i, 0)),
                      pl.BlockSpec(w1.shape, lambda i: (0, 0)),
                      pl.BlockSpec(b1.shape, lambda i: (0, 0)),
                      pl.BlockSpec(w2.shape, lambda i: (0, 0)),
                      pl.BlockSpec(b2.shape, lambda i: (0, 0)),
                      pl.BlockSpec(w3.shape, lambda i: (0, 0)),
                      pl.BlockSpec(b3.shape, lambda i: (0, 0))],
            out_specs=(pl.BlockSpec((tm, dp), lambda i: (i, 0)),
                       pl.BlockSpec((1, 1, dp), lambda i: (i, 0, 0)))),
        compiler_params=pltpu.CompilerParams(
            dimension_semantics=("parallel",),
            vmem_limit_bytes=VMEM_LIMIT_BYTES),
    )(cat, w1, b1, w2, b2, w3, b3)
    # global Frobenius norm (reference: tmp3 / tmp3.norm(2)); eps guards /0
    inv = jax.lax.rsqrt(jnp.maximum(jnp.sum(ss), 1e-24))
    return t3, inv


# --------------------------------------------------------------------------
# Tiny ops left to XLA (launch overhead dominates here)
# --------------------------------------------------------------------------

def personality_scores(x, mlp_params):
    """fc -> leaky_relu -> fc2 -> leaky_relu -> fc_personalities (routing head)."""
    wf, bf, w2, b2, wp, bp = mlp_params
    slope = jnp.float32(0.01)  # torch LeakyReLU default
    h = x @ wf + bf
    h = jnp.where(h > 0, h, slope * h)
    # TODO(synk): nn.Dropout(p=0.5) is stochastic in train mode; eval-mode identity here.
    h = h @ w2 + b2
    h = jnp.where(h > 0, h, slope * h)
    return h @ wp + bp


# --------------------------------------------------------------------------
# Parameter / graph construction (deterministic, synthetic)
# --------------------------------------------------------------------------

def _xavier_uniform(key, shape):
    bound = math.sqrt(6.0 / (shape[0] + shape[1]))
    return jax.random.uniform(key, shape, jnp.float32, -bound, bound)


def _linear(key, fan_in, fan_out):
    # torch Linear stores W as (out, in); we keep W^T (in, out).  bias init 0.
    w = 0.01 * jax.random.normal(key, (fan_in, fan_out), dtype=jnp.float32)
    b = jnp.zeros((1, fan_out), dtype=jnp.float32)
    return w, b


def init_params(key, n_users, m_items, latent_dim, personalities):
    ks = jax.random.split(key, 8)
    params = {}
    params["emb_user"] = _xavier_uniform(ks[0], (n_users, latent_dim))
    params["emb_item"] = _xavier_uniform(ks[1], (m_items, latent_dim))
    wf, bf = _linear(ks[2], latent_dim, latent_dim)          # self.fc
    w2, b2 = _linear(ks[3], latent_dim, latent_dim)          # self.fc2
    wp, bp = _linear(ks[4], latent_dim, personalities)       # self.fc_personalities
    params["mlp"] = (wf, bf, w2, b2, wp, bp)
    fw1, fb1 = _linear(ks[5], latent_dim * 3, latent_dim * 3)
    fw2, fb2 = _linear(ks[6], latent_dim * 3, latent_dim)
    fw3, fb3 = _linear(ks[7], latent_dim, latent_dim)
    params["fusion"] = (fw1, fb1, fw2, fb2, fw3, fb3)
    return params


def make_graphs(key, n_users, m_items):
    # TODO(synk): dense synthetic stand-ins for dataset.getSparseGraph()/getSocialGraph()
    # (torch.sparse.mm replaced by dense padded matmuls: O(N^2), not O(nnz)).
    n = n_users + m_items
    k1, k2 = jax.random.split(key)
    a = jax.random.uniform(k1, (n, n), jnp.float32)
    a = 0.5 * (a + a.T)
    a = a / jnp.sum(a, axis=1, keepdims=True)
    s = jax.random.uniform(k2, (n_users, n_users), jnp.float32)
    s = 0.5 * (s + s.T)
    s = s / jnp.sum(s, axis=1, keepdims=True)
    return a, s


def pack_fusion_params(fusion_params, d, dp, cat_p):
    """Lane-compact fusion weights: the concatenated input occupies the first
    3*d lanes of a cat_p-wide slab; padded rows/cols are inert (bias pads 0)."""
    fw1, fb1, fw2, fb2, fw3, fb3 = fusion_params
    w1 = jnp.zeros((cat_p, cat_p), jnp.float32).at[:3 * d, :3 * d].set(fw1)
    b1 = jnp.zeros((1, cat_p), jnp.float32).at[:, :3 * d].set(fb1)
    w2 = jnp.zeros((cat_p, dp), jnp.float32).at[:3 * d, :d].set(fw2)
    b2 = jnp.zeros((1, dp), jnp.float32).at[:, :d].set(fb2)
    w3 = jnp.zeros((dp, dp), jnp.float32).at[:d, :d].set(fw3)
    b3 = jnp.zeros((1, dp), jnp.float32).at[:, :d].set(fb3)
    return w1, b1, w2, b2, w3, b3


def build_personality_masks(assign, n_users, m_items, n_pad, personalities):
    """dataset.getSubGraph(user_list) realised as per-node 0/1 masks:
    keep users routed to p plus all item nodes; padded nodes -> 0."""
    node = jnp.arange(n_pad)
    is_item = (node >= n_users) & (node < n_users + m_items)
    assign_full = jnp.concatenate(
        [assign.astype(jnp.int32), -jnp.ones((n_pad - n_users,), jnp.int32)])
    per_p = assign_full[None, :] == jnp.arange(personalities, dtype=jnp.int32)[:, None]
    masks = (per_p | is_item[None, :]).astype(jnp.float32)
    return masks[:, :, None]  # (P, NP, 1)


# --------------------------------------------------------------------------
# PAGCN.computer() and forward()
# --------------------------------------------------------------------------

def computer(params, inter_graph, social_graph, *, n_users, m_items, n_layers,
             personalities, latent_dim):
    d = latent_dim
    dp = _round_up(d, LANES)
    cat_p = _round_up(3 * d, LANES)
    n_nodes = n_users + m_items
    tile = _pick_tile(n_nodes)
    np_ = _round_up(n_nodes, tile)
    nup = _round_up(n_users, tile)

    # pad graphs / embeddings to MXU-friendly shapes (zero pads are inert)
    a_pad = _pad2(inter_graph, np_, np_)
    s_pad = _pad2(social_graph, nup, nup)

    emb_u, emb_i = params["emb_user"], params["emb_item"]
    e0_pad = jnp.zeros((np_, dp), jnp.float32)
    e0_pad = e0_pad.at[:n_users, :d].set(emb_u)
    e0_pad = e0_pad.at[n_users:n_nodes, :d].set(emb_i)
    u_emb_pad = jnp.zeros((nup, dp), jnp.float32).at[:n_users, :d].set(emb_u)

    fusion_p = pack_fusion_params(params["fusion"], d, dp, cat_p)

    # one hop over the interaction graph + ego fusion + personality routing
    e1 = graph_matmul(a_pad, e0_pad, tm=tile, tk=tile)
    e01_t3, e01_inv = graph_comb(e1[:nup], u_emb_pad, fusion_p,
                                 d=d, n_valid_rows=n_users, tm=tile)
    scores = personality_scores(e01_t3[:n_users, :d] * e01_inv, params["mlp"])
    assign = jnp.argmax(scores, axis=1)           # == torch.topk(k=1) index
    masks = build_personality_masks(assign, n_users, m_items, np_, personalities)

    # pre-masked, lane-stacked per-personality states (layer-1 column mask hoisted
    # here; later layers are already row-masked by the kernel finalize).
    e_stack = jnp.concatenate([masks[p] * e0_pad for p in range(personalities)],
                              axis=1)             # (np_, P*dp)

    u_social = u_emb_pad
    layers = [float(personalities) * e0_pad[:n_nodes]]   # sum of P copies of e0
    for _ in range(n_layers):
        e_stack, ui = personality_propagate(a_pad, e_stack, masks,
                                            n_personalities=personalities, dp=dp,
                                            tm=tile, tk=tile)
        u_social = graph_matmul(s_pad, u_social, tm=tile, tk=tile)
        u_t3, u_inv = graph_comb(ui[:nup], u_social, fusion_p,
                                 d=d, n_valid_rows=n_users, tm=tile)
        # fold the L2-normalisation factor into the (small) consumer slice
        layers.append(jnp.concatenate([u_t3[:n_users] * u_inv,
                                       ui[n_users:n_nodes]], axis=0))

    mean_emb = jnp.mean(jnp.stack(layers, axis=1), axis=1)  # (n_nodes, dp)
    return mean_emb[:n_users], mean_emb[n_users:]


@functools.partial(jax.jit, static_argnames=("n_users", "m_items", "n_layers",
                                             "personalities", "latent_dim"))
def pagcn_forward(params, inter_graph, social_graph, users_, items_, *,
                  n_users, m_items, n_layers, personalities, latent_dim):
    all_users, all_items = computer(params, inter_graph, social_graph,
                                    n_users=n_users, m_items=m_items,
                                    n_layers=n_layers, personalities=personalities,
                                    latent_dim=latent_dim)
    users_emb = all_users[users_]
    items_emb = all_items[items_]
    # final per-pair dot (tiny, left to XLA); padded feature lanes are zero
    return jnp.sum(users_emb * items_emb, axis=1)


# --------------------------------------------------------------------------
# Main
# --------------------------------------------------------------------------

if __name__ == "__main__":
    n_users, m_items = 24, 40
    latent_dim = 16
    n_layers = 2
    personalities = 3

    key = jax.random.PRNGKey(0)
    k_params, k_graph = jax.random.split(key)

    params = init_params(k_params, n_users, m_items, latent_dim, personalities)
    inter_graph, social_graph = make_graphs(k_graph, n_users, m_items)

    users_ = jnp.array([0, 3, 5, 7, 11, 23], dtype=jnp.int32)
    items_ = jnp.array([1, 2, 8, 13, 21, 39], dtype=jnp.int32)

    gamma = pagcn_forward(params, inter_graph, social_graph, users_, items_,
                          n_users=n_users, m_items=m_items, n_layers=n_layers,
                          personalities=personalities, latent_dim=latent_dim)
    gamma = jax.block_until_ready(gamma)
    assert gamma.shape == (users_.shape[0],)
    assert bool(jnp.all(jnp.isfinite(gamma)))
    print("KERNEL_OK")
</pallas_src>

<mosaic_0001>
module attributes {stable_mosaic.version = 11 : i64} {
  func.func @_matmul_kernel(%arg0: i32, %arg1: i32, %arg2: i32, %arg3: memref<128x128xbf16, #tpu.memory_space<vmem>>, %arg4: memref<128x128xbf16, #tpu.memory_space<vmem>>, %arg5: memref<128x128xf32, #tpu.memory_space<vmem>>) attributes {dimension_semantics = [#tpu.dimension_semantics<parallel>, #tpu.dimension_semantics<parallel>, #tpu.dimension_semantics<arbitrary>], iteration_bounds = array<i64: 1, 1, 1>, scalar_prefetch = 0 : i64, scratch_operands = 0 : i64, tpu.core_type = #tpu.core_type<tc>, window_params = [{transform_indices = @transform_0, window_bounds = array<i64: 128, 128>}, {transform_indices = @transform_1, window_bounds = array<i64: 128, 128>}, {transform_indices = @transform_2, window_bounds = array<i64: 128, 128>}]} {
    %c0_i32 = arith.constant 0 : i32
    %0 = arith.cmpi eq, %arg2, %c0_i32 : i32
    %1 = arith.extui %0 : i1 to i32
    %c0_i32_0 = arith.constant 0 : i32
    %2 = arith.cmpi ne, %1, %c0_i32_0 : i32
    scf.if %2 {
      %cst_8 = arith.constant 0.000000e+00 : f32
      %9 = vector.broadcast %cst_8 : f32 to vector<128x128xf32>
      %c0_9 = arith.constant 0 : index
      %c0_10 = arith.constant 0 : index
      %10 = vector.load %arg5[%c0_9, %c0_10] : memref<128x128xf32, #tpu.memory_space<vmem>>, vector<128x128xf32>
      tpu.vector_store %arg5[%c0_9, %c0_10], %9 {strides = array<i32>} : memref<128x128xf32, #tpu.memory_space<vmem>>, vector<128x128xf32>,
    } else {
    }
    %c0 = arith.constant 0 : index
    %c0_1 = arith.constant 0 : index
    %3 = vector.load %arg5[%c0, %c0_1] : memref<128x128xf32, #tpu.memory_space<vmem>>, vector<128x128xf32>
    %c0_2 = arith.constant 0 : index
    %c0_3 = arith.constant 0 : index
    %4 = vector.load %arg3[%c0_2, %c0_3] : memref<128x128xbf16, #tpu.memory_space<vmem>>, vector<128x128xbf16>
    %c0_4 = arith.constant 0 : index
    %c0_5 = arith.constant 0 : index
    %5 = vector.load %arg4[%c0_4, %c0_5] : memref<128x128xbf16, #tpu.memory_space<vmem>>, vector<128x128xbf16>
    %cst = arith.constant dense<0.000000e+00> : vector<128x128xf32>
    %6 = tpu.matmul %4, %5, %cst {dimension_numbers = #tpu.dot_dimension_numbers<[1], [0], [0], [1], [0, 0, 1, 1], [], []>} : vector<128x128xbf16>, vector<128x128xbf16>, vector<128x128xf32> -> vector<128x128xf32>
    %7 = arith.addf %3, %6 : vector<128x128xf32>
    %c0_6 = arith.constant 0 : index
    %c0_7 = arith.constant 0 : index
    %8 = vector.load %arg5[%c0_6, %c0_7] : memref<128x128xf32, #tpu.memory_space<vmem>>, vector<128x128xf32>
    tpu.vector_store %arg5[%c0_6, %c0_7], %7 {strides = array<i32>} : memref<128x128xf32, #tpu.memory_space<vmem>>, vector<128x128xf32>,
    return
  }
  func.func @transform_0(%arg0: i32, %arg1: i32, %arg2: i32) -> (i32, i32) {
    %c0_i32 = arith.constant 0 : i32
    return %arg0, %arg2 : i32, i32
  }
  func.func @transform_1(%arg0: i32, %arg1: i32, %arg2: i32) -> (i32, i32) {
    %c0_i32 = arith.constant 0 : i32
    return %arg2, %arg1 : i32, i32
  }
  func.func @transform_2(%arg0: i32, %arg1: i32, %arg2: i32) -> (i32, i32) {
    %c0_i32 = arith.constant 0 : i32
    return %arg0, %arg1 : i32, i32
  }
}

module attributes {stable_mosaic.version = 11 : i64} {
  func.func @_fusion_kernel(%arg0: i32, %arg1: memref<128x128xf32, #tpu.memory_space<vmem>>, %arg2: memref<128x128xf32, #tpu.memory_space<vmem>>, %arg3: memref<1x128xf32, #tpu.memory_space<vmem>>, %arg4: memref<128x128xf32, #tpu.memory_space<vmem>>, %arg5: memref<1x128xf32, #tpu.memory_space<vmem>>, %arg6: memref<128x128xf32, #tpu.memory_space<vmem>>, %arg7: memref<1x128xf32, #tpu.memory_space<vmem>>, %arg8: memref<128x128xf32, #tpu.memory_space<vmem>>, %arg9: memref<1x1x128xf32, #tpu.memory_space<vmem>>) attributes {dimension_semantics = [#tpu.dimension_semantics<parallel>], iteration_bounds = array<i64: 1>, scalar_prefetch = 0 : i64, scratch_operands = 0 : i64, tpu.core_type = #tpu.core_type<tc>, window_params = [{transform_indices = @transform_0, window_bounds = array<i64: 128, 128>}, {pipeline_mode = #tpu.pipeline_mode<synchronous>, transform_indices = @transform_1, window_bounds = array<i64: 128, 128>}, {pipeline_mode = #tpu.pipeline_mode<synchronous>, transform_indices = @transform_2, window_bounds = array<i64: 1, 128>}, {pipeline_mode = #tpu.pipeline_mode<synchronous>, transform_indices = @transform_3, window_bounds = array<i64: 128, 128>}, {pipeline_mode = #tpu.pipeline_mode<synchronous>, transform_indices = @transform_4, window_bounds = array<i64: 1, 128>}, {pipeline_mode = #tpu.pipeline_mode<synchronous>, transform_indices = @transform_5, window_bounds = array<i64: 128, 128>}, {pipeline_mode = #tpu.pipeline_mode<synchronous>, transform_indices = @transform_6, window_bounds = array<i64: 1, 128>}, {transform_indices = @transform_7, window_bounds = array<i64: 128, 128>}, {transform_indices = @transform_8, window_bounds = array<i64: 1, 1, 128>}]} {
    %c0 = arith.constant 0 : index
    %c0_0 = arith.constant 0 : index
    %0 = vector.load %arg1[%c0, %c0_0] : memref<128x128xf32, #tpu.memory_space<vmem>>, vector<128x128xf32>
    %c0_1 = arith.constant 0 : index
    %c0_2 = arith.constant 0 : index
    %1 = vector.load %arg2[%c0_1, %c0_2] : memref<128x128xf32, #tpu.memory_space<vmem>>, vector<128x128xf32>
    %cst = arith.constant dense<0.000000e+00> : vector<128x128xf32>
    %2 = tpu.matmul %0, %1, %cst {dimension_numbers = #tpu.dot_dimension_numbers<[1], [0], [0], [1], [0, 0, 1, 1], [], []>} : vector<128x128xf32>, vector<128x128xf32>, vector<128x128xf32> -> vector<128x128xf32>
    %c0_3 = arith.constant 0 : index
    %c0_4 = arith.constant 0 : index
    %3 = vector.load %arg3[%c0_3, %c0_4] : memref<1x128xf32, #tpu.memory_space<vmem>>, vector<1x128xf32>
    %4 = vector.broadcast %3 : vector<1x128xf32> to vector<128x128xf32>
    %5 = arith.addf %2, %4 : vector<128x128xf32>
    %6 = math.tanh %5 : vector<128x128xf32>
    %c0_5 = arith.constant 0 : index
    %c0_6 = arith.constant 0 : index
    %7 = vector.load %arg4[%c0_5, %c0_6] : memref<128x128xf32, #tpu.memory_space<vmem>>, vector<128x128xf32>
    %cst_7 = arith.constant dense<0.000000e+00> : vector<128x128xf32>
    %8 = tpu.matmul %6, %7, %cst_7 {dimension_numbers = #tpu.dot_dimension_numbers<[1], [0], [0], [1], [0, 0, 1, 1], [], []>} : vector<128x128xf32>, vector<128x128xf32>, vector<128x128xf32> -> vector<128x128xf32>
    %c0_8 = arith.constant 0 : index
    %c0_9 = arith.constant 0 : index
    %9 = vector.load %arg5[%c0_8, %c0_9] : memref<1x128xf32, #tpu.memory_space<vmem>>, vector<1x128xf32>
    %10 = vector.broadcast %9 : vector<1x128xf32> to vector<128x128xf32>
    %11 = arith.addf %8, %10 : vector<128x128xf32>
    %12 = math.tanh %11 : vector<128x128xf32>
    %c0_10 = arith.constant 0 : index
    %c0_11 = arith.constant 0 : index
    %13 = vector.load %arg6[%c0_10, %c0_11] : memref<128x128xf32, #tpu.memory_space<vmem>>, vector<128x128xf32>
    %cst_12 = arith.constant dense<0.000000e+00> : vector<128x128xf32>
    %14 = tpu.matmul %12, %13, %cst_12 {dimension_numbers = #tpu.dot_dimension_numbers<[1], [0], [0], [1], [0, 0, 1, 1], [], []>} : vector<128x128xf32>, vector<128x128xf32>, vector<128x128xf32> -> vector<128x128xf32>
    %c0_13 = arith.constant 0 : index
    %c0_14 = arith.constant 0 : index
    %15 = vector.load %arg7[%c0_13, %c0_14] : memref<1x128xf32, #tpu.memory_space<vmem>>, vector<1x128xf32>
    %16 = vector.broadcast %15 : vector<1x128xf32> to vector<128x128xf32>
    %17 = arith.addf %14, %16 : vector<128x128xf32>
    %c128_i32 = arith.constant 128 : i32
    %18 = arith.muli %arg0, %c128_i32 : i32
    %19 = tpu.iota {dimensions = array<i32: 0>} : vector<128x128xi32>
    %20 = vector.broadcast %18 : i32 to vector<128x128xi32>
    %21 = arith.addi %20, %19 : vector<128x128xi32>
    %c24_i32 = arith.constant 24 : i32
    %22 = vector.broadcast %c24_i32 : i32 to vector<128x128xi32>
    %23 = arith.cmpi slt, %21, %22 : vector<128x128xi32>
    %cst_15 = arith.constant 0.000000e+00 : f32
    %24 = vector.broadcast %cst_15 : f32 to vector<128x128xf32>
    %25 = arith.select %23, %17, %24 : vector<128x128xi1>, vector<128x128xf32>
    %c0_16 = arith.constant 0 : index
    %c0_17 = arith.constant 0 : index
    %26 = vector.load %arg8[%c0_16, %c0_17] : memref<128x128xf32, #tpu.memory_space<vmem>>, vector<128x128xf32>
    tpu.vector_store %arg8[%c0_16, %c0_17], %25 {strides = array<i32>} : memref<128x128xf32, #tpu.memory_space<vmem>>, vector<128x128xf32>,
    %27 = arith.mulf %25, %25 : vector<128x128xf32>
    %cst_18 = arith.constant dense<0.000000e+00> : vector<128xf32>
    %28 = vector.multi_reduction <add>, %27, %cst_18 [0] : vector<128x128xf32> to vector<128xf32>
    %29 = vector.shape_cast %28 : vector<128xf32> to vector<1x128xf32>
    %c0_19 = arith.constant 0 : index
    %c0_20 = arith.constant 0 : index
    %c0_21 = arith.constant 0 : index
    %30 = vector.load %arg9[%c0_19, %c0_20, %c0_21] : memref<1x1x128xf32, #tpu.memory_space<vmem>>, vector<1x1x128xf32>
    %31 = vector.shape_cast %30 : vector<1x1x128xf32> to vector<1x128xf32>
    %32 = vector.shape_cast %29 : vector<1x128xf32> to vector<1x1x128xf32>
    tpu.vector_store %arg9[%c0_19, %c0_20, %c0_21], %32 {strides = array<i32>} : memref<1x1x128xf32, #tpu.memory_space<vmem>>, vector<1x1x128xf32>,
    return
  }
  func.func @transform_0(%arg0: i32) -> (i32, i32) {
    %c0_i32 = arith.constant 0 : i32
    %c0_i32_0 = arith.constant 0 : i32
    return %arg0, %c0_i32 : i32, i32
  }
  func.func @transform_1(%arg0: i32) -> (i32, i32) {
    %c0_i32 = arith.constant 0 : i32
    %c0_i32_0 = arith.constant 0 : i32
    %c0_i32_1 = arith.constant 0 : i32
    return %c0_i32, %c0_i32_0 : i32, i32
  }
  func.func @transform_2(%arg0: i32) -> (i32, i32) {
    %c0_i32 = arith.constant 0 : i32
    %c0_i32_0 = arith.constant 0 : i32
    %c0_i32_1 = arith.constant 0 : i32
    return %c0_i32, %c0_i32_0 : i32, i32
  }
  func.func @transform_3(%arg0: i32) -> (i32, i32) {
    %c0_i32 = arith.constant 0 : i32
    %c0_i32_0 = arith.constant 0 : i32
    %c0_i32_1 = arith.constant 0 : i32
    return %c0_i32, %c0_i32_0 : i32, i32
  }
  func.func @transform_4(%arg0: i32) -> (i32, i32) {
    %c0_i32 = arith.constant 0 : i32
    %c0_i32_0 = arith.constant 0 : i32
    %c0_i32_1 = arith.constant 0 : i32
    return %c0_i32, %c0_i32_0 : i32, i32
  }
  func.func @transform_5(%arg0: i32) -> (i32, i32) {
    %c0_i32 = arith.constant 0 : i32
    %c0_i32_0 = arith.constant 0 : i32
    %c0_i32_1 = arith.constant 0 : i32
    return %c0_i32, %c0_i32_0 : i32, i32
  }
  func.func @transform_6(%arg0: i32) -> (i32, i32) {
    %c0_i32 = arith.constant 0 : i32
    %c0_i32_0 = arith.constant 0 : i32
    %c0_i32_1 = arith.constant 0 : i32
    return %c0_i32, %c0_i32_0 : i32, i32
  }
  func.func @transform_7(%arg0: i32) -> (i32, i32) {
    %c0_i32 = arith.constant 0 : i32
    %c0_i32_0 = arith.constant 0 : i32
    return %arg0, %c0_i32 : i32, i32
  }
  func.func @transform_8(%arg0: i32) -> (i32, i32, i32) {
    %c0_i32 = arith.constant 0 : i32
    %c0_i32_0 = arith.constant 0 : i32
    %c0_i32_1 = arith.constant 0 : i32
    return %arg0, %c0_i32, %c0_i32_0 : i32, i32, i32
  }
}

module attributes {stable_mosaic.version = 11 : i64} {
  func.func @_personality_prop_kernel(%arg0: i32, %arg1: i32, %arg2: memref<128x128xbf16, #tpu.memory_space<vmem>>, %arg3: memref<128x384xbf16, #tpu.memory_space<vmem>>, %arg4: memref<3x128x1xf32, #tpu.memory_space<vmem>>, %arg5: memref<128x384xf32, #tpu.memory_space<vmem>>, %arg6: memref<128x128xf32, #tpu.memory_space<vmem>>) attributes {dimension_semantics = [#tpu.dimension_semantics<parallel>, #tpu.dimension_semantics<arbitrary>], iteration_bounds = array<i64: 1, 1>, scalar_prefetch = 0 : i64, scratch_operands = 0 : i64, tpu.core_type = #tpu.core_type<tc>, window_params = [{transform_indices = @transform_0, window_bounds = array<i64: 128, 128>}, {transform_indices = @transform_1, window_bounds = array<i64: 128, 384>}, {transform_indices = @transform_2, window_bounds = array<i64: 3, 128, 1>}, {transform_indices = @transform_3, window_bounds = array<i64: 128, 384>}, {transform_indices = @transform_4, window_bounds = array<i64: 128, 128>}]} {
    %c0_i32 = arith.constant 0 : i32
    %0 = arith.cmpi eq, %arg1, %c0_i32 : i32
    %1 = arith.extui %0 : i1 to i32
    %c0_i32_0 = arith.constant 0 : i32
    %2 = arith.cmpi ne, %1, %c0_i32_0 : i32
    scf.if %2 {
      %cst_10 = arith.constant 0.000000e+00 : f32
      %12 = vector.broadcast %cst_10 : f32 to vector<128x384xf32>
      %c0_11 = arith.constant 0 : index
      %c0_12 = arith.constant 0 : index
      %13 = vector.load %arg5[%c0_11, %c0_12] : memref<128x384xf32, #tpu.memory_space<vmem>>, vector<128x384xf32>
      tpu.vector_store %arg5[%c0_11, %c0_12], %12 {strides = array<i32>} : memref<128x384xf32, #tpu.memory_space<vmem>>, vector<128x384xf32>,
    } else {
    }
    %c0 = arith.constant 0 : index
    %c0_1 = arith.constant 0 : index
    %3 = vector.load %arg5[%c0, %c0_1] : memref<128x384xf32, #tpu.memory_space<vmem>>, vector<128x384xf32>
    %c0_2 = arith.constant 0 : index
    %c0_3 = arith.constant 0 : index
    %4 = vector.load %arg2[%c0_2, %c0_3] : memref<128x128xbf16, #tpu.memory_space<vmem>>, vector<128x128xbf16>
    %c0_4 = arith.constant 0 : index
    %c0_5 = arith.constant 0 : index
    %5 = vector.load %arg3[%c0_4, %c0_5] : memref<128x384xbf16, #tpu.memory_space<vmem>>, vector<128x384xbf16>
    %cst = arith.constant dense<0.000000e+00> : vector<128x384xf32>
    %6 = tpu.matmul %4, %5, %cst {dimension_numbers = #tpu.dot_dimension_numbers<[1], [0], [0], [1], [0, 0, 1, 1], [], []>} : vector<128x128xbf16>, vector<128x384xbf16>, vector<128x384xf32> -> vector<128x384xf32>
    %7 = arith.addf %3, %6 : vector<128x384xf32>
    %c0_6 = arith.constant 0 : index
    %c0_7 = arith.constant 0 : index
    %8 = vector.load %arg5[%c0_6, %c0_7] : memref<128x384xf32, #tpu.memory_space<vmem>>, vector<128x384xf32>
    tpu.vector_store %arg5[%c0_6, %c0_7], %7 {strides = array<i32>} : memref<128x384xf32, #tpu.memory_space<vmem>>, vector<128x384xf32>,
    %c0_i32_8 = arith.constant 0 : i32
    %9 = arith.cmpi eq, %arg1, %c0_i32_8 : i32
    %10 = arith.extui %9 : i1 to i32
    %c0_i32_9 = arith.constant 0 : i32
    %11 = arith.cmpi ne, %10, %c0_i32_9 : i32
    scf.if %11 {
      %c0_10 = arith.constant 0 : index
      %c0_11 = arith.constant 0 : index
      %12 = vector.load %arg5[%c0_10, %c0_11] : memref<128x384xf32, #tpu.memory_space<vmem>>, vector<128x384xf32>
      %13 = vector.extract_strided_slice %12 {offsets = [0, 0], sizes = [128, 128], strides = [1, 1]} : vector<128x384xf32> to vector<128x128xf32>
      %c0_12 = arith.constant 0 : index
      %c0_13 = arith.constant 0 : index
      %c0_14 = arith.constant 0 : index
      %14 = vector.load %arg4[%c0_12, %c0_13, %c0_14] : memref<3x128x1xf32, #tpu.memory_space<vmem>>, vector<1x128x1xf32>
      %15 = vector.shape_cast %14 : vector<1x128x1xf32> to vector<128x1xf32>
      %16 = vector.broadcast %15 : vector<128x1xf32> to vector<128x128xf32>
      %17 = arith.mulf %13, %16 : vector<128x128xf32>
      %c0_15 = arith.constant 0 : index
      %c0_16 = arith.constant 0 : index
      %18 = vector.load %arg5[%c0_15, %c0_16] : memref<128x384xf32, #tpu.memory_space<vmem>>, vector<128x128xf32>
      tpu.vector_store %arg5[%c0_15, %c0_16], %17 {strides = array<i32>} : memref<128x384xf32, #tpu.memory_space<vmem>>, vector<128x128xf32>,
      %19 = vector.extract_strided_slice %12 {offsets = [0, 128], sizes = [128, 128], strides = [1, 1]} : vector<128x384xf32> to vector<128x128xf32>
      %c1 = arith.constant 1 : index
      %c0_17 = arith.constant 0 : index
      %c0_18 = arith.constant 0 : index
      %20 = vector.load %arg4[%c1, %c0_17, %c0_18] : memref<3x128x1xf32, #tpu.memory_space<vmem>>, vector<1x128x1xf32>
      %21 = vector.shape_cast %20 : vector<1x128x1xf32> to vector<128x1xf32>
      %22 = vector.broadcast %21 : vector<128x1xf32> to vector<128x128xf32>
      %23 = arith.mulf %19, %22 : vector<128x128xf32>
      %c0_19 = arith.constant 0 : index
      %c128 = arith.constant 128 : index
      %24 = vector.load %arg5[%c0_19, %c128] : memref<128x384xf32, #tpu.memory_space<vmem>>, vector<128x128xf32>
      tpu.vector_store %arg5[%c0_19, %c128], %23 {strides = array<i32>} : memref<128x384xf32, #tpu.memory_space<vmem>>, vector<128x128xf32>,
      %25 = arith.addf %17, %23 : vector<128x128xf32>
      %26 = vector.extract_strided_slice %12 {offsets = [0, 256], sizes = [128, 128], strides = [1, 1]} : vector<128x384xf32> to vector<128x128xf32>
      %c2 = arith.constant 2 : index
      %c0_20 = arith.constant 0 : index
      %c0_21 = arith.constant 0 : index
      %27 = vector.load %arg4[%c2, %c0_20, %c0_21] : memref<3x128x1xf32, #tpu.memory_space<vmem>>, vector<1x128x1xf32>
      %28 = vector.shape_cast %27 : vector<1x128x1xf32> to vector<128x1xf32>
      %29 = vector.broadcast %28 : vector<128x1xf32> to vector<128x128xf32>
      %30 = arith.mulf %26, %29 : vector<128x128xf32>
      %c0_22 = arith.constant 0 : index
      %c256 = arith.constant 256 : index
      %31 = vector.load %arg5[%c0_22, %c256] : memref<128x384xf32, #tpu.memory_space<vmem>>, vector<128x128xf32>
      tpu.vector_store %arg5[%c0_22, %c256], %30 {strides = array<i32>} : memref<128x384xf32, #tpu.memory_space<vmem>>, vector<128x128xf32>,
      %32 = arith.addf %25, %30 : vector<128x128xf32>
      %c0_23 = arith.constant 0 : index
      %c0_24 = arith.constant 0 : index
      %33 = vector.load %arg6[%c0_23, %c0_24] : memref<128x128xf32, #tpu.memory_space<vmem>>, vector<128x128xf32>
      tpu.vector_store %arg6[%c0_23, %c0_24], %32 {strides = array<i32>} : memref<128x128xf32, #tpu.memory_space<vmem>>, vector<128x128xf32>,
    } else {
    }
    return
  }
  func.func @transform_0(%arg0: i32, %arg1: i32) -> (i32, i32) {
    %c0_i32 = arith.constant 0 : i32
    return %arg0, %arg1 : i32, i32
  }
  func.func @transform_1(%arg0: i32, %arg1: i32) -> (i32, i32) {
    %c0_i32 = arith.constant 0 : i32
    %c0_i32_0 = arith.constant 0 : i32
    return %arg1, %c0_i32 : i32, i32
  }
  func.func @transform_2(%arg0: i32, %arg1: i32) -> (i32, i32, i32) {
    %c0_i32 = arith.constant 0 : i32
    %c0_i32_0 = arith.constant 0 : i32
    %c0_i32_1 = arith.constant 0 : i32
    return %c0_i32, %arg0, %c0_i32_0 : i32, i32, i32
  }
  func.func @transform_3(%arg0: i32, %arg1: i32) -> (i32, i32) {
    %c0_i32 = arith.constant 0 : i32
    %c0_i32_0 = arith.constant 0 : i32
    return %arg0, %c0_i32 : i32, i32
  }
  func.func @transform_4(%arg0: i32, %arg1: i32) -> (i32, i32) {
    %c0_i32 = arith.constant 0 : i32
    %c0_i32_0 = arith.constant 0 : i32
    return %arg0, %c0_i32 : i32, i32
  }
}

module attributes {stable_mosaic.version = 11 : i64} {
  func.func @_personality_prop_kernel(%arg0: i32, %arg1: i32, %arg2: memref<128x128xbf16, #tpu.memory_space<vmem>>, %arg3: memref<128x384xbf16, #tpu.memory_space<vmem>>, %arg4: memref<3x128x1xf32, #tpu.memory_space<vmem>>, %arg5: memref<128x384xf32, #tpu.memory_space<vmem>>, %arg6: memref<128x128xf32, #tpu.memory_space<vmem>>) attributes {dimension_semantics = [#tpu.dimension_semantics<parallel>, #tpu.dimension_semantics<arbitrary>], iteration_bounds = array<i64: 1, 1>, scalar_prefetch = 0 : i64, scratch_operands = 0 : i64, tpu.core_type = #tpu.core_type<tc>, window_params = [{transform_indices = @transform_0, window_bounds = array<i64: 128, 128>}, {transform_indices = @transform_1, window_bounds = array<i64: 128, 384>}, {transform_indices = @transform_2, window_bounds = array<i64: 3, 128, 1>}, {transform_indices = @transform_3, window_bounds = array<i64: 128, 384>}, {transform_indices = @transform_4, window_bounds = array<i64: 128, 128>}]} {
    %c0_i32 = arith.constant 0 : i32
    %0 = arith.cmpi eq, %arg1, %c0_i32 : i32
    %1 = arith.extui %0 : i1 to i32
    %c0_i32_0 = arith.constant 0 : i32
    %2 = arith.cmpi ne, %1, %c0_i32_0 : i32
    scf.if %2 {
      %cst_10 = arith.constant 0.000000e+00 : f32
      %12 = vector.broadcast %cst_10 : f32 to vector<128x384xf32>
      %c0_11 = arith.constant 0 : index
      %c0_12 = arith.constant 0 : index
      %13 = vector.load %arg5[%c0_11, %c0_12] : memref<128x384xf32, #tpu.memory_space<vmem>>, vector<128x384xf32>
      tpu.vector_store %arg5[%c0_11, %c0_12], %12 {strides = array<i32>} : memref<128x384xf32, #tpu.memory_space<vmem>>, vector<128x384xf32>,
    } else {
    }
    %c0 = arith.constant 0 : index
    %c0_1 = arith.constant 0 : index
    %3 = vector.load %arg5[%c0, %c0_1] : memref<128x384xf32, #tpu.memory_space<vmem>>, vector<128x384xf32>
    %c0_2 = arith.constant 0 : index
    %c0_3 = arith.constant 0 : index
    %4 = vector.load %arg2[%c0_2, %c0_3] : memref<128x128xbf16, #tpu.memory_space<vmem>>, vector<128x128xbf16>
    %c0_4 = arith.constant 0 : index
    %c0_5 = arith.constant 0 : index
    %5 = vector.load %arg3[%c0_4, %c0_5] : memref<128x384xbf16, #tpu.memory_space<vmem>>, vector<128x384xbf16>
    %cst = arith.constant dense<0.000000e+00> : vector<128x384xf32>
    %6 = tpu.matmul %4, %5, %cst {dimension_numbers = #tpu.dot_dimension_numbers<[1], [0], [0], [1], [0, 0, 1, 1], [], []>} : vector<128x128xbf16>, vector<128x384xbf16>, vector<128x384xf32> -> vector<128x384xf32>
    %7 = arith.addf %3, %6 : vector<128x384xf32>
    %c0_6 = arith.constant 0 : index
    %c0_7 = arith.constant 0 : index
    %8 = vector.load %arg5[%c0_6, %c0_7] : memref<128x384xf32, #tpu.memory_space<vmem>>, vector<128x384xf32>
    tpu.vector_store %arg5[%c0_6, %c0_7], %7 {strides = array<i32>} : memref<128x384xf32, #tpu.memory_space<vmem>>, vector<128x384xf32>,
    %c0_i32_8 = arith.constant 0 : i32
    %9 = arith.cmpi eq, %arg1, %c0_i32_8 : i32
    %10 = arith.extui %9 : i1 to i32
    %c0_i32_9 = arith.constant 0 : i32
    %11 = arith.cmpi ne, %10, %c0_i32_9 : i32
    scf.if %11 {
      %c0_10 = arith.constant 0 : index
      %c0_11 = arith.constant 0 : index
      %12 = vector.load %arg5[%c0_10, %c0_11] : memref<128x384xf32, #tpu.memory_space<vmem>>, vector<128x384xf32>
      %13 = vector.extract_strided_slice %12 {offsets = [0, 0], sizes = [128, 128], strides = [1, 1]} : vector<128x384xf32> to vector<128x128xf32>
      %c0_12 = arith.constant 0 : index
      %c0_13 = arith.constant 0 : index
      %c0_14 = arith.constant 0 : index
      %14 = vector.load %arg4[%c0_12, %c0_13, %c0_14] : memref<3x128x1xf32, #tpu.memory_space<vmem>>, vector<1x128x1xf32>
      %15 = vector.shape_cast %14 : vector<1x128x1xf32> to vector<128x1xf32>
      %16 = vector.broadcast %15 : vector<128x1xf32> to vector<128x128xf32>
      %17 = arith.mulf %13, %16 : vector<128x128xf32>
      %c0_15 = arith.constant 0 : index
      %c0_16 = arith.constant 0 : index
      %18 = vector.load %arg5[%c0_15, %c0_16] : memref<128x384xf32, #tpu.memory_space<vmem>>, vector<128x128xf32>
      tpu.vector_store %arg5[%c0_15, %c0_16], %17 {strides = array<i32>} : memref<128x384xf32, #tpu.memory_space<vmem>>, vector<128x128xf32>,
      %19 = vector.extract_strided_slice %12 {offsets = [0, 128], sizes = [128, 128], strides = [1, 1]} : vector<128x384xf32> to vector<128x128xf32>
      %c1 = arith.constant 1 : index
      %c0_17 = arith.constant 0 : index
      %c0_18 = arith.constant 0 : index
      %20 = vector.load %arg4[%c1, %c0_17, %c0_18] : memref<3x128x1xf32, #tpu.memory_space<vmem>>, vector<1x128x1xf32>
      %21 = vector.shape_cast %20 : vector<1x128x1xf32> to vector<128x1xf32>
      %22 = vector.broadcast %21 : vector<128x1xf32> to vector<128x128xf32>
      %23 = arith.mulf %19, %22 : vector<128x128xf32>
      %c0_19 = arith.constant 0 : index
      %c128 = arith.constant 128 : index
      %24 = vector.load %arg5[%c0_19, %c128] : memref<128x384xf32, #tpu.memory_space<vmem>>, vector<128x128xf32>
      tpu.vector_store %arg5[%c0_19, %c128], %23 {strides = array<i32>} : memref<128x384xf32, #tpu.memory_space<vmem>>, vector<128x128xf32>,
      %25 = arith.addf %17, %23 : vector<128x128xf32>
      %26 = vector.extract_strided_slice %12 {offsets = [0, 256], sizes = [128, 128], strides = [1, 1]} : vector<128x384xf32> to vector<128x128xf32>
      %c2 = arith.constant 2 : index
      %c0_20 = arith.constant 0 : index
      %c0_21 = arith.constant 0 : index
      %27 = vector.load %arg4[%c2, %c0_20, %c0_21] : memref<3x128x1xf32, #tpu.memory_space<vmem>>, vector<1x128x1xf32>
      %28 = vector.shape_cast %27 : vector<1x128x1xf32> to vector<128x1xf32>
      %29 = vector.broadcast %28 : vector<128x1xf32> to vector<128x128xf32>
      %30 = arith.mulf %26, %29 : vector<128x128xf32>
      %c0_22 = arith.constant 0 : index
      %c256 = arith.constant 256 : index
      %31 = vector.load %arg5[%c0_22, %c256] : memref<128x384xf32, #tpu.memory_space<vmem>>, vector<128x128xf32>
      tpu.vector_store %arg5[%c0_22, %c256], %30 {strides = array<i32>} : memref<128x384xf32, #tpu.memory_space<vmem>>, vector<128x128xf32>,
      %32 = arith.addf %25, %30 : vector<128x128xf32>
      %c0_23 = arith.constant 0 : index
      %c0_24 = arith.constant 0 : index
      %33 = vector.load %arg6[%c0_23, %c0_24] : memref<128x128xf32, #tpu.memory_space<vmem>>, vector<128x128xf32>
      tpu.vector_store %arg6[%c0_23, %c0_24], %32 {strides = array<i32>} : memref<128x128xf32, #tpu.memory_space<vmem>>, vector<128x128xf32>,
    } else {
    }
    return
  }
  func.func @transform_0(%arg0: i32, %arg1: i32) -> (i32, i32) {
    %c0_i32 = arith.constant 0 : i32
    return %arg0, %arg1 : i32, i32
  }
  func.func @transform_1(%arg0: i32, %arg1: i32) -> (i32, i32) {
    %c0_i32 = arith.constant 0 : i32
    %c0_i32_0 = arith.constant 0 : i32
    return %arg1, %c0_i32 : i32, i32
  }
  func.func @transform_2(%arg0: i32, %arg1: i32) -> (i32, i32, i32) {
    %c0_i32 = arith.constant 0 : i32
    %c0_i32_0 = arith.constant 0 : i32
    %c0_i32_1 = arith.constant 0 : i32
    return %c0_i32, %arg0, %c0_i32_0 : i32, i32, i32
  }
  func.func @transform_3(%arg0: i32, %arg1: i32) -> (i32, i32) {
    %c0_i32 = arith.constant 0 : i32
    %c0_i32_0 = arith.constant 0 : i32
    return %arg0, %c0_i32 : i32, i32
  }
  func.func @transform_4(%arg0: i32, %arg1: i32) -> (i32, i32) {
    %c0_i32 = arith.constant 0 : i32
    %c0_i32_0 = arith.constant 0 : i32
    return %arg0, %c0_i32 : i32, i32
  }
}

</mosaic_0001>

<llo_original>
// kernel: pagcn_forward.8
$region0: #{pagcn_forward.8}
  #allocation0 [shape = 'u32[]', space=smem, size = 0x4, offset = 0x4, fixed_abs, tag = 'smem constant byte address 0x4 - core index']
  #allocation1 [shape = 'u32[144,128]{1,0:T(1,128)}', space=vmem, size = 0x12000, scoped, tag = 'internal scratch']
  %s0 = inlined_call_operand.vmem [shape: bf16[128,128], index: 0, kind: input, shape index: {}]
  %s1 = inlined_call_operand.vmem [shape: bf16[128,128], index: 1, kind: input, shape index: {}]
  %s2 = inlined_call_operand.vmem [shape: f32[128,128], index: 2, kind: output, shape index: {}]
  %s3 = sld [smem:[#allocation0]]
  $region22: #{pagcn_forward.8} parent=0
    _
  %s5 = ssub.s32 1, %s3
  %s6 = scalar_select 0, %s5, %s3
  // Predicated region
  $region2: #{pagcn_forward.8} parent=0 // pred_check
    _
  $region3: #{pagcn_forward.8} parent=0 // pred_check_branch
    %8 = sbr.rel (0) target = $region5
  $region4: #{pagcn_forward.8} parent=0 // pred_region
    _
  $region5: #{pagcn_forward.8} parent=0 // pred_fallthru
    _
  // Predicated region
  $region6: #{pagcn_forward.8} parent=0 // pred_check
    _
  $region7: #{pagcn_forward.8} parent=0 // pred_check_branch
    %10 = sbr.rel (0) target = $region9
  $region8: #{pagcn_forward.8} parent=0 // pred_region
    _
  $region9: #{pagcn_forward.8} parent=0 // pred_fallthru
    _
  %p12 = scmp.eq.s32.totalorder 0, 0
  // Predicated region
  $region10: #{pagcn_forward.8} parent=0 // pred_check
    %p13 = pneg %p12
  $region11: #{pagcn_forward.8} parent=0 // pred_check_branch
    %15 = sbr.rel (%p13) target = $region13
  $region12: #{pagcn_forward.8} parent=0 // pred_region
    %16 = vst [vmem:[%s2] sm:$0xff] 0.0
    %17 = vst [vmem:[%s2 + $0x8] sm:$0xff] 0.0
    %18 = vst [vmem:[%s2 + $0x10] sm:$0xff] 0.0
    %19 = vst [vmem:[%s2 + $0x18] sm:$0xff] 0.0
    %20 = vst [vmem:[%s2 + $0x20] sm:$0xff] 0.0
    %21 = vst [vmem:[%s2 + $0x28] sm:$0xff] 0.0
    %22 = vst [vmem:[%s2 + $0x30] sm:$0xff] 0.0
    %23 = vst [vmem:[%s2 + $0x38] sm:$0xff] 0.0
    %24 = vst [vmem:[%s2 + $0x40] sm:$0xff] 0.0
    %25 = vst [vmem:[%s2 + $0x48] sm:$0xff] 0.0
    %26 = vst [vmem:[%s2 + $0x50] sm:$0xff] 0.0
    %27 = vst [vmem:[%s2 + $0x58] sm:$0xff] 0.0
    %28 = vst [vmem:[%s2 + $0x60] sm:$0xff] 0.0
    %29 = vst [vmem:[%s2 + $0x68] sm:$0xff] 0.0
    %30 = vst [vmem:[%s2 + $0x70] sm:$0xff] 0.0
    %31 = vst [vmem:[%s2 + $0x78] sm:$0xff] 0.0
  $region13: #{pagcn_forward.8} parent=0 // pred_fallthru
    _
  %v32 = vld [vmem:[%s2] sm:$0xff]
  %v33 = vld [vmem:[%s2 + $0x8] sm:$0xff]
  %v34 = vld [vmem:[%s2 + $0x10] sm:$0xff]
  %v35 = vld [vmem:[%s2 + $0x18] sm:$0xff]
  %v36 = vld [vmem:[%s2 + $0x20] sm:$0xff]
  %v37 = vld [vmem:[%s2 + $0x28] sm:$0xff]
  %v38 = vld [vmem:[%s2 + $0x30] sm:$0xff]
  %v39 = vld [vmem:[%s2 + $0x38] sm:$0xff]
  %v40 = vld [vmem:[%s2 + $0x40] sm:$0xff]
  %v41 = vld [vmem:[%s2 + $0x48] sm:$0xff]
  %v42 = vld [vmem:[%s2 + $0x50] sm:$0xff]
  %v43 = vld [vmem:[%s2 + $0x58] sm:$0xff]
  %v44 = vld [vmem:[%s2 + $0x60] sm:$0xff]
  %v45 = vld [vmem:[%s2 + $0x68] sm:$0xff]
  %v46 = vld [vmem:[%s2 + $0x70] sm:$0xff]
  %v47 = vld [vmem:[%s2 + $0x78] sm:$0xff]
  %v48 = vld [vmem:[%s0] sm:$0xf]
  %v49 = vld [vmem:[%s0 + $0x4] sm:$0xf]
  %v50 = vld [vmem:[%s0 + $0x8] sm:$0xf]
  %v51 = vld [vmem:[%s0 + $0xc] sm:$0xf]
  %v52 = vld [vmem:[%s0 + $0x10] sm:$0xf]
  %v53 = vld [vmem:[%s0 + $0x14] sm:$0xf]
  %v54 = vld [vmem:[%s0 + $0x18] sm:$0xf]
  %v55 = vld [vmem:[%s0 + $0x1c] sm:$0xf]
  %v56 = vld [vmem:[%s0 + $0x20] sm:$0xf]
  %v57 = vld [vmem:[%s0 + $0x24] sm:$0xf]
  %v58 = vld [vmem:[%s0 + $0x28] sm:$0xf]
  %v59 = vld [vmem:[%s0 + $0x2c] sm:$0xf]
  %v60 = vld [vmem:[%s0 + $0x30] sm:$0xf]
  %v61 = vld [vmem:[%s0 + $0x34] sm:$0xf]
  %v62 = vld [vmem:[%s0 + $0x38] sm:$0xf]
  %v63 = vld [vmem:[%s0 + $0x3c] sm:$0xf]
  %v64 = vld [vmem:[%s1] sm:$0xf]
  %v65 = vld [vmem:[%s1 + $0x4] sm:$0xf]
  %v66 = vld [vmem:[%s1 + $0x8] sm:$0xf]
  %v67 = vld [vmem:[%s1 + $0xc] sm:$0xf]
  %v68 = vld [vmem:[%s1 + $0x10] sm:$0xf]
  %v69 = vld [vmem:[%s1 + $0x14] sm:$0xf]
  %v70 = vld [vmem:[%s1 + $0x18] sm:$0xf]
  %v71 = vld [vmem:[%s1 + $0x1c] sm:$0xf]
  %v72 = vld [vmem:[%s1 + $0x20] sm:$0xf]
  %v73 = vld [vmem:[%s1 + $0x24] sm:$0xf]
  %v74 = vld [vmem:[%s1 + $0x28] sm:$0xf]
  %v75 = vld [vmem:[%s1 + $0x2c] sm:$0xf]
  %v76 = vld [vmem:[%s1 + $0x30] sm:$0xf]
  %v77 = vld [vmem:[%s1 + $0x34] sm:$0xf]
  %v78 = vld [vmem:[%s1 + $0x38] sm:$0xf]
  %v79 = vld [vmem:[%s1 + $0x3c] sm:$0xf]
  %v96 = vunpack.c.l.b16 %v48
  %v97 = vunpack.c.l.b16 %v49
  %v98 = vunpack.c.l.b16 %v50
  %v99 = vunpack.c.l.b16 %v51
  %v100 = vunpack.c.l.b16 %v52
  %v101 = vunpack.c.l.b16 %v53
  %v102 = vunpack.c.l.b16 %v54
  %v103 = vunpack.c.l.b16 %v55
  %v104 = vunpack.c.l.b16 %v56
  %v105 = vunpack.c.l.b16 %v57
  %v106 = vunpack.c.l.b16 %v58
  %v107 = vunpack.c.l.b16 %v59
  %v108 = vunpack.c.l.b16 %v60
  %v109 = vunpack.c.l.b16 %v61
  %v110 = vunpack.c.l.b16 %v62
  %v111 = vunpack.c.l.b16 %v63
  %v112 = vpack.c.b16 %v97, %v96
  %v113 = vpack.c.b16 %v99, %v98
  %v114 = vpack.c.b16 %v101, %v100
  %v115 = vpack.c.b16 %v103, %v102
  %v116 = vpack.c.b16 %v105, %v104
  %v117 = vpack.c.b16 %v107, %v106
  %v118 = vpack.c.b16 %v109, %v108
  %v119 = vpack.c.b16 %v111, %v110
  %v144 = vunpack.c.l.b16 %v64
  %v145 = vunpack.c.l.b16 %v65
  %v146 = vunpack.c.l.b16 %v66
  %v147 = vunpack.c.l.b16 %v67
  %v148 = vunpack.c.l.b16 %v68
  %v149 = vunpack.c.l.b16 %v69
  %v150 = vunpack.c.l.b16 %v70
  %v151 = vunpack.c.l.b16 %v71
  %v152 = vunpack.c.l.b16 %v72
  %v153 = vunpack.c.l.b16 %v73
  %v154 = vunpack.c.l.b16 %v74
  %v155 = vunpack.c.l.b16 %v75
  %v156 = vunpack.c.l.b16 %v76
  %v157 = vunpack.c.l.b16 %v77
  %v158 = vunpack.c.l.b16 %v78
  %v159 = vunpack.c.l.b16 %v79
  %v160 = vpack.c.b16 %v145, %v144
  %v161 = vpack.c.b16 %v147, %v146
  %v162 = vpack.c.b16 %v149, %v148
  %v163 = vpack.c.b16 %v151, %v150
  %v164 = vpack.c.b16 %v153, %v152
  %v165 = vpack.c.b16 %v155, %v154
  %v166 = vpack.c.b16 %v157, %v156
  %v167 = vpack.c.b16 %v159, %v158
  %176 = vmatprep.subr.bf16.mxu0 0
  %177 = vmatpush1.bf16.msra.mxu0 %v160
  %178 = vmatprep.subr.bf16.mxu0 0
  %179 = vmatpush1.bf16.msra.mxu0 %v161
  %180 = vmatprep.subr.bf16.mxu0 0
  %181 = vmatpush1.bf16.msra.mxu0 %v162
  %182 = vmatprep.subr.bf16.mxu0 0
  %183 = vmatpush1.bf16.msra.mxu0 %v163
  %184 = vmatprep.subr.bf16.mxu0 0
  %185 = vmatpush1.bf16.msra.mxu0 %v164
  %186 = vmatprep.subr.bf16.mxu0 0
  %187 = vmatpush1.bf16.msra.mxu0 %v165
  %188 = vmatprep.subr.bf16.mxu0 0
  %189 = vmatpush1.bf16.msra.mxu0 %v166
  %190 = vmatprep.subr.bf16.mxu0 0
  %191 = vmatpush1.bf16.msra.mxu0 %v167
  %192 = vmatprep.subr.bf16.mxu0 0
  %193 = vmatpush1.bf16.msra.mxu0 0
  %194 = vmatprep.subr.bf16.mxu0 0
  %195 = vmatpush1.bf16.msra.mxu0 0
  %196 = vmatprep.subr.bf16.mxu0 0
  %197 = vmatpush1.bf16.msra.mxu0 0
  %198 = vmatprep.subr.bf16.mxu0 0
  %199 = vmatpush1.bf16.msra.mxu0 0
  %200 = vmatprep.subr.bf16.mxu0 0
  %201 = vmatpush1.bf16.msra.mxu0 0
  %202 = vmatprep.subr.bf16.mxu0 0
  %203 = vmatpush1.bf16.msra.mxu0 0
  %204 = vmatprep.subr.bf16.mxu0 0
  %205 = vmatpush1.bf16.msra.mxu0 0
  %206 = vmatprep.subr.bf16.mxu0 0
  %207 = vmatpush1.bf16.msra.mxu0 0
  %208 = vmatprep.mubr.bf16.mxu0 0
  %209 = vmatmul.mubr.bf16.gmra.mrb[0].mxu0 %v112
  %v210 = vpop.f32.mrb[0].mxu0
  %v211 = vadd.f32 0.0, %v210
  %v212 = vpop.f32.mrb[0].mxu0
  %v213 = vpop.f32.mrb[0].mxu0
  %v214 = vadd.f32 0.0, %v213
  %v215 = vpop.f32.mrb[0].mxu0
  %216 = vmatprep.mubr.bf16.mxu0 0
  %217 = vmatmul.mubr.bf16.gmra.mrb[0].mxu0 %v113
  %v218 = vpop.f32.mrb[0].mxu0
  %v219 = vadd.f32 0.0, %v218
  %v220 = vpop.f32.mrb[0].mxu0
  %v221 = vpop.f32.mrb[0].mxu0
  %v222 = vadd.f32 0.0, %v221
  %v223 = vpop.f32.mrb[0].mxu0
  %224 = vmatprep.mubr.bf16.mxu0 0
  %225 = vmatmul.mubr.bf16.gmra.mrb[0].mxu0 %v114
  %v226 = vpop.f32.mrb[0].mxu0
  %v227 = vadd.f32 0.0, %v226
  %v228 = vpop.f32.mrb[0].mxu0
  %v229 = vpop.f32.mrb[0].mxu0
  %v230 = vadd.f32 0.0, %v229
  %v231 = vpop.f32.mrb[0].mxu0
  %232 = vmatprep.mubr.bf16.mxu0 0
  %233 = vmatmul.mubr.bf16.gmra.mrb[0].mxu0 %v115
  %v234 = vpop.f32.mrb[0].mxu0
  %v235 = vadd.f32 0.0, %v234
  %v236 = vpop.f32.mrb[0].mxu0
  %v237 = vpop.f32.mrb[0].mxu0
  %v238 = vadd.f32 0.0, %v237
  %v239 = vpop.f32.mrb[0].mxu0
  %240 = vmatprep.mubr.bf16.mxu0 0
  %241 = vmatmul.mubr.bf16.gmra.mrb[0].mxu0 %v116
  %v242 = vpop.f32.mrb[0].mxu0
  %v243 = vadd.f32 0.0, %v242
  %v244 = vpop.f32.mrb[0].mxu0
  %v245 = vpop.f32.mrb[0].mxu0
  %v246 = vadd.f32 0.0, %v245
  %v247 = vpop.f32.mrb[0].mxu0
  %248 = vmatprep.mubr.bf16.mxu0 0
  %249 = vmatmul.mubr.bf16.gmra.mrb[0].mxu0 %v117
  %v250 = vpop.f32.mrb[0].mxu0
  %v251 = vadd.f32 0.0, %v250
  %v252 = vpop.f32.mrb[0].mxu0
  %v253 = vpop.f32.mrb[0].mxu0
  %v254 = vadd.f32 0.0, %v253
  %v255 = vpop.f32.mrb[0].mxu0
  %256 = vmatprep.mubr.bf16.mxu0 0
  %257 = vmatmul.mubr.bf16.gmra.mrb[0].mxu0 %v118
  %v258 = vpop.f32.mrb[0].mxu0
  %v259 = vadd.f32 0.0, %v258
  %v260 = vpop.f32.mrb[0].mxu0
  %v261 = vpop.f32.mrb[0].mxu0
  %v262 = vadd.f32 0.0, %v261
  %v263 = vpop.f32.mrb[0].mxu0
  %264 = vmatprep.mubr.bf16.mxu0 0
  %265 = vmatmul.mubr.bf16.gmra.mrb[0].mxu0 %v119
  %v266 = vpop.f32.mrb[0].mxu0
  %v267 = vadd.f32 0.0, %v266
  %v268 = vpop.f32.mrb[0].mxu0
  %v269 = vpop.f32.mrb[0].mxu0
  %v270 = vadd.f32 0.0, %v269
  %v271 = vpop.f32.mrb[0].mxu0
  %272 = vdwg.mxu0
  %v273 = vadd.f32 %v32, %v211
  %v274 = vadd.f32 %v33, %v214
  %v275 = vadd.f32 %v34, %v219
  %v276 = vadd.f32 %v35, %v222
  %v277 = vadd.f32 %v36, %v227
  %v278 = vadd.f32 %v37, %v230
  %v279 = vadd.f32 %v38, %v235
  %v280 = vadd.f32 %v39, %v238
  %v281 = vadd.f32 %v40, %v243
  %v282 = vadd.f32 %v41, %v246
  %v283 = vadd.f32 %v42, %v251
  %v284 = vadd.f32 %v43, %v254
  %v285 = vadd.f32 %v44, %v259
  %v286 = vadd.f32 %v45, %v262
  %v287 = vadd.f32 %v46, %v267
  %v288 = vadd.f32 %v47, %v270
  %289 = vst [vmem:[%s2] sm:$0xff] %v273
  %290 = vst [vmem:[%s2 + $0x8] sm:$0xff] %v274
  %291 = vst [vmem:[%s2 + $0x10] sm:$0xff] %v275
  %292 = vst [vmem:[%s2 + $0x18] sm:$0xff] %v276
  %293 = vst [vmem:[%s2 + $0x20] sm:$0xff] %v277
  %294 = vst [vmem:[%s2 + $0x28] sm:$0xff] %v278
  %295 = vst [vmem:[%s2 + $0x30] sm:$0xff] %v279
  %296 = vst [vmem:[%s2 + $0x38] sm:$0xff] %v280
  %297 = vst [vmem:[%s2 + $0x40] sm:$0xff] %v281
  %298 = vst [vmem:[%s2 + $0x48] sm:$0xff] %v282
  %299 = vst [vmem:[%s2 + $0x50] sm:$0xff] %v283
  %300 = vst [vmem:[%s2 + $0x58] sm:$0xff] %v284
  %301 = vst [vmem:[%s2 + $0x60] sm:$0xff] %v285
  %302 = vst [vmem:[%s2 + $0x68] sm:$0xff] %v286
  %303 = vst [vmem:[%s2 + $0x70] sm:$0xff] %v287
  %304 = vst [vmem:[%s2 + $0x78] sm:$0xff] %v288
  // Predicated region
  $region14: #{pagcn_forward.8} parent=0 // pred_check
    _
  $region15: #{pagcn_forward.8} parent=0 // pred_check_branch
    %306 = sbr.rel (0) target = $region17
  $region16: #{pagcn_forward.8} parent=0 // pred_region
    _
  $region17: #{pagcn_forward.8} parent=0 // pred_fallthru
    _
  // Predicated region
  $region18: #{pagcn_forward.8} parent=0 // pred_check
    _
  $region19: #{pagcn_forward.8} parent=0 // pred_check_branch
    %308 = sbr.rel (0) target = $region21
  $region20: #{pagcn_forward.8} parent=0 // pred_region
    _
  $region21: #{pagcn_forward.8} parent=0 // pred_fallthru
    _

// kernel: pagcn_forward.9
$region0: #{pagcn_forward.9}
  #allocation0 [shape = 'u32[]', space=smem, size = 0x4, offset = 0x4, fixed_abs, tag = 'smem constant byte address 0x4 - core index']
  #allocation1 [shape = 'u32[144,128]{1,0:T(1,128)}', space=vmem, size = 0x12000, scoped, tag = 'internal scratch']
  %s0 = inlined_call_operand.vmem [shape: f32[128,128], index: 0, kind: input, shape index: {}]
  %s1 = inlined_call_operand.vmem [shape: f32[128,128], index: 1, kind: input, shape index: {}]
  %s2 = inlined_call_operand.vmem [shape: f32[1,128], index: 2, kind: input, shape index: {}]
  %s3 = inlined_call_operand.vmem [shape: f32[128,128], index: 3, kind: input, shape index: {}]
  %s4 = inlined_call_operand.vmem [shape: f32[1,128], index: 4, kind: input, shape index: {}]
  %s5 = inlined_call_operand.vmem [shape: f32[128,128], index: 5, kind: input, shape index: {}]
  %s6 = inlined_call_operand.vmem [shape: f32[1,128], index: 6, kind: input, shape index: {}]
  %s7 = inlined_call_operand.vmem [shape: f32[128,128], index: 7, kind: output, shape index: {0}]
  %s8 = inlined_call_operand.vmem [shape: f32[1,1,128], index: 8, kind: output, shape index: {1}]
  %9 = xla_tuple %s7, %s8
  %s10 = sld [smem:[#allocation0]]
  $region46: #{pagcn_forward.9} parent=0
    _
  %s12 = ssub.s32 1, %s10
  %s13 = scalar_select 0, %s12, %s10
  // Predicated region
  $region2: #{pagcn_forward.9} parent=0 // pred_check
    _
  $region3: #{pagcn_forward.9} parent=0 // pred_check_branch
    %15 = sbr.rel (0) target = $region5
  $region4: #{pagcn_forward.9} parent=0 // pred_region
    _
  $region5: #{pagcn_forward.9} parent=0 // pred_fallthru
    _
  // Predicated region
  $region6: #{pagcn_forward.9} parent=0 // pred_check
    _
  $region7: #{pagcn_forward.9} parent=0 // pred_check_branch
    %17 = sbr.rel (0) target = $region9
  $region8: #{pagcn_forward.9} parent=0 // pred_region
    _
  $region9: #{pagcn_forward.9} parent=0 // pred_fallthru
    _
  // Predicated region
  $region10: #{pagcn_forward.9} parent=0 // pred_check
    _
  $region11: #{pagcn_forward.9} parent=0 // pred_check_branch
    %19 = sbr.rel (0) target = $region13
  $region12: #{pagcn_forward.9} parent=0 // pred_region
    _
  $region13: #{pagcn_forward.9} parent=0 // pred_fallthru
    _
  // Predicated region
  $region14: #{pagcn_forward.9} parent=0 // pred_check
    _
  $region15: #{pagcn_forward.9} parent=0 // pred_check_branch
    %21 = sbr.rel (0) target = $region17
  $region16: #{pagcn_forward.9} parent=0 // pred_region
    _
  $region17: #{pagcn_forward.9} parent=0 // pred_fallthru
    _
  // Predicated region
  $region18: #{pagcn_forward.9} parent=0 // pred_check
    _
  $region19: #{pagcn_forward.9} parent=0 // pred_check_branch
    %23 = sbr.rel (0) target = $region21
  $region20: #{pagcn_forward.9} parent=0 // pred_region
    _
  $region21: #{pagcn_forward.9} parent=0 // pred_fallthru
    _
  // Predicated region
  $region22: #{pagcn_forward.9} parent=0 // pred_check
    _
  $region23: #{pagcn_forward.9} parent=0 // pred_check_branch
    %25 = sbr.rel (0) target = $region25
  $region24: #{pagcn_forward.9} parent=0 // pred_region
    _
  $region25: #{pagcn_forward.9} parent=0 // pred_fallthru
    _
  // Predicated region
  $region26: #{pagcn_forward.9} parent=0 // pred_check
    _
  $region27: #{pagcn_forward.9} parent=0 // pred_check_branch
    %27 = sbr.rel (0) target = $region29
  $region28: #{pagcn_forward.9} parent=0 // pred_region
    _
  $region29: #{pagcn_forward.9} parent=0 // pred_fallthru
    _
  %v28 = vld [vmem:[%s0] sm:$0xff]
  %v29 = vld [vmem:[%s0 + $0x8] sm:$0xff]
  %v30 = vld [vmem:[%s0 + $0x10] sm:$0xff]
  %v31 = vld [vmem:[%s0 + $0x18] sm:$0xff]
  %v32 = vld [vmem:[%s0 + $0x20] sm:$0xff]
  %v33 = vld [vmem:[%s0 + $0x28] sm:$0xff]
  %v34 = vld [vmem:[%s0 + $0x30] sm:$0xff]
  %v35 = vld [vmem:[%s0 + $0x38] sm:$0xff]
  %v36 = vld [vmem:[%s0 + $0x40] sm:$0xff]
  %v37 = vld [vmem:[%s0 + $0x48] sm:$0xff]
  %v38 = vld [vmem:[%s0 + $0x50] sm:$0xff]
  %v39 = vld [vmem:[%s0 + $0x58] sm:$0xff]
  %v40 = vld [vmem:[%s0 + $0x60] sm:$0xff]
  %v41 = vld [vmem:[%s0 + $0x68] sm:$0xff]
  %v42 = vld [vmem:[%s0 + $0x70] sm:$0xff]
  %v43 = vld [vmem:[%s0 + $0x78] sm:$0xff]
  %v44 = vld [vmem:[%s1] sm:$0xff]
  %v45 = vld [vmem:[%s1 + $0x8] sm:$0xff]
  %v46 = vld [vmem:[%s1 + $0x10] sm:$0xff]
  %v47 = vld [vmem:[%s1 + $0x18] sm:$0xff]
  %v48 = vld [vmem:[%s1 + $0x20] sm:$0xff]
  %v49 = vld [vmem:[%s1 + $0x28] sm:$0xff]
  %v50 = vld [vmem:[%s1 + $0x30] sm:$0xff]
  %v51 = vld [vmem:[%s1 + $0x38] sm:$0xff]
  %v52 = vld [vmem:[%s1 + $0x40] sm:$0xff]
  %v53 = vld [vmem:[%s1 + $0x48] sm:$0xff]
  %v54 = vld [vmem:[%s1 + $0x50] sm:$0xff]
  %v55 = vld [vmem:[%s1 + $0x58] sm:$0xff]
  %v56 = vld [vmem:[%s1 + $0x60] sm:$0xff]
  %v57 = vld [vmem:[%s1 + $0x68] sm:$0xff]
  %v58 = vld [vmem:[%s1 + $0x70] sm:$0xff]
  %v59 = vld [vmem:[%s1 + $0x78] sm:$0xff]
  %v60 = vld [vmem:[%s2] sm:$0x1]
  %v62 = vlaneseq
  %v63 = vshrl.u32 %v62, 7
  %v64 = vsub.s32 0, %v63
  %v65 = vrot.slane %v60, %v64
  %67 = vmatprep.subr.mxu0 0.0
  %68 = vmatpush1.msra.mxu0 %v44
  %69 = vmatprep.subr.mxu0 0.0
  %70 = vmatpush1.msra.mxu0 %v45
  %71 = vmatprep.subr.mxu0 0.0
  %72 = vmatpush1.msra.mxu0 %v46
  %73 = vmatprep.subr.mxu0 0.0
  %74 = vmatpush1.msra.mxu0 %v47
  %75 = vmatprep.subr.mxu0 0.0
  %76 = vmatpush1.msra.mxu0 %v48
  %77 = vmatprep.subr.mxu0 0.0
  %78 = vmatpush1.msra.mxu0 %v49
  %79 = vmatprep.subr.mxu0 0.0
  %80 = vmatpush1.msra.mxu0 %v50
  %81 = vmatprep.subr.mxu0 0.0
  %82 = vmatpush1.msra.mxu0 %v51
  %83 = vmatprep.subr.mxu0 0.0
  %84 = vmatpush1.msra.mxu0 %v52
  %85 = vmatprep.subr.mxu0 0.0
  %86 = vmatpush1.msra.mxu0 %v53
  %87 = vmatprep.subr.mxu0 0.0
  %88 = vmatpush1.msra.mxu0 %v54
  %89 = vmatprep.subr.mxu0 0.0
  %90 = vmatpush1.msra.mxu0 %v55
  %91 = vmatprep.subr.mxu0 0.0
  %92 = vmatpush1.msra.mxu0 %v56
  %93 = vmatprep.subr.mxu0 0.0
  %94 = vmatpush1.msra.mxu0 %v57
  %95 = vmatprep.subr.mxu0 0.0
  %96 = vmatpush1.msra.mxu0 %v58
  %97 = vmatprep.subr.mxu0 0.0
  %98 = vmatpush1.msra.mxu0 %v59
  %99 = vmatprep.subr.mxu0 0.0
  %100 = vmatpush1.msra.mxu0 0.0
  %101 = vmatprep.subr.mxu0 0.0
  %102 = vmatpush1.msra.mxu0 0.0
  %103 = vmatprep.subr.mxu0 0.0
  %104 = vmatpush1.msra.mxu0 0.0
  %105 = vmatprep.subr.mxu0 0.0
  %106 = vmatpush1.msra.mxu0 0.0
  %107 = vmatprep.subr.mxu0 0.0
  %108 = vmatpush1.msra.mxu0 0.0
  %109 = vmatprep.subr.mxu0 0.0
  %110 = vmatpush1.msra.mxu0 0.0
  %111 = vmatprep.subr.mxu0 0.0
  %112 = vmatpush1.msra.mxu0 0.0
  %113 = vmatprep.subr.mxu0 0.0
  %114 = vmatpush1.msra.mxu0 0.0
  %115 = vmatprep.subr.mxu0 0.0
  %116 = vmatpush1.msra.mxu0 0.0
  %117 = vmatprep.subr.mxu0 0.0
  %118 = vmatpush1.msra.mxu0 0.0
  %119 = vmatprep.subr.mxu0 0.0
  %120 = vmatpush1.msra.mxu0 0.0
  %121 = vmatprep.subr.mxu0 0.0
  %122 = vmatpush1.msra.mxu0 0.0
  %123 = vmatprep.subr.mxu0 0.0
  %124 = vmatpush1.msra.mxu0 0.0
  %125 = vmatprep.subr.mxu0 0.0
  %126 = vmatpush1.msra.mxu0 0.0
  %127 = vmatprep.subr.mxu0 0.0
  %128 = vmatpush1.msra.mxu0 0.0
  %129 = vmatprep.subr.mxu0 0.0
  %130 = vmatpush1.msra.mxu0 0.0
  %131 = vmatprep.mubr.f32.mxu0 0.0
  %132 = vmatmul.mubr.f32.gmra.mrb[0].mxu0 %v28
  %v133 = vpop.f32.mrb[0].mxu0
  %v134 = vadd.f32 %v65, %v133
  %v135 = vpop.f32.mrb[0].mxu0
  %136 = vmatprep.mubr.f32.mxu0 0.0
  %137 = vmatmul.mubr.f32.gmra.mrb[0].mxu0 %v29
  %v138 = vpop.f32.mrb[0].mxu0
  %v139 = vadd.f32 %v65, %v138
  %v140 = vpop.f32.mrb[0].mxu0
  %141 = vmatprep.mubr.f32.mxu0 0.0
  %142 = vmatmul.mubr.f32.gmra.mrb[0].mxu0 %v30
  %v143 = vpop.f32.mrb[0].mxu0
  %v144 = vadd.f32 %v65, %v143
  %v145 = vpop.f32.mrb[0].mxu0
  %146 = vmatprep.mubr.f32.mxu0 0.0
  %147 = vmatmul.mubr.f32.gmra.mrb[0].mxu0 %v31
  %v148 = vpop.f32.mrb[0].mxu0
  %v149 = vadd.f32 %v65, %v148
  %v150 = vpop.f32.mrb[0].mxu0
  %151 = vmatprep.mubr.f32.mxu0 0.0
  %152 = vmatmul.mubr.f32.gmra.mrb[0].mxu0 %v32
  %v153 = vpop.f32.mrb[0].mxu0
  %v154 = vadd.f32 %v65, %v153
  %v155 = vpop.f32.mrb[0].mxu0
  %156 = vmatprep.mubr.f32.mxu0 0.0
  %157 = vmatmul.mubr.f32.gmra.mrb[0].mxu0 %v33
  %v158 = vpop.f32.mrb[0].mxu0
  %v159 = vadd.f32 %v65, %v158
  %v160 = vpop.f32.mrb[0].mxu0
  %161 = vmatprep.mubr.f32.mxu0 0.0
  %162 = vmatmul.mubr.f32.gmra.mrb[0].mxu0 %v34
  %v163 = vpop.f32.mrb[0].mxu0
  %v164 = vadd.f32 %v65, %v163
  %v165 = vpop.f32.mrb[0].mxu0
  %166 = vmatprep.mubr.f32.mxu0 0.0
  %167 = vmatmul.mubr.f32.gmra.mrb[0].mxu0 %v35
  %v168 = vpop.f32.mrb[0].mxu0
  %v169 = vadd.f32 %v65, %v168
  %v170 = vpop.f32.mrb[0].mxu0
  %171 = vmatprep.mubr.f32.mxu0 0.0
  %172 = vmatmul.mubr.f32.gmra.mrb[0].mxu0 %v36
  %v173 = vpop.f32.mrb[0].mxu0
  %v174 = vadd.f32 %v65, %v173
  %v175 = vpop.f32.mrb[0].mxu0
  %176 = vmatprep.mubr.f32.mxu0 0.0
  %177 = vmatmul.mubr.f32.gmra.mrb[0].mxu0 %v37
  %v178 = vpop.f32.mrb[0].mxu0
  %v179 = vadd.f32 %v65, %v178
  %v180 = vpop.f32.mrb[0].mxu0
  %181 = vmatprep.mubr.f32.mxu0 0.0
  %182 = vmatmul.mubr.f32.gmra.mrb[0].mxu0 %v38
  %v183 = vpop.f32.mrb[0].mxu0
  %v184 = vadd.f32 %v65, %v183
  %v185 = vpop.f32.mrb[0].mxu0
  %186 = vmatprep.mubr.f32.mxu0 0.0
  %187 = vmatmul.mubr.f32.gmra.mrb[0].mxu0 %v39
  %v188 = vpop.f32.mrb[0].mxu0
  %v189 = vadd.f32 %v65, %v188
  %v190 = vpop.f32.mrb[0].mxu0
  %191 = vmatprep.mubr.f32.mxu0 0.0
  %192 = vmatmul.mubr.f32.gmra.mrb[0].mxu0 %v40
  %v193 = vpop.f32.mrb[0].mxu0
  %v194 = vadd.f32 %v65, %v193
  %v195 = vpop.f32.mrb[0].mxu0
  %196 = vmatprep.mubr.f32.mxu0 0.0
  %197 = vmatmul.mubr.f32.gmra.mrb[0].mxu0 %v41
  %v198 = vpop.f32.mrb[0].mxu0
  %v199 = vadd.f32 %v65, %v198
  %v200 = vpop.f32.mrb[0].mxu0
  %201 = vmatprep.mubr.f32.mxu0 0.0
  %202 = vmatmul.mubr.f32.gmra.mrb[0].mxu0 %v42
  %v203 = vpop.f32.mrb[0].mxu0
  %v204 = vadd.f32 %v65, %v203
  %v205 = vpop.f32.mrb[0].mxu0
  %206 = vmatprep.mubr.f32.mxu0 0.0
  %207 = vmatmul.mubr.f32.gmra.mrb[0].mxu0 %v43
  %v208 = vpop.f32.mrb[0].mxu0
  %v209 = vadd.f32 %v65, %v208
  %v210 = vpop.f32.mrb[0].mxu0
  %211 = vdwg.mxu0
  %v212 = vtanh.pop %v134
  %v213 = vtanh.pop %v139
  %v214 = vtanh.pop %v144
  %v215 = vtanh.pop %v149
  %v216 = vtanh.pop %v154
  %v217 = vtanh.pop %v159
  %v218 = vtanh.pop %v164
  %v219 = vtanh.pop %v169
  %v220 = vtanh.pop %v174
  %v221 = vtanh.pop %v179
  %v222 = vtanh.pop %v184
  %v223 = vtanh.pop %v189
  %v224 = vtanh.pop %v194
  %v225 = vtanh.pop %v199
  %v226 = vtanh.pop %v204
  %v227 = vtanh.pop %v209
  %v228 = vld [vmem:[%s3] sm:$0xff]
  %v229 = vld [vmem:[%s3 + $0x8] sm:$0xff]
  %v230 = vld [vmem:[%s3 + $0x10] sm:$0xff]
  %v231 = vld [vmem:[%s3 + $0x18] sm:$0xff]
  %v232 = vld [vmem:[%s3 + $0x20] sm:$0xff]
  %v233 = vld [vmem:[%s3 + $0x28] sm:$0xff]
  %v234 = vld [vmem:[%s3 + $0x30] sm:$0xff]
  %v235 = vld [vmem:[%s3 + $0x38] sm:$0xff]
  %v236 = vld [vmem:[%s3 + $0x40] sm:$0xff]
  %v237 = vld [vmem:[%s3 + $0x48] sm:$0xff]
  %v238 = vld [vmem:[%s3 + $0x50] sm:$0xff]
  %v239 = vld [vmem:[%s3 + $0x58] sm:$0xff]
  %v240 = vld [vmem:[%s3 + $0x60] sm:$0xff]
  %v241 = vld [vmem:[%s3 + $0x68] sm:$0xff]
  %v242 = vld [vmem:[%s3 + $0x70] sm:$0xff]
  %v243 = vld [vmem:[%s3 + $0x78] sm:$0xff]
  %v244 = vld [vmem:[%s4] sm:$0x1]
  %v246 = vlaneseq
  %v247 = vshrl.u32 %v246, 7
  %v248 = vsub.s32 0, %v247
  %v249 = vrot.slane %v244, %v248
  %251 = vmatprep.subr.mxu0 0.0
  %252 = vmatpush1.msra.mxu0 %v228
  %253 = vmatprep.subr.mxu0 0.0
  %254 = vmatpush1.msra.mxu0 %v229
  %255 = vmatprep.subr.mxu0 0.0
  %256 = vmatpush1.msra.mxu0 %v230
  %257 = vmatprep.subr.mxu0 0.0
  %258 = vmatpush1.msra.mxu0 %v231
  %259 = vmatprep.subr.mxu0 0.0
  %260 = vmatpush1.msra.mxu0 %v232
  %261 = vmatprep.subr.mxu0 0.0
  %262 = vmatpush1.msra.mxu0 %v233
  %263 = vmatprep.subr.mxu0 0.0
  %264 = vmatpush1.msra.mxu0 %v234
  %265 = vmatprep.subr.mxu0 0.0
  %266 = vmatpush1.msra.mxu0 %v235
  %267 = vmatprep.subr.mxu0 0.0
  %268 = vmatpush1.msra.mxu0 %v236
  %269 = vmatprep.subr.mxu0 0.0
  %270 = vmatpush1.msra.mxu0 %v237
  %271 = vmatprep.subr.mxu0 0.0
  %272 = vmatpush1.msra.mxu0 %v238
  %273 = vmatprep.subr.mxu0 0.0
  %274 = vmatpush1.msra.mxu0 %v239
  %275 = vmatprep.subr.mxu0 0.0
  %276 = vmatpush1.msra.mxu0 %v240
  %277 = vmatprep.subr.mxu0 0.0
  %278 = vmatpush1.msra.mxu0 %v241
  %279 = vmatprep.subr.mxu0 0.0
  %280 = vmatpush1.msra.mxu0 %v242
  %281 = vmatprep.subr.mxu0 0.0
  %282 = vmatpush1.msra.mxu0 %v243
  %283 = vmatprep.subr.mxu0 0.0
  %284 = vmatpush1.msra.mxu0 0.0
  %285 = vmatprep.subr.mxu0 0.0
  %286 = vmatpush1.msra.mxu0 0.0
  %287 = vmatprep.subr.mxu0 0.0
  %288 = vmatpush1.msra.mxu0 0.0
  %289 = vmatprep.subr.mxu0 0.0
  %290 = vmatpush1.msra.mxu0 0.0
  %291 = vmatprep.subr.mxu0 0.0
  %292 = vmatpush1.msra.mxu0 0.0
  %293 = vmatprep.subr.mxu0 0.0
  %294 = vmatpush1.msra.mxu0 0.0
  %295 = vmatprep.subr.mxu0 0.0
  %296 = vmatpush1.msra.mxu0 0.0
  %297 = vmatprep.subr.mxu0 0.0
  %298 = vmatpush1.msra.mxu0 0.0
  %299 = vmatprep.subr.mxu0 0.0
  %300 = vmatpush1.msra.mxu0 0.0
  %301 = vmatprep.subr.mxu0 0.0
  %302 = vmatpush1.msra.mxu0 0.0
  %303 = vmatprep.subr.mxu0 0.0
  %304 = vmatpush1.msra.mxu0 0.0
  %305 = vmatprep.subr.mxu0 0.0
  %306 = vmatpush1.msra.mxu0 0.0
  %307 = vmatprep.subr.mxu0 0.0
  %308 = vmatpush1.msra.mxu0 0.0
  %309 = vmatprep.subr.mxu0 0.0
  %310 = vmatpush1.msra.mxu0 0.0
  %311 = vmatprep.subr.mxu0 0.0
  %312 = vmatpush1.msra.mxu0 0.0
  %313 = vmatprep.subr.mxu0 0.0
  %314 = vmatpush1.msra.mxu0 0.0
  %315 = vmatprep.mubr.f32.mxu0 0.0
  %316 = vmatmul.mubr.f32.gmra.mrb[0].mxu0 %v212
  %v317 = vpop.f32.mrb[0].mxu0
  %v318 = vadd.f32 %v249, %v317
  %v319 = vpop.f32.mrb[0].mxu0
  %320 = vmatprep.mubr.f32.mxu0 0.0
  %321 = vmatmul.mubr.f32.gmra.mrb[0].mxu0 %v213
  %v322 = vpop.f32.mrb[0].mxu0
  %v323 = vadd.f32 %v249, %v322
  %v324 = vpop.f32.mrb[0].mxu0
  %325 = vmatprep.mubr.f32.mxu0 0.0
  %326 = vmatmul.mubr.f32.gmra.mrb[0].mxu0 %v214
  %v327 = vpop.f32.mrb[0].mxu0
  %v328 = vadd.f32 %v249, %v327
  %v329 = vpop.f32.mrb[0].mxu0
  %330 = vmatprep.mubr.f32.mxu0 0.0
  %331 = vmatmul.mubr.f32.gmra.mrb[0].mxu0 %v215
  %v332 = vpop.f32.mrb[0].mxu0
  %v333 = vadd.f32 %v249, %v332
  %v334 = vpop.f32.mrb[0].mxu0
  %335 = vmatprep.mubr.f32.mxu0 0.0
  %336 = vmatmul.mubr.f32.gmra.mrb[0].mxu0 %v216
  %v337 = vpop.f32.mrb[0].mxu0
  %v338 = vadd.f32 %v249, %v337
  %v339 = vpop.f32.mrb[0].mxu0
  %340 = vmatprep.mubr.f32.mxu0 0.0
  %341 = vmatmul.mubr.f32.gmra.mrb[0].mxu0 %v217
  %v342 = vpop.f32.mrb[0].mxu0
  %v343 = vadd.f32 %v249, %v342
  %v344 = vpop.f32.mrb[0].mxu0
  %345 = vmatprep.mubr.f32.mxu0 0.0
  %346 = vmatmul.mubr.f32.gmra.mrb[0].mxu0 %v218
  %v347 = vpop.f32.mrb[0].mxu0
  %v348 = vadd.f32 %v249, %v347
  %v349 = vpop.f32.mrb[0].mxu0
  %350 = vmatprep.mubr.f32.mxu0 0.0
  %351 = vmatmul.mubr.f32.gmra.mrb[0].mxu0 %v219
  %v352 = vpop.f32.mrb[0].mxu0
  %v353 = vadd.f32 %v249, %v352
  %v354 = vpop.f32.mrb[0].mxu0
  %355 = vmatprep.mubr.f32.mxu0 0.0
  %356 = vmatmul.mubr.f32.gmra.mrb[0].mxu0 %v220
  %v357 = vpop.f32.mrb[0].mxu0
  %v358 = vadd.f32 %v249, %v357
  %v359 = vpop.f32.mrb[0].mxu0
  %360 = vmatprep.mubr.f32.mxu0 0.0
  %361 = vmatmul.mubr.f32.gmra.mrb[0].mxu0 %v221
  %v362 = vpop.f32.mrb[0].mxu0
  %v363 = vadd.f32 %v249, %v362
  %v364 = vpop.f32.mrb[0].mxu0
  %365 = vmatprep.mubr.f32.mxu0 0.0
  %366 = vmatmul.mubr.f32.gmra.mrb[0].mxu0 %v222
  %v367 = vpop.f32.mrb[0].mxu0
  %v368 = vadd.f32 %v249, %v367
  %v369 = vpop.f32.mrb[0].mxu0
  %370 = vmatprep.mubr.f32.mxu0 0.0
  %371 = vmatmul.mubr.f32.gmra.mrb[0].mxu0 %v223
  %v372 = vpop.f32.mrb[0].mxu0
  %v373 = vadd.f32 %v249, %v372
  %v374 = vpop.f32.mrb[0].mxu0
  %375 = vmatprep.mubr.f32.mxu0 0.0
  %376 = vmatmul.mubr.f32.gmra.mrb[0].mxu0 %v224
  %v377 = vpop.f32.mrb[0].mxu0
  %v378 = vadd.f32 %v249, %v377
  %v379 = vpop.f32.mrb[0].mxu0
  %380 = vmatprep.mubr.f32.mxu0 0.0
  %381 = vmatmul.mubr.f32.gmra.mrb[0].mxu0 %v225
  %v382 = vpop.f32.mrb[0].mxu0
  %v383 = vadd.f32 %v249, %v382
  %v384 = vpop.f32.mrb[0].mxu0
  %385 = vmatprep.mubr.f32.mxu0 0.0
  %386 = vmatmul.mubr.f32.gmra.mrb[0].mxu0 %v226
  %v387 = vpop.f32.mrb[0].mxu0
  %v388 = vadd.f32 %v249, %v387
  %v389 = vpop.f32.mrb[0].mxu0
  %390 = vmatprep.mubr.f32.mxu0 0.0
  %391 = vmatmul.mubr.f32.gmra.mrb[0].mxu0 %v227
  %v392 = vpop.f32.mrb[0].mxu0
  %v393 = vadd.f32 %v249, %v392
  %v394 = vpop.f32.mrb[0].mxu0
  %395 = vdwg.mxu0
  %v396 = vtanh.pop %v318
  %v397 = vtanh.pop %v323
  %v398 = vtanh.pop %v328
  %v399 = vtanh.pop %v333
  %v400 = vtanh.pop %v338
  %v401 = vtanh.pop %v343
  %v402 = vtanh.pop %v348
  %v403 = vtanh.pop %v353
  %v404 = vtanh.pop %v358
  %v405 = vtanh.pop %v363
  %v406 = vtanh.pop %v368
  %v407 = vtanh.pop %v373
  %v408 = vtanh.pop %v378
  %v409 = vtanh.pop %v383
  %v410 = vtanh.pop %v388
  %v411 = vtanh.pop %v393
  %v412 = vld [vmem:[%s5] sm:$0xff]
  %v413 = vld [vmem:[%s5 + $0x8] sm:$0xff]
  %v414 = vld [vmem:[%s5 + $0x10] sm:$0xff]
  %v415 = vld [vmem:[%s5 + $0x18] sm:$0xff]
  %v416 = vld [vmem:[%s5 + $0x20] sm:$0xff]
  %v417 = vld [vmem:[%s5 + $0x28] sm:$0xff]
  %v418 = vld [vmem:[%s5 + $0x30] sm:$0xff]
  %v419 = vld [vmem:[%s5 + $0x38] sm:$0xff]
  %v420 = vld [vmem:[%s5 + $0x40] sm:$0xff]
  %v421 = vld [vmem:[%s5 + $0x48] sm:$0xff]
  %v422 = vld [vmem:[%s5 + $0x50] sm:$0xff]
  %v423 = vld [vmem:[%s5 + $0x58] sm:$0xff]
  %v424 = vld [vmem:[%s5 + $0x60] sm:$0xff]
  %v425 = vld [vmem:[%s5 + $0x68] sm:$0xff]
  %v426 = vld [vmem:[%s5 + $0x70] sm:$0xff]
  %v427 = vld [vmem:[%s5 + $0x78] sm:$0xff]
  %v428 = vld [vmem:[%s6] sm:$0x1]
  %v430 = vlaneseq
  %v431 = vshrl.u32 %v430, 7
  %v432 = vsub.s32 0, %v431
  %v433 = vrot.slane %v428, %v432
  %435 = vmatprep.subr.mxu0 0.0
  %436 = vmatpush1.msra.mxu0 %v412
  %437 = vmatprep.subr.mxu0 0.0
  %438 = vmatpush1.msra.mxu0 %v413
  %439 = vmatprep.subr.mxu0 0.0
  %440 = vmatpush1.msra.mxu0 %v414
  %441 = vmatprep.subr.mxu0 0.0
  %442 = vmatpush1.msra.mxu0 %v415
  %443 = vmatprep.subr.mxu0 0.0
  %444 = vmatpush1.msra.mxu0 %v416
  %445 = vmatprep.subr.mxu0 0.0
  %446 = vmatpush1.msra.mxu0 %v417
  %447 = vmatprep.subr.mxu0 0.0
  %448 = vmatpush1.msra.mxu0 %v418
  %449 = vmatprep.subr.mxu0 0.0
  %450 = vmatpush1.msra.mxu0 %v419
  %451 = vmatprep.subr.mxu0 0.0
  %452 = vmatpush1.msra.mxu0 %v420
  %453 = vmatprep.subr.mxu0 0.0
  %454 = vmatpush1.msra.mxu0 %v421
  %455 = vmatprep.subr.mxu0 0.0
  %456 = vmatpush1.msra.mxu0 %v422
  %457 = vmatprep.subr.mxu0 0.0
  %458 = vmatpush1.msra.mxu0 %v423
  %459 = vmatprep.subr.mxu0 0.0
  %460 = vmatpush1.msra.mxu0 %v424
  %461 = vmatprep.subr.mxu0 0.0
  %462 = vmatpush1.msra.mxu0 %v425
  %463 = vmatprep.subr.mxu0 0.0
  %464 = vmatpush1.msra.mxu0 %v426
  %465 = vmatprep.subr.mxu0 0.0
  %466 = vmatpush1.msra.mxu0 %v427
  %467 = vmatprep.subr.mxu0 0.0
  %468 = vmatpush1.msra.mxu0 0.0
  %469 = vmatprep.subr.mxu0 0.0
  %470 = vmatpush1.msra.mxu0 0.0
  %471 = vmatprep.subr.mxu0 0.0
  %472 = vmatpush1.msra.mxu0 0.0
  %473 = vmatprep.subr.mxu0 0.0
  %474 = vmatpush1.msra.mxu0 0.0
  %475 = vmatprep.subr.mxu0 0.0
  %476 = vmatpush1.msra.mxu0 0.0
  %477 = vmatprep.subr.mxu0 0.0
  %478 = vmatpush1.msra.mxu0 0.0
  %479 = vmatprep.subr.mxu0 0.0
  %480 = vmatpush1.msra.mxu0 0.0
  %481 = vmatprep.subr.mxu0 0.0
  %482 = vmatpush1.msra.mxu0 0.0
  %483 = vmatprep.subr.mxu0 0.0
  %484 = vmatpush1.msra.mxu0 0.0
  %485 = vmatprep.subr.mxu0 0.0
  %486 = vmatpush1.msra.mxu0 0.0
  %487 = vmatprep.subr.mxu0 0.0
  %488 = vmatpush1.msra.mxu0 0.0
  %489 = vmatprep.subr.mxu0 0.0
  %490 = vmatpush1.msra.mxu0 0.0
  %491 = vmatprep.subr.mxu0 0.0
  %492 = vmatpush1.msra.mxu0 0.0
  %493 = vmatprep.subr.mxu0 0.0
  %494 = vmatpush1.msra.mxu0 0.0
  %495 = vmatprep.subr.mxu0 0.0
  %496 = vmatpush1.msra.mxu0 0.0
  %497 = vmatprep.subr.mxu0 0.0
  %498 = vmatpush1.msra.mxu0 0.0
  %499 = vmatprep.mubr.f32.mxu0 0.0
  %500 = vmatmul.mubr.f32.gmra.mrb[0].mxu0 %v396
  %v501 = vpop.f32.mrb[0].mxu0
  %v502 = vadd.f32 %v433, %v501
  %v503 = vpop.f32.mrb[0].mxu0
  %504 = vmatprep.mubr.f32.mxu0 0.0
  %505 = vmatmul.mubr.f32.gmra.mrb[0].mxu0 %v397
  %v506 = vpop.f32.mrb[0].mxu0
  %v507 = vadd.f32 %v433, %v506
  %v508 = vpop.f32.mrb[0].mxu0
  %509 = vmatprep.mubr.f32.mxu0 0.0
  %510 = vmatmul.mubr.f32.gmra.mrb[0].mxu0 %v398
  %v511 = vpop.f32.mrb[0].mxu0
  %v512 = vadd.f32 %v433, %v511
  %v513 = vpop.f32.mrb[0].mxu0
  %514 = vmatprep.mubr.f32.mxu0 0.0
  %515 = vmatmul.mubr.f32.gmra.mrb[0].mxu0 %v399
  %v516 = vpop.f32.mrb[0].mxu0
  %v517 = vadd.f32 %v433, %v516
  %v518 = vpop.f32.mrb[0].mxu0
  %519 = vmatprep.mubr.f32.mxu0 0.0
  %520 = vmatmul.mubr.f32.gmra.mrb[0].mxu0 %v400
  %v521 = vpop.f32.mrb[0].mxu0
  %v522 = vadd.f32 %v433, %v521
  %v523 = vpop.f32.mrb[0].mxu0
  %524 = vmatprep.mubr.f32.mxu0 0.0
  %525 = vmatmul.mubr.f32.gmra.mrb[0].mxu0 %v401
  %v526 = vpop.f32.mrb[0].mxu0
  %v527 = vadd.f32 %v433, %v526
  %v528 = vpop.f32.mrb[0].mxu0
  %529 = vmatprep.mubr.f32.mxu0 0.0
  %530 = vmatmul.mubr.f32.gmra.mrb[0].mxu0 %v402
  %v531 = vpop.f32.mrb[0].mxu0
  %v532 = vadd.f32 %v433, %v531
  %v533 = vpop.f32.mrb[0].mxu0
  %534 = vmatprep.mubr.f32.mxu0 0.0
  %535 = vmatmul.mubr.f32.gmra.mrb[0].mxu0 %v403
  %v536 = vpop.f32.mrb[0].mxu0
  %v537 = vadd.f32 %v433, %v536
  %v538 = vpop.f32.mrb[0].mxu0
  %539 = vmatprep.mubr.f32.mxu0 0.0
  %540 = vmatmul.mubr.f32.gmra.mrb[0].mxu0 %v404
  %v541 = vpop.f32.mrb[0].mxu0
  %v542 = vadd.f32 %v433, %v541
  %v543 = vpop.f32.mrb[0].mxu0
  %544 = vmatprep.mubr.f32.mxu0 0.0
  %545 = vmatmul.mubr.f32.gmra.mrb[0].mxu0 %v405
  %v546 = vpop.f32.mrb[0].mxu0
  %v547 = vadd.f32 %v433, %v546
  %v548 = vpop.f32.mrb[0].mxu0
  %549 = vmatprep.mubr.f32.mxu0 0.0
  %550 = vmatmul.mubr.f32.gmra.mrb[0].mxu0 %v406
  %v551 = vpop.f32.mrb[0].mxu0
  %v552 = vadd.f32 %v433, %v551
  %v553 = vpop.f32.mrb[0].mxu0
  %554 = vmatprep.mubr.f32.mxu0 0.0
  %555 = vmatmul.mubr.f32.gmra.mrb[0].mxu0 %v407
  %v556 = vpop.f32.mrb[0].mxu0
  %v557 = vadd.f32 %v433, %v556
  %v558 = vpop.f32.mrb[0].mxu0
  %559 = vmatprep.mubr.f32.mxu0 0.0
  %560 = vmatmul.mubr.f32.gmra.mrb[0].mxu0 %v408
  %v561 = vpop.f32.mrb[0].mxu0
  %v562 = vadd.f32 %v433, %v561
  %v563 = vpop.f32.mrb[0].mxu0
  %564 = vmatprep.mubr.f32.mxu0 0.0
  %565 = vmatmul.mubr.f32.gmra.mrb[0].mxu0 %v409
  %v566 = vpop.f32.mrb[0].mxu0
  %v567 = vadd.f32 %v433, %v566
  %v568 = vpop.f32.mrb[0].mxu0
  %569 = vmatprep.mubr.f32.mxu0 0.0
  %570 = vmatmul.mubr.f32.gmra.mrb[0].mxu0 %v410
  %v571 = vpop.f32.mrb[0].mxu0
  %v572 = vadd.f32 %v433, %v571
  %v573 = vpop.f32.mrb[0].mxu0
  %574 = vmatprep.mubr.f32.mxu0 0.0
  %575 = vmatmul.mubr.f32.gmra.mrb[0].mxu0 %v411
  %v576 = vpop.f32.mrb[0].mxu0
  %v577 = vadd.f32 %v433, %v576
  %v578 = vpop.f32.mrb[0].mxu0
  %579 = vdwg.mxu0
  %s580 = smul.u32 0, 128
  %v581 = vlaneseq
  %v582 = vshrl.u32 %v581, 7
  %v583 = vadd.s32 %v582, 8
  %v584 = vadd.s32 %v582, 16
  %v585 = vadd.s32 %v582, 24
  %v586 = vadd.s32 %v582, 32
  %v587 = vadd.s32 %v582, 40
  %v588 = vadd.s32 %v582, 48
  %v589 = vadd.s32 %v582, 56
  %v590 = vadd.s32 %v582, 64
  %v591 = vadd.s32 %v582, 72
  %v592 = vadd.s32 %v582, 80
  %v593 = vadd.s32 %v582, 88
  %v594 = vadd.s32 %v582, 96
  %v595 = vadd.s32 %v582, 104
  %v596 = vadd.s32 %v582, 112
  %v597 = vadd.s32 %v582, 120
  %v598 = vstv %s580
  %v599 = vadd.s32 %v598, %v582
  %v600 = vadd.s32 %v598, %v583
  %v601 = vadd.s32 %v598, %v584
  %v602 = vadd.s32 %v598, %v585
  %v603 = vadd.s32 %v598, %v586
  %v604 = vadd.s32 %v598, %v587
  %v605 = vadd.s32 %v598, %v588
  %v606 = vadd.s32 %v598, %v589
  %v607 = vadd.s32 %v598, %v590
  %v608 = vadd.s32 %v598, %v591
  %v609 = vadd.s32 %v598, %v592
  %v610 = vadd.s32 %v598, %v593
  %v611 = vadd.s32 %v598, %v594
  %v612 = vadd.s32 %v598, %v595
  %v613 = vadd.s32 %v598, %v596
  %v614 = vadd.s32 %v598, %v597
  %vm615 = vcmp.lt.s32.totalorder %v599, 24
  %vm616 = vcmp.lt.s32.totalorder %v600, 24
  %vm617 = vcmp.lt.s32.totalorder %v601, 24
  %vm618 = vcmp.lt.s32.totalorder %v602, 24
  %vm619 = vcmp.lt.s32.totalorder %v603, 24
  %vm620 = vcmp.lt.s32.totalorder %v604, 24
  %vm621 = vcmp.lt.s32.totalorder %v605, 24
  %vm622 = vcmp.lt.s32.totalorder %v606, 24
  %vm623 = vcmp.lt.s32.totalorder %v607, 24
  %vm624 = vcmp.lt.s32.totalorder %v608, 24
  %vm625 = vcmp.lt.s32.totalorder %v609, 24
  %vm626 = vcmp.lt.s32.totalorder %v610, 24
  %vm627 = vcmp.lt.s32.totalorder %v611, 24
  %vm628 = vcmp.lt.s32.totalorder %v612, 24
  %vm629 = vcmp.lt.s32.totalorder %v613, 24
  %vm630 = vcmp.lt.s32.totalorder %v614, 24
  %v631 = vsel %vm615, %v502, 0.0
  %v632 = vsel %vm616, %v507, 0.0
  %v633 = vsel %vm617, %v512, 0.0
  %v634 = vsel %vm618, %v517, 0.0
  %v635 = vsel %vm619, %v522, 0.0
  %v636 = vsel %vm620, %v527, 0.0
  %v637 = vsel %vm621, %v532, 0.0
  %v638 = vsel %vm622, %v537, 0.0
  %v639 = vsel %vm623, %v542, 0.0
  %v640 = vsel %vm624, %v547, 0.0
  %v641 = vsel %vm625, %v552, 0.0
  %v642 = vsel %vm626, %v557, 0.0
  %v643 = vsel %vm627, %v562, 0.0
  %v644 = vsel %vm628, %v567, 0.0
  %v645 = vsel %vm629, %v572, 0.0
  %v646 = vsel %vm630, %v577, 0.0
  %647 = vst [vmem:[%s7] sm:$0xff] %v631
  %648 = vst [vmem:[%s7 + $0x8] sm:$0xff] %v632
  %649 = vst [vmem:[%s7 + $0x10] sm:$0xff] %v633
  %650 = vst [vmem:[%s7 + $0x18] sm:$0xff] %v634
  %651 = vst [vmem:[%s7 + $0x20] sm:$0xff] %v635
  %652 = vst [vmem:[%s7 + $0x28] sm:$0xff] %v636
  %653 = vst [vmem:[%s7 + $0x30] sm:$0xff] %v637
  %654 = vst [vmem:[%s7 + $0x38] sm:$0xff] %v638
  %655 = vst [vmem:[%s7 + $0x40] sm:$0xff] %v639
  %656 = vst [vmem:[%s7 + $0x48] sm:$0xff] %v640
  %657 = vst [vmem:[%s7 + $0x50] sm:$0xff] %v641
  %658 = vst [vmem:[%s7 + $0x58] sm:$0xff] %v642
  %659 = vst [vmem:[%s7 + $0x60] sm:$0xff] %v643
  %660 = vst [vmem:[%s7 + $0x68] sm:$0xff] %v644
  %661 = vst [vmem:[%s7 + $0x70] sm:$0xff] %v645
  %662 = vst [vmem:[%s7 + $0x78] sm:$0xff] %v646
  %v663 = vmul.f32 %v631, %v631
  %v664 = vmul.f32 %v632, %v632
  %v665 = vmul.f32 %v633, %v633
  %v666 = vmul.f32 %v634, %v634
  %v667 = vmul.f32 %v635, %v635
  %v668 = vmul.f32 %v636, %v636
  %v669 = vmul.f32 %v637, %v637
  %v670 = vmul.f32 %v638, %v638
  %v671 = vmul.f32 %v639, %v639
  %v672 = vmul.f32 %v640, %v640
  %v673 = vmul.f32 %v641, %v641
  %v674 = vmul.f32 %v642, %v642
  %v675 = vmul.f32 %v643, %v643
  %v676 = vmul.f32 %v644, %v644
  %v677 = vmul.f32 %v645, %v645
  %v678 = vmul.f32 %v646, %v646
  %v679 = vadd.f32 %v663, %v664
  %v680 = vadd.f32 %v679, %v665
  %v681 = vadd.f32 %v680, %v666
  %v682 = vadd.f32 %v681, %v667
  %v683 = vadd.f32 %v682, %v668
  %v684 = vadd.f32 %v683, %v669
  %v685 = vadd.f32 %v684, %v670
  %v686 = vadd.f32 %v685, %v671
  %v687 = vadd.f32 %v686, %v672
  %v688 = vadd.f32 %v687, %v673
  %v689 = vadd.f32 %v688, %v674
  %v690 = vadd.f32 %v689, %v675
  %v691 = vadd.f32 %v690, %v676
  %v692 = vadd.f32 %v691, %v677
  %v693 = vadd.f32 %v692, %v678
  %v694 = vrot.slane %v693, 4
  %v695 = vadd.f32 %v693, %v694
  %v696 = vrot.slane %v695, 2
  %v697 = vadd.f32 %v695, %v696
  %v698 = vrot.slane %v697, 1
  %v699 = vadd.f32 %v697, %v698
  %700 = vst [vmem:[%s8] sm:$0x1] %v699
  // Predicated region
  $region30: #{pagcn_forward.9} parent=0 // pred_check
    _
  $region31: #{pagcn_forward.9} parent=0 // pred_check_branch
    %702 = sbr.rel (0) target = $region33
  $region32: #{pagcn_forward.9} parent=0 // pred_region
    _
  $region33: #{pagcn_forward.9} parent=0 // pred_fallthru
    _
  // Predicated region
  $region34: #{pagcn_forward.9} parent=0 // pred_check
    _
  $region35: #{pagcn_forward.9} parent=0 // pred_check_branch
    %704 = sbr.rel (0) target = $region37
  $region36: #{pagcn_forward.9} parent=0 // pred_region
    _
  $region37: #{pagcn_forward.9} parent=0 // pred_fallthru
    _
  // Predicated region
  $region38: #{pagcn_forward.9} parent=0 // pred_check
    _
  $region39: #{pagcn_forward.9} parent=0 // pred_check_branch
    %706 = sbr.rel (0) target = $region41
  $region40: #{pagcn_forward.9} parent=0 // pred_region
    _
  $region41: #{pagcn_forward.9} parent=0 // pred_fallthru
    _
  // Predicated region
  $region42: #{pagcn_forward.9} parent=0 // pred_check
    _
  $region43: #{pagcn_forward.9} parent=0 // pred_check_branch
    %708 = sbr.rel (0) target = $region45
  $region44: #{pagcn_forward.9} parent=0 // pred_region
    _
  $region45: #{pagcn_forward.9} parent=0 // pred_fallthru
    _

// kernel: pagcn_forward.10
$region0: #{pagcn_forward.10}
  #allocation0 [shape = 'u32[]', space=smem, size = 0x4, offset = 0x4, fixed_abs, tag = 'smem constant byte address 0x4 - core index']
  #allocation1 [shape = 'u32[144,128]{1,0:T(1,128)}', space=vmem, size = 0x12000, scoped, tag = 'internal scratch']
  %s0 = inlined_call_operand.vmem [shape: bf16[128,128], index: 0, kind: input, shape index: {}]
  %s1 = inlined_call_operand.vmem [shape: bf16[128,384], index: 1, kind: input, shape index: {}]
  %s2 = inlined_call_operand.vmem [shape: f32[3,128,1], index: 2, kind: input, shape index: {}]
  %s3 = inlined_call_operand.vmem [shape: f32[128,384], index: 3, kind: output, shape index: {0}]
  %s4 = inlined_call_operand.vmem [shape: f32[128,128], index: 4, kind: output, shape index: {1}]
  %5 = xla_tuple %s3, %s4
  %s6 = sld [smem:[#allocation0]]
  $region38: #{pagcn_forward.10} parent=0
    _
  %s8 = ssub.s32 1, %s6
  %s9 = scalar_select 0, %s8, %s6
  // Predicated region
  $region2: #{pagcn_forward.10} parent=0 // pred_check
    _
  $region3: #{pagcn_forward.10} parent=0 // pred_check_branch
    %11 = sbr.rel (0) target = $region5
  $region4: #{pagcn_forward.10} parent=0 // pred_region
    _
  $region5: #{pagcn_forward.10} parent=0 // pred_fallthru
    _
  // Predicated region
  $region6: #{pagcn_forward.10} parent=0 // pred_check
    _
  $region7: #{pagcn_forward.10} parent=0 // pred_check_branch
    %13 = sbr.rel (0) target = $region9
  $region8: #{pagcn_forward.10} parent=0 // pred_region
    _
  $region9: #{pagcn_forward.10} parent=0 // pred_fallthru
    _
  // Predicated region
  $region10: #{pagcn_forward.10} parent=0 // pred_check
    _
  $region11: #{pagcn_forward.10} parent=0 // pred_check_branch
    %15 = sbr.rel (0) target = $region13
  $region12: #{pagcn_forward.10} parent=0 // pred_region
    _
  $region13: #{pagcn_forward.10} parent=0 // pred_fallthru
    _
  %p17 = scmp.eq.s32.totalorder 0, 0
  // Predicated region
  $region14: #{pagcn_forward.10} parent=0 // pred_check
    %p18 = pneg %p17
  $region15: #{pagcn_forward.10} parent=0 // pred_check_branch
    %20 = sbr.rel (%p18) target = $region17
  $region16: #{pagcn_forward.10} parent=0 // pred_region
    %21 = vst [vmem:[%s3] sm:$0xff] 0.0
    %22 = vst [vmem:[%s3 + $0x8] sm:$0xff] 0.0
    %23 = vst [vmem:[%s3 + $0x10] sm:$0xff] 0.0
    %24 = vst [vmem:[%s3 + $0x18] sm:$0xff] 0.0
    %25 = vst [vmem:[%s3 + $0x20] sm:$0xff] 0.0
    %26 = vst [vmem:[%s3 + $0x28] sm:$0xff] 0.0
    %27 = vst [vmem:[%s3 + $0x30] sm:$0xff] 0.0
    %28 = vst [vmem:[%s3 + $0x38] sm:$0xff] 0.0
    %29 = vst [vmem:[%s3 + $0x40] sm:$0xff] 0.0
    %30 = vst [vmem:[%s3 + $0x48] sm:$0xff] 0.0
    %31 = vst [vmem:[%s3 + $0x50] sm:$0xff] 0.0
    %32 = vst [vmem:[%s3 + $0x58] sm:$0xff] 0.0
    %33 = vst [vmem:[%s3 + $0x60] sm:$0xff] 0.0
    %34 = vst [vmem:[%s3 + $0x68] sm:$0xff] 0.0
    %35 = vst [vmem:[%s3 + $0x70] sm:$0xff] 0.0
    %36 = vst [vmem:[%s3 + $0x78] sm:$0xff] 0.0
    %37 = vst [vmem:[%s3 + $0x80] sm:$0xff] 0.0
    %38 = vst [vmem:[%s3 + $0x88] sm:$0xff] 0.0
    %39 = vst [vmem:[%s3 + $0x90] sm:$0xff] 0.0
    %40 = vst [vmem:[%s3 + $0x98] sm:$0xff] 0.0
    %41 = vst [vmem:[%s3 + $0xa0] sm:$0xff] 0.0
    %42 = vst [vmem:[%s3 + $0xa8] sm:$0xff] 0.0
    %43 = vst [vmem:[%s3 + $0xb0] sm:$0xff] 0.0
    %44 = vst [vmem:[%s3 + $0xb8] sm:$0xff] 0.0
    %45 = vst [vmem:[%s3 + $0xc0] sm:$0xff] 0.0
    %46 = vst [vmem:[%s3 + $0xc8] sm:$0xff] 0.0
    %47 = vst [vmem:[%s3 + $0xd0] sm:$0xff] 0.0
    %48 = vst [vmem:[%s3 + $0xd8] sm:$0xff] 0.0
    %49 = vst [vmem:[%s3 + $0xe0] sm:$0xff] 0.0
    %50 = vst [vmem:[%s3 + $0xe8] sm:$0xff] 0.0
    %51 = vst [vmem:[%s3 + $0xf0] sm:$0xff] 0.0
    %52 = vst [vmem:[%s3 + $0xf8] sm:$0xff] 0.0
    %53 = vst [vmem:[%s3 + $0x100] sm:$0xff] 0.0
    %54 = vst [vmem:[%s3 + $0x108] sm:$0xff] 0.0
    %55 = vst [vmem:[%s3 + $0x110] sm:$0xff] 0.0
    %56 = vst [vmem:[%s3 + $0x118] sm:$0xff] 0.0
    %57 = vst [vmem:[%s3 + $0x120] sm:$0xff] 0.0
    %58 = vst [vmem:[%s3 + $0x128] sm:$0xff] 0.0
    %59 = vst [vmem:[%s3 + $0x130] sm:$0xff] 0.0
    %60 = vst [vmem:[%s3 + $0x138] sm:$0xff] 0.0
    %61 = vst [vmem:[%s3 + $0x140] sm:$0xff] 0.0
    %62 = vst [vmem:[%s3 + $0x148] sm:$0xff] 0.0
    %63 = vst [vmem:[%s3 + $0x150] sm:$0xff] 0.0
    %64 = vst [vmem:[%s3 + $0x158] sm:$0xff] 0.0
    %65 = vst [vmem:[%s3 + $0x160] sm:$0xff] 0.0
    %66 = vst [vmem:[%s3 + $0x168] sm:$0xff] 0.0
    %67 = vst [vmem:[%s3 + $0x170] sm:$0xff] 0.0
    %68 = vst [vmem:[%s3 + $0x178] sm:$0xff] 0.0
  $region17: #{pagcn_forward.10} parent=0 // pred_fallthru
    _
  %v69 = vld [vmem:[%s3] sm:$0xff]
  %v70 = vld [vmem:[%s3 + $0x8] sm:$0xff]
  %v71 = vld [vmem:[%s3 + $0x10] sm:$0xff]
  %v72 = vld [vmem:[%s3 + $0x18] sm:$0xff]
  %v73 = vld [vmem:[%s3 + $0x20] sm:$0xff]
  %v74 = vld [vmem:[%s3 + $0x28] sm:$0xff]
  %v75 = vld [vmem:[%s3 + $0x30] sm:$0xff]
  %v76 = vld [vmem:[%s3 + $0x38] sm:$0xff]
  %v77 = vld [vmem:[%s3 + $0x40] sm:$0xff]
  %v78 = vld [vmem:[%s3 + $0x48] sm:$0xff]
  %v79 = vld [vmem:[%s3 + $0x50] sm:$0xff]
  %v80 = vld [vmem:[%s3 + $0x58] sm:$0xff]
  %v81 = vld [vmem:[%s3 + $0x60] sm:$0xff]
  %v82 = vld [vmem:[%s3 + $0x68] sm:$0xff]
  %v83 = vld [vmem:[%s3 + $0x70] sm:$0xff]
  %v84 = vld [vmem:[%s3 + $0x78] sm:$0xff]
  %v85 = vld [vmem:[%s3 + $0x80] sm:$0xff]
  %v86 = vld [vmem:[%s3 + $0x88] sm:$0xff]
  %v87 = vld [vmem:[%s3 + $0x90] sm:$0xff]
  %v88 = vld [vmem:[%s3 + $0x98] sm:$0xff]
  %v89 = vld [vmem:[%s3 + $0xa0] sm:$0xff]
  %v90 = vld [vmem:[%s3 + $0xa8] sm:$0xff]
  %v91 = vld [vmem:[%s3 + $0xb0] sm:$0xff]
  %v92 = vld [vmem:[%s3 + $0xb8] sm:$0xff]
  %v93 = vld [vmem:[%s3 + $0xc0] sm:$0xff]
  %v94 = vld [vmem:[%s3 + $0xc8] sm:$0xff]
  %v95 = vld [vmem:[%s3 + $0xd0] sm:$0xff]
  %v96 = vld [vmem:[%s3 + $0xd8] sm:$0xff]
  %v97 = vld [vmem:[%s3 + $0xe0] sm:$0xff]
  %v98 = vld [vmem:[%s3 + $0xe8] sm:$0xff]
  %v99 = vld [vmem:[%s3 + $0xf0] sm:$0xff]
  %v100 = vld [vmem:[%s3 + $0xf8] sm:$0xff]
  %v101 = vld [vmem:[%s3 + $0x100] sm:$0xff]
  %v102 = vld [vmem:[%s3 + $0x108] sm:$0xff]
  %v103 = vld [vmem:[%s3 + $0x110] sm:$0xff]
  %v104 = vld [vmem:[%s3 + $0x118] sm:$0xff]
  %v105 = vld [vmem:[%s3 + $0x120] sm:$0xff]
  %v106 = vld [vmem:[%s3 + $0x128] sm:$0xff]
  %v107 = vld [vmem:[%s3 + $0x130] sm:$0xff]
  %v108 = vld [vmem:[%s3 + $0x138] sm:$0xff]
  %v109 = vld [vmem:[%s3 + $0x140] sm:$0xff]
  %v110 = vld [vmem:[%s3 + $0x148] sm:$0xff]
  %v111 = vld [vmem:[%s3 + $0x150] sm:$0xff]
  %v112 = vld [vmem:[%s3 + $0x158] sm:$0xff]
  %v113 = vld [vmem:[%s3 + $0x160] sm:$0xff]
  %v114 = vld [vmem:[%s3 + $0x168] sm:$0xff]
  %v115 = vld [vmem:[%s3 + $0x170] sm:$0xff]
  %v116 = vld [vmem:[%s3 + $0x178] sm:$0xff]
  %v117 = vld [vmem:[%s0] sm:$0xf]
  %v118 = vld [vmem:[%s0 + $0x4] sm:$0xf]
  %v119 = vld [vmem:[%s0 + $0x8] sm:$0xf]
  %v120 = vld [vmem:[%s0 + $0xc] sm:$0xf]
  %v121 = vld [vmem:[%s0 + $0x10] sm:$0xf]
  %v122 = vld [vmem:[%s0 + $0x14] sm:$0xf]
  %v123 = vld [vmem:[%s0 + $0x18] sm:$0xf]
  %v124 = vld [vmem:[%s0 + $0x1c] sm:$0xf]
  %v125 = vld [vmem:[%s0 + $0x20] sm:$0xf]
  %v126 = vld [vmem:[%s0 + $0x24] sm:$0xf]
  %v127 = vld [vmem:[%s0 + $0x28] sm:$0xf]
  %v128 = vld [vmem:[%s0 + $0x2c] sm:$0xf]
  %v129 = vld [vmem:[%s0 + $0x30] sm:$0xf]
  %v130 = vld [vmem:[%s0 + $0x34] sm:$0xf]
  %v131 = vld [vmem:[%s0 + $0x38] sm:$0xf]
  %v132 = vld [vmem:[%s0 + $0x3c] sm:$0xf]
  %v133 = vld [vmem:[%s1] sm:$0xff]
  %v134 = vld [vmem:[%s1 + $0x8] sm:$0xf]
  %v135 = vld [vmem:[%s1 + $0xc] sm:$0xff]
  %v136 = vld [vmem:[%s1 + $0x14] sm:$0xf]
  %v137 = vld [vmem:[%s1 + $0x18] sm:$0xff]
  %v138 = vld [vmem:[%s1 + $0x20] sm:$0xf]
  %v139 = vld [vmem:[%s1 + $0x24] sm:$0xff]
  %v140 = vld [vmem:[%s1 + $0x2c] sm:$0xf]
  %v141 = vld [vmem:[%s1 + $0x30] sm:$0xff]
  %v142 = vld [vmem:[%s1 + $0x38] sm:$0xf]
  %v143 = vld [vmem:[%s1 + $0x3c] sm:$0xff]
  %v144 = vld [vmem:[%s1 + $0x44] sm:$0xf]
  %v145 = vld [vmem:[%s1 + $0x48] sm:$0xff]
  %v146 = vld [vmem:[%s1 + $0x50] sm:$0xf]
  %v147 = vld [vmem:[%s1 + $0x54] sm:$0xff]
  %v148 = vld [vmem:[%s1 + $0x5c] sm:$0xf]
  %v149 = vld [vmem:[%s1 + $0x60] sm:$0xff]
  %v150 = vld [vmem:[%s1 + $0x68] sm:$0xf]
  %v151 = vld [vmem:[%s1 + $0x6c] sm:$0xff]
  %v152 = vld [vmem:[%s1 + $0x74] sm:$0xf]
  %v153 = vld [vmem:[%s1 + $0x78] sm:$0xff]
  %v154 = vld [vmem:[%s1 + $0x80] sm:$0xf]
  %v155 = vld [vmem:[%s1 + $0x84] sm:$0xff]
  %v156 = vld [vmem:[%s1 + $0x8c] sm:$0xf]
  %v157 = vld [vmem:[%s1 + $0x90] sm:$0xff]
  %v158 = vld [vmem:[%s1 + $0x98] sm:$0xf]
  %v159 = vld [vmem:[%s1 + $0x9c] sm:$0xff]
  %v160 = vld [vmem:[%s1 + $0xa4] sm:$0xf]
  %v161 = vld [vmem:[%s1 + $0xa8] sm:$0xff]
  %v162 = vld [vmem:[%s1 + $0xb0] sm:$0xf]
  %v163 = vld [vmem:[%s1 + $0xb4] sm:$0xff]
  %v164 = vld [vmem:[%s1 + $0xbc] sm:$0xf]
  %v181 = vunpack.c.l.b16 %v117
  %v182 = vunpack.c.l.b16 %v118
  %v183 = vunpack.c.l.b16 %v119
  %v184 = vunpack.c.l.b16 %v120
  %v185 = vunpack.c.l.b16 %v121
  %v186 = vunpack.c.l.b16 %v122
  %v187 = vunpack.c.l.b16 %v123
  %v188 = vunpack.c.l.b16 %v124
  %v189 = vunpack.c.l.b16 %v125
  %v190 = vunpack.c.l.b16 %v126
  %v191 = vunpack.c.l.b16 %v127
  %v192 = vunpack.c.l.b16 %v128
  %v193 = vunpack.c.l.b16 %v129
  %v194 = vunpack.c.l.b16 %v130
  %v195 = vunpack.c.l.b16 %v131
  %v196 = vunpack.c.l.b16 %v132
  %v197 = vpack.c.b16 %v182, %v181
  %v198 = vpack.c.b16 %v184, %v183
  %v199 = vpack.c.b16 %v186, %v185
  %v200 = vpack.c.b16 %v188, %v187
  %v201 = vpack.c.b16 %v190, %v189
  %v202 = vpack.c.b16 %v192, %v191
  %v203 = vpack.c.b16 %v194, %v193
  %v204 = vpack.c.b16 %v196, %v195
  %v245 = vunpack.c.l.b16 %v133
  %v246 = vunpack.c.h.b16 %v133
  %v247 = vunpack.c.l.b16 %v134
  %v248 = vunpack.c.l.b16 %v135
  %v249 = vunpack.c.h.b16 %v135
  %v250 = vunpack.c.l.b16 %v136
  %v251 = vunpack.c.l.b16 %v137
  %v252 = vunpack.c.h.b16 %v137
  %v253 = vunpack.c.l.b16 %v138
  %v254 = vunpack.c.l.b16 %v139
  %v255 = vunpack.c.h.b16 %v139
  %v256 = vunpack.c.l.b16 %v140
  %v257 = vunpack.c.l.b16 %v141
  %v258 = vunpack.c.h.b16 %v141
  %v259 = vunpack.c.l.b16 %v142
  %v260 = vunpack.c.l.b16 %v143
  %v261 = vunpack.c.h.b16 %v143
  %v262 = vunpack.c.l.b16 %v144
  %v263 = vunpack.c.l.b16 %v145
  %v264 = vunpack.c.h.b16 %v145
  %v265 = vunpack.c.l.b16 %v146
  %v266 = vunpack.c.l.b16 %v147
  %v267 = vunpack.c.h.b16 %v147
  %v268 = vunpack.c.l.b16 %v148
  %v269 = vunpack.c.l.b16 %v149
  %v270 = vunpack.c.h.b16 %v149
  %v271 = vunpack.c.l.b16 %v150
  %v272 = vunpack.c.l.b16 %v151
  %v273 = vunpack.c.h.b16 %v151
  %v274 = vunpack.c.l.b16 %v152
  %v275 = vunpack.c.l.b16 %v153
  %v276 = vunpack.c.h.b16 %v153
  %v277 = vunpack.c.l.b16 %v154
  %v278 = vunpack.c.l.b16 %v155
  %v279 = vunpack.c.h.b16 %v155
  %v280 = vunpack.c.l.b16 %v156
  %v281 = vunpack.c.l.b16 %v157
  %v282 = vunpack.c.h.b16 %v157
  %v283 = vunpack.c.l.b16 %v158
  %v284 = vunpack.c.l.b16 %v159
  %v285 = vunpack.c.h.b16 %v159
  %v286 = vunpack.c.l.b16 %v160
  %v287 = vunpack.c.l.b16 %v161
  %v288 = vunpack.c.h.b16 %v161
  %v289 = vunpack.c.l.b16 %v162
  %v290 = vunpack.c.l.b16 %v163
  %v291 = vunpack.c.h.b16 %v163
  %v292 = vunpack.c.l.b16 %v164
  %v293 = vpack.c.b16 %v248, %v245
  %v294 = vpack.c.b16 %v249, %v246
  %v295 = vpack.c.b16 %v250, %v247
  %v296 = vpack.c.b16 %v254, %v251
  %v297 = vpack.c.b16 %v255, %v252
  %v298 = vpack.c.b16 %v256, %v253
  %v299 = vpack.c.b16 %v260, %v257
  %v300 = vpack.c.b16 %v261, %v258
  %v301 = vpack.c.b16 %v262, %v259
  %v302 = vpack.c.b16 %v266, %v263
  %v303 = vpack.c.b16 %v267, %v264
  %v304 = vpack.c.b16 %v268, %v265
  %v305 = vpack.c.b16 %v272, %v269
  %v306 = vpack.c.b16 %v273, %v270
  %v307 = vpack.c.b16 %v274, %v271
  %v308 = vpack.c.b16 %v278, %v275
  %v309 = vpack.c.b16 %v279, %v276
  %v310 = vpack.c.b16 %v280, %v277
  %v311 = vpack.c.b16 %v284, %v281
  %v312 = vpack.c.b16 %v285, %v282
  %v313 = vpack.c.b16 %v286, %v283
  %v314 = vpack.c.b16 %v290, %v287
  %v315 = vpack.c.b16 %v291, %v288
  %v316 = vpack.c.b16 %v292, %v289
  %341 = vmatprep.subr.bf16.mxu0 %v294
  %342 = vmatpush1.bf16.msra.mxu0 %v293
  %343 = vmatprep.subr.bf16.mxu0 %v297
  %344 = vmatpush1.bf16.msra.mxu0 %v296
  %345 = vmatprep.subr.bf16.mxu0 %v300
  %346 = vmatpush1.bf16.msra.mxu0 %v299
  %347 = vmatprep.subr.bf16.mxu0 %v303
  %348 = vmatpush1.bf16.msra.mxu0 %v302
  %349 = vmatprep.subr.bf16.mxu0 %v306
  %350 = vmatpush1.bf16.msra.mxu0 %v305
  %351 = vmatprep.subr.bf16.mxu0 %v309
  %352 = vmatpush1.bf16.msra.mxu0 %v308
  %353 = vmatprep.subr.bf16.mxu0 %v312
  %354 = vmatpush1.bf16.msra.mxu0 %v311
  %355 = vmatprep.subr.bf16.mxu0 %v315
  %356 = vmatpush1.bf16.msra.mxu0 %v314
  %357 = vmatprep.subr.bf16.mxu0 0
  %358 = vmatpush1.bf16.msra.mxu0 0
  %359 = vmatprep.subr.bf16.mxu0 0
  %360 = vmatpush1.bf16.msra.mxu0 0
  %361 = vmatprep.subr.bf16.mxu0 0
  %362 = vmatpush1.bf16.msra.mxu0 0
  %363 = vmatprep.subr.bf16.mxu0 0
  %364 = vmatpush1.bf16.msra.mxu0 0
  %365 = vmatprep.subr.bf16.mxu0 0
  %366 = vmatpush1.bf16.msra.mxu0 0
  %367 = vmatprep.subr.bf16.mxu0 0
  %368 = vmatpush1.bf16.msra.mxu0 0
  %369 = vmatprep.subr.bf16.mxu0 0
  %370 = vmatpush1.bf16.msra.mxu0 0
  %371 = vmatprep.subr.bf16.mxu0 0
  %372 = vmatpush1.bf16.msra.mxu0 0
  %373 = vmatprep.mubr.bf16.mxu0 0
  %374 = vmatmul.mubr.bf16.gmra.mrb[0].mxu0 %v197
  %v375 = vpop.f32.mrb[0].mxu0
  %v376 = vadd.f32 0.0, %v375
  %v377 = vpop.f32.mrb[0].mxu0
  %v378 = vadd.f32 0.0, %v377
  %v379 = vpop.f32.mrb[0].mxu0
  %v380 = vadd.f32 0.0, %v379
  %v381 = vpop.f32.mrb[0].mxu0
  %v382 = vadd.f32 0.0, %v381
  %383 = vmatprep.mubr.bf16.mxu0 0
  %384 = vmatmul.mubr.bf16.gmra.mrb[0].mxu0 %v198
  %v385 = vpop.f32.mrb[0].mxu0
  %v386 = vadd.f32 0.0, %v385
  %v387 = vpop.f32.mrb[0].mxu0
  %v388 = vadd.f32 0.0, %v387
  %v389 = vpop.f32.mrb[0].mxu0
  %v390 = vadd.f32 0.0, %v389
  %v391 = vpop.f32.mrb[0].mxu0
  %v392 = vadd.f32 0.0, %v391
  %393 = vmatprep.mubr.bf16.mxu0 0
  %394 = vmatmul.mubr.bf16.gmra.mrb[0].mxu0 %v199
  %v395 = vpop.f32.mrb[0].mxu0
  %v396 = vadd.f32 0.0, %v395
  %v397 = vpop.f32.mrb[0].mxu0
  %v398 = vadd.f32 0.0, %v397
  %v399 = vpop.f32.mrb[0].mxu0
  %v400 = vadd.f32 0.0, %v399
  %v401 = vpop.f32.mrb[0].mxu0
  %v402 = vadd.f32 0.0, %v401
  %403 = vmatprep.mubr.bf16.mxu0 0
  %404 = vmatmul.mubr.bf16.gmra.mrb[0].mxu0 %v200
  %v405 = vpop.f32.mrb[0].mxu0
  %v406 = vadd.f32 0.0, %v405
  %v407 = vpop.f32.mrb[0].mxu0
  %v408 = vadd.f32 0.0, %v407
  %v409 = vpop.f32.mrb[0].mxu0
  %v410 = vadd.f32 0.0, %v409
  %v411 = vpop.f32.mrb[0].mxu0
  %v412 = vadd.f32 0.0, %v411
  %413 = vmatprep.mubr.bf16.mxu0 0
  %414 = vmatmul.mubr.bf16.gmra.mrb[0].mxu0 %v201
  %v415 = vpop.f32.mrb[0].mxu0
  %v416 = vadd.f32 0.0, %v415
  %v417 = vpop.f32.mrb[0].mxu0
  %v418 = vadd.f32 0.0, %v417
  %v419 = vpop.f32.mrb[0].mxu0
  %v420 = vadd.f32 0.0, %v419
  %v421 = vpop.f32.mrb[0].mxu0
  %v422 = vadd.f32 0.0, %v421
  %423 = vmatprep.mubr.bf16.mxu0 0
  %424 = vmatmul.mubr.bf16.gmra.mrb[0].mxu0 %v202
  %v425 = vpop.f32.mrb[0].mxu0
  %v426 = vadd.f32 0.0, %v425
  %v427 = vpop.f32.mrb[0].mxu0
  %v428 = vadd.f32 0.0, %v427
  %v429 = vpop.f32.mrb[0].mxu0
  %v430 = vadd.f32 0.0, %v429
  %v431 = vpop.f32.mrb[0].mxu0
  %v432 = vadd.f32 0.0, %v431
  %433 = vmatprep.mubr.bf16.mxu0 0
  %434 = vmatmul.mubr.bf16.gmra.mrb[0].mxu0 %v203
  %v435 = vpop.f32.mrb[0].mxu0
  %v436 = vadd.f32 0.0, %v435
  %v437 = vpop.f32.mrb[0].mxu0
  %v438 = vadd.f32 0.0, %v437
  %v439 = vpop.f32.mrb[0].mxu0
  %v440 = vadd.f32 0.0, %v439
  %v441 = vpop.f32.mrb[0].mxu0
  %v442 = vadd.f32 0.0, %v441
  %443 = vmatprep.mubr.bf16.mxu0 0
  %444 = vmatmul.mubr.bf16.gmra.mrb[0].mxu0 %v204
  %v445 = vpop.f32.mrb[0].mxu0
  %v446 = vadd.f32 0.0, %v445
  %v447 = vpop.f32.mrb[0].mxu0
  %v448 = vadd.f32 0.0, %v447
  %v449 = vpop.f32.mrb[0].mxu0
  %v450 = vadd.f32 0.0, %v449
  %v451 = vpop.f32.mrb[0].mxu0
  %v452 = vadd.f32 0.0, %v451
  %453 = vdwg.mxu0
  %454 = vmatprep.subr.bf16.mxu0 0
  %455 = vmatpush1.bf16.msra.mxu0 %v295
  %456 = vmatprep.subr.bf16.mxu0 0
  %457 = vmatpush1.bf16.msra.mxu0 %v298
  %458 = vmatprep.subr.bf16.mxu0 0
  %459 = vmatpush1.bf16.msra.mxu0 %v301
  %460 = vmatprep.subr.bf16.mxu0 0
  %461 = vmatpush1.bf16.msra.mxu0 %v304
  %462 = vmatprep.subr.bf16.mxu0 0
  %463 = vmatpush1.bf16.msra.mxu0 %v307
  %464 = vmatprep.subr.bf16.mxu0 0
  %465 = vmatpush1.bf16.msra.mxu0 %v310
  %466 = vmatprep.subr.bf16.mxu0 0
  %467 = vmatpush1.bf16.msra.mxu0 %v313
  %468 = vmatprep.subr.bf16.mxu0 0
  %469 = vmatpush1.bf16.msra.mxu0 %v316
  %470 = vmatprep.subr.bf16.mxu0 0
  %471 = vmatpush1.bf16.msra.mxu0 0
  %472 = vmatprep.subr.bf16.mxu0 0
  %473 = vmatpush1.bf16.msra.mxu0 0
  %474 = vmatprep.subr.bf16.mxu0 0
  %475 = vmatpush1.bf16.msra.mxu0 0
  %476 = vmatprep.subr.bf16.mxu0 0
  %477 = vmatpush1.bf16.msra.mxu0 0
  %478 = vmatprep.subr.bf16.mxu0 0
  %479 = vmatpush1.bf16.msra.mxu0 0
  %480 = vmatprep.subr.bf16.mxu0 0
  %481 = vmatpush1.bf16.msra.mxu0 0
  %482 = vmatprep.subr.bf16.mxu0 0
  %483 = vmatpush1.bf16.msra.mxu0 0
  %484 = vmatprep.subr.bf16.mxu0 0
  %485 = vmatpush1.bf16.msra.mxu0 0
  %486 = vmatprep.mubr.bf16.mxu0 0
  %487 = vmatmul.mubr.bf16.gmra.mrb[0].mxu0 %v197
  %v488 = vpop.f32.mrb[0].mxu0
  %v489 = vadd.f32 0.0, %v488
  %v490 = vpop.f32.mrb[0].mxu0
  %v491 = vpop.f32.mrb[0].mxu0
  %v492 = vadd.f32 0.0, %v491
  %v493 = vpop.f32.mrb[0].mxu0
  %494 = vmatprep.mubr.bf16.mxu0 0
  %495 = vmatmul.mubr.bf16.gmra.mrb[0].mxu0 %v198
  %v496 = vpop.f32.mrb[0].mxu0
  %v497 = vadd.f32 0.0, %v496
  %v498 = vpop.f32.mrb[0].mxu0
  %v499 = vpop.f32.mrb[0].mxu0
  %v500 = vadd.f32 0.0, %v499
  %v501 = vpop.f32.mrb[0].mxu0
  %502 = vmatprep.mubr.bf16.mxu0 0
  %503 = vmatmul.mubr.bf16.gmra.mrb[0].mxu0 %v199
  %v504 = vpop.f32.mrb[0].mxu0
  %v505 = vadd.f32 0.0, %v504
  %v506 = vpop.f32.mrb[0].mxu0
  %v507 = vpop.f32.mrb[0].mxu0
  %v508 = vadd.f32 0.0, %v507
  %v509 = vpop.f32.mrb[0].mxu0
  %510 = vmatprep.mubr.bf16.mxu0 0
  %511 = vmatmul.mubr.bf16.gmra.mrb[0].mxu0 %v200
  %v512 = vpop.f32.mrb[0].mxu0
  %v513 = vadd.f32 0.0, %v512
  %v514 = vpop.f32.mrb[0].mxu0
  %v515 = vpop.f32.mrb[0].mxu0
  %v516 = vadd.f32 0.0, %v515
  %v517 = vpop.f32.mrb[0].mxu0
  %518 = vmatprep.mubr.bf16.mxu0 0
  %519 = vmatmul.mubr.bf16.gmra.mrb[0].mxu0 %v201
  %v520 = vpop.f32.mrb[0].mxu0
  %v521 = vadd.f32 0.0, %v520
  %v522 = vpop.f32.mrb[0].mxu0
  %v523 = vpop.f32.mrb[0].mxu0
  %v524 = vadd.f32 0.0, %v523
  %v525 = vpop.f32.mrb[0].mxu0
  %526 = vmatprep.mubr.bf16.mxu0 0
  %527 = vmatmul.mubr.bf16.gmra.mrb[0].mxu0 %v202
  %v528 = vpop.f32.mrb[0].mxu0
  %v529 = vadd.f32 0.0, %v528
  %v530 = vpop.f32.mrb[0].mxu0
  %v531 = vpop.f32.mrb[0].mxu0
  %v532 = vadd.f32 0.0, %v531
  %v533 = vpop.f32.mrb[0].mxu0
  %534 = vmatprep.mubr.bf16.mxu0 0
  %535 = vmatmul.mubr.bf16.gmra.mrb[0].mxu0 %v203
  %v536 = vpop.f32.mrb[0].mxu0
  %v537 = vadd.f32 0.0, %v536
  %v538 = vpop.f32.mrb[0].mxu0
  %v539 = vpop.f32.mrb[0].mxu0
  %v540 = vadd.f32 0.0, %v539
  %v541 = vpop.f32.mrb[0].mxu0
  %542 = vmatprep.mubr.bf16.mxu0 0
  %543 = vmatmul.mubr.bf16.gmra.mrb[0].mxu0 %v204
  %v544 = vpop.f32.mrb[0].mxu0
  %v545 = vadd.f32 0.0, %v544
  %v546 = vpop.f32.mrb[0].mxu0
  %v547 = vpop.f32.mrb[0].mxu0
  %v548 = vadd.f32 0.0, %v547
  %v549 = vpop.f32.mrb[0].mxu0
  %550 = vdwg.mxu0
  %v551 = vadd.f32 %v69, %v376
  %v552 = vadd.f32 %v70, %v378
  %v553 = vadd.f32 %v71, %v489
  %v554 = vadd.f32 %v72, %v380
  %v555 = vadd.f32 %v73, %v382
  %v556 = vadd.f32 %v74, %v492
  %v557 = vadd.f32 %v75, %v386
  %v558 = vadd.f32 %v76, %v388
  %v559 = vadd.f32 %v77, %v497
  %v560 = vadd.f32 %v78, %v390
  %v561 = vadd.f32 %v79, %v392
  %v562 = vadd.f32 %v80, %v500
  %v563 = vadd.f32 %v81, %v396
  %v564 = vadd.f32 %v82, %v398
  %v565 = vadd.f32 %v83, %v505
  %v566 = vadd.f32 %v84, %v400
  %v567 = vadd.f32 %v85, %v402
  %v568 = vadd.f32 %v86, %v508
  %v569 = vadd.f32 %v87, %v406
  %v570 = vadd.f32 %v88, %v408
  %v571 = vadd.f32 %v89, %v513
  %v572 = vadd.f32 %v90, %v410
  %v573 = vadd.f32 %v91, %v412
  %v574 = vadd.f32 %v92, %v516
  %v575 = vadd.f32 %v93, %v416
  %v576 = vadd.f32 %v94, %v418
  %v577 = vadd.f32 %v95, %v521
  %v578 = vadd.f32 %v96, %v420
  %v579 = vadd.f32 %v97, %v422
  %v580 = vadd.f32 %v98, %v524
  %v581 = vadd.f32 %v99, %v426
  %v582 = vadd.f32 %v100, %v428
  %v583 = vadd.f32 %v101, %v529
  %v584 = vadd.f32 %v102, %v430
  %v585 = vadd.f32 %v103, %v432
  %v586 = vadd.f32 %v104, %v532
  %v587 = vadd.f32 %v105, %v436
  %v588 = vadd.f32 %v106, %v438
  %v589 = vadd.f32 %v107, %v537
  %v590 = vadd.f32 %v108, %v440
  %v591 = vadd.f32 %v109, %v442
  %v592 = vadd.f32 %v110, %v540
  %v593 = vadd.f32 %v111, %v446
  %v594 = vadd.f32 %v112, %v448
  %v595 = vadd.f32 %v113, %v545
  %v596 = vadd.f32 %v114, %v450
  %v597 = vadd.f32 %v115, %v452
  %v598 = vadd.f32 %v116, %v548
  %599 = vst [vmem:[%s3] sm:$0xff] %v551
  %600 = vst [vmem:[%s3 + $0x8] sm:$0xff] %v552
  %601 = vst [vmem:[%s3 + $0x10] sm:$0xff] %v553
  %602 = vst [vmem:[%s3 + $0x18] sm:$0xff] %v554
  %603 = vst [vmem:[%s3 + $0x20] sm:$0xff] %v555
  %604 = vst [vmem:[%s3 + $0x28] sm:$0xff] %v556
  %605 = vst [vmem:[%s3 + $0x30] sm:$0xff] %v557
  %606 = vst [vmem:[%s3 + $0x38] sm:$0xff] %v558
  %607 = vst [vmem:[%s3 + $0x40] sm:$0xff] %v559
  %608 = vst [vmem:[%s3 + $0x48] sm:$0xff] %v560
  %609 = vst [vmem:[%s3 + $0x50] sm:$0xff] %v561
  %610 = vst [vmem:[%s3 + $0x58] sm:$0xff] %v562
  %611 = vst [vmem:[%s3 + $0x60] sm:$0xff] %v563
  %612 = vst [vmem:[%s3 + $0x68] sm:$0xff] %v564
  %613 = vst [vmem:[%s3 + $0x70] sm:$0xff] %v565
  %614 = vst [vmem:[%s3 + $0x78] sm:$0xff] %v566
  %615 = vst [vmem:[%s3 + $0x80] sm:$0xff] %v567
  %616 = vst [vmem:[%s3 + $0x88] sm:$0xff] %v568
  %617 = vst [vmem:[%s3 + $0x90] sm:$0xff] %v569
  %618 = vst [vmem:[%s3 + $0x98] sm:$0xff] %v570
  %619 = vst [vmem:[%s3 + $0xa0] sm:$0xff] %v571
  %620 = vst [vmem:[%s3 + $0xa8] sm:$0xff] %v572
  %621 = vst [vmem:[%s3 + $0xb0] sm:$0xff] %v573
  %622 = vst [vmem:[%s3 + $0xb8] sm:$0xff] %v574
  %623 = vst [vmem:[%s3 + $0xc0] sm:$0xff] %v575
  %624 = vst [vmem:[%s3 + $0xc8] sm:$0xff] %v576
  %625 = vst [vmem:[%s3 + $0xd0] sm:$0xff] %v577
  %626 = vst [vmem:[%s3 + $0xd8] sm:$0xff] %v578
  %627 = vst [vmem:[%s3 + $0xe0] sm:$0xff] %v579
  %628 = vst [vmem:[%s3 + $0xe8] sm:$0xff] %v580
  %629 = vst [vmem:[%s3 + $0xf0] sm:$0xff] %v581
  %630 = vst [vmem:[%s3 + $0xf8] sm:$0xff] %v582
  %631 = vst [vmem:[%s3 + $0x100] sm:$0xff] %v583
  %632 = vst [vmem:[%s3 + $0x108] sm:$0xff] %v584
  %633 = vst [vmem:[%s3 + $0x110] sm:$0xff] %v585
  %634 = vst [vmem:[%s3 + $0x118] sm:$0xff] %v586
  %635 = vst [vmem:[%s3 + $0x120] sm:$0xff] %v587
  %636 = vst [vmem:[%s3 + $0x128] sm:$0xff] %v588
  %637 = vst [vmem:[%s3 + $0x130] sm:$0xff] %v589
  %638 = vst [vmem:[%s3 + $0x138] sm:$0xff] %v590
  %639 = vst [vmem:[%s3 + $0x140] sm:$0xff] %v591
  %640 = vst [vmem:[%s3 + $0x148] sm:$0xff] %v592
  %641 = vst [vmem:[%s3 + $0x150] sm:$0xff] %v593
  %642 = vst [vmem:[%s3 + $0x158] sm:$0xff] %v594
  %643 = vst [vmem:[%s3 + $0x160] sm:$0xff] %v595
  %644 = vst [vmem:[%s3 + $0x168] sm:$0xff] %v596
  %645 = vst [vmem:[%s3 + $0x170] sm:$0xff] %v597
  %646 = vst [vmem:[%s3 + $0x178] sm:$0xff] %v598
  // Predicated region
  $region18: #{pagcn_forward.10} parent=0 // pred_check
    %p647 = pneg %p17
  $region19: #{pagcn_forward.10} parent=0 // pred_check_branch
    %649 = sbr.rel (%p647) target = $region21
  $region20: #{pagcn_forward.10} parent=0 // pred_region
    %v650 = vld [vmem:[%s3] sm:$0xff]
    %v651 = vld [vmem:[%s3 + $0x8] sm:$0xff]
    %v652 = vld [vmem:[%s3 + $0x10] sm:$0xff]
    %v653 = vld [vmem:[%s3 + $0x18] sm:$0xff]
    %v654 = vld [vmem:[%s3 + $0x20] sm:$0xff]
    %v655 = vld [vmem:[%s3 + $0x28] sm:$0xff]
    %v656 = vld [vmem:[%s3 + $0x30] sm:$0xff]
    %v657 = vld [vmem:[%s3 + $0x38] sm:$0xff]
    %v658 = vld [vmem:[%s3 + $0x40] sm:$0xff]
    %v659 = vld [vmem:[%s3 + $0x48] sm:$0xff]
    %v660 = vld [vmem:[%s3 + $0x50] sm:$0xff]
    %v661 = vld [vmem:[%s3 + $0x58] sm:$0xff]
    %v662 = vld [vmem:[%s3 + $0x60] sm:$0xff]
    %v663 = vld [vmem:[%s3 + $0x68] sm:$0xff]
    %v664 = vld [vmem:[%s3 + $0x70] sm:$0xff]
    %v665 = vld [vmem:[%s3 + $0x78] sm:$0xff]
    %v666 = vld [vmem:[%s3 + $0x80] sm:$0xff]
    %v667 = vld [vmem:[%s3 + $0x88] sm:$0xff]
    %v668 = vld [vmem:[%s3 + $0x90] sm:$0xff]
    %v669 = vld [vmem:[%s3 + $0x98] sm:$0xff]
    %v670 = vld [vmem:[%s3 + $0xa0] sm:$0xff]
    %v671 = vld [vmem:[%s3 + $0xa8] sm:$0xff]
    %v672 = vld [vmem:[%s3 + $0xb0] sm:$0xff]
    %v673 = vld [vmem:[%s3 + $0xb8] sm:$0xff]
    %v674 = vld [vmem:[%s3 + $0xc0] sm:$0xff]
    %v675 = vld [vmem:[%s3 + $0xc8] sm:$0xff]
    %v676 = vld [vmem:[%s3 + $0xd0] sm:$0xff]
    %v677 = vld [vmem:[%s3 + $0xd8] sm:$0xff]
    %v678 = vld [vmem:[%s3 + $0xe0] sm:$0xff]
    %v679 = vld [vmem:[%s3 + $0xe8] sm:$0xff]
    %v680 = vld [vmem:[%s3 + $0xf0] sm:$0xff]
    %v681 = vld [vmem:[%s3 + $0xf8] sm:$0xff]
    %v682 = vld [vmem:[%s3 + $0x100] sm:$0xff]
    %v683 = vld [vmem:[%s3 + $0x108] sm:$0xff]
    %v684 = vld [vmem:[%s3 + $0x110] sm:$0xff]
    %v685 = vld [vmem:[%s3 + $0x118] sm:$0xff]
    %v686 = vld [vmem:[%s3 + $0x120] sm:$0xff]
    %v687 = vld [vmem:[%s3 + $0x128] sm:$0xff]
    %v688 = vld [vmem:[%s3 + $0x130] sm:$0xff]
    %v689 = vld [vmem:[%s3 + $0x138] sm:$0xff]
    %v690 = vld [vmem:[%s3 + $0x140] sm:$0xff]
    %v691 = vld [vmem:[%s3 + $0x148] sm:$0xff]
    %v692 = vld [vmem:[%s3 + $0x150] sm:$0xff]
    %v693 = vld [vmem:[%s3 + $0x158] sm:$0xff]
    %v694 = vld [vmem:[%s3 + $0x160] sm:$0xff]
    %v695 = vld [vmem:[%s3 + $0x168] sm:$0xff]
    %v696 = vld [vmem:[%s3 + $0x170] sm:$0xff]
    %v697 = vld [vmem:[%s3 + $0x178] sm:$0xff]
    %v698 = vld [vmem:[%s2] sm:$0xff]
    %v699 = vld [vmem:[%s2 + $0x8] sm:$0xff]
    %v700 = vld [vmem:[%s2 + $0x10] sm:$0xff]
    %v701 = vld [vmem:[%s2 + $0x18] sm:$0xff]
    %v702 = vld [vmem:[%s2 + $0x20] sm:$0xff]
    %v703 = vld [vmem:[%s2 + $0x28] sm:$0xff]
    %v704 = vld [vmem:[%s2 + $0x30] sm:$0xff]
    %v705 = vld [vmem:[%s2 + $0x38] sm:$0xff]
    %v706 = vld [vmem:[%s2 + $0x40] sm:$0xff]
    %v707 = vld [vmem:[%s2 + $0x48] sm:$0xff]
    %v708 = vld [vmem:[%s2 + $0x50] sm:$0xff]
    %v709 = vld [vmem:[%s2 + $0x58] sm:$0xff]
    %v710 = vld [vmem:[%s2 + $0x60] sm:$0xff]
    %v711 = vld [vmem:[%s2 + $0x68] sm:$0xff]
    %v712 = vld [vmem:[%s2 + $0x70] sm:$0xff]
    %v713 = vld [vmem:[%s2 + $0x78] sm:$0xff]
    %715 = vset.pattern.permute.xlu0 0
    %716 = vperm.xlu0 %715, %v698
    %v717 = vpop.permute.xlu0 %716
    %720 = vset.pattern.permute.xlu0 0
    %721 = vperm.xlu0 %720, %v699
    %v722 = vpop.permute.xlu0 %721
    %725 = vset.pattern.permute.xlu0 0
    %726 = vperm.xlu0 %725, %v700
    %v727 = vpop.permute.xlu0 %726
    %730 = vset.pattern.permute.xlu0 0
    %731 = vperm.xlu0 %730, %v701
    %v732 = vpop.permute.xlu0 %731
    %735 = vset.pattern.permute.xlu0 0
    %736 = vperm.xlu0 %735, %v702
    %v737 = vpop.permute.xlu0 %736
    %740 = vset.pattern.permute.xlu0 0
    %741 = vperm.xlu0 %740, %v703
    %v742 = vpop.permute.xlu0 %741
    %745 = vset.pattern.permute.xlu0 0
    %746 = vperm.xlu0 %745, %v704
    %v747 = vpop.permute.xlu0 %746
    %750 = vset.pattern.permute.xlu0 0
    %751 = vperm.xlu0 %750, %v705
    %v752 = vpop.permute.xlu0 %751
    %755 = vset.pattern.permute.xlu0 0
    %756 = vperm.xlu0 %755, %v706
    %v757 = vpop.permute.xlu0 %756
    %760 = vset.pattern.permute.xlu0 0
    %761 = vperm.xlu0 %760, %v707
    %v762 = vpop.permute.xlu0 %761
    %765 = vset.pattern.permute.xlu0 0
    %766 = vperm.xlu0 %765, %v708
    %v767 = vpop.permute.xlu0 %766
    %770 = vset.pattern.permute.xlu0 0
    %771 = vperm.xlu0 %770, %v709
    %v772 = vpop.permute.xlu0 %771
    %775 = vset.pattern.permute.xlu0 0
    %776 = vperm.xlu0 %775, %v710
    %v777 = vpop.permute.xlu0 %776
    %780 = vset.pattern.permute.xlu0 0
    %781 = vperm.xlu0 %780, %v711
    %v782 = vpop.permute.xlu0 %781
    %785 = vset.pattern.permute.xlu0 0
    %786 = vperm.xlu0 %785, %v712
    %v787 = vpop.permute.xlu0 %786
    %790 = vset.pattern.permute.xlu0 0
    %791 = vperm.xlu0 %790, %v713
    %v792 = vpop.permute.xlu0 %791
    %v794 = vmul.f32 %v650, %v717
    %v795 = vmul.f32 %v653, %v722
    %v796 = vmul.f32 %v656, %v727
    %v797 = vmul.f32 %v659, %v732
    %v798 = vmul.f32 %v662, %v737
    %v799 = vmul.f32 %v665, %v742
    %v800 = vmul.f32 %v668, %v747
    %v801 = vmul.f32 %v671, %v752
    %v802 = vmul.f32 %v674, %v757
    %v803 = vmul.f32 %v677, %v762
    %v804 = vmul.f32 %v680, %v767
    %v805 = vmul.f32 %v683, %v772
    %v806 = vmul.f32 %v686, %v777
    %v807 = vmul.f32 %v689, %v782
    %v808 = vmul.f32 %v692, %v787
    %v809 = vmul.f32 %v695, %v792
    %810 = vst [vmem:[%s3] sm:$0xff] %v794
    %811 = vst [vmem:[%s3 + $0x18] sm:$0xff] %v795
    %812 = vst [vmem:[%s3 + $0x30] sm:$0xff] %v796
    %813 = vst [vmem:[%s3 + $0x48] sm:$0xff] %v797
    %814 = vst [vmem:[%s3 + $0x60] sm:$0xff] %v798
    %815 = vst [vmem:[%s3 + $0x78] sm:$0xff] %v799
    %816 = vst [vmem:[%s3 + $0x90] sm:$0xff] %v800
    %817 = vst [vmem:[%s3 + $0xa8] sm:$0xff] %v801
    %818 = vst [vmem:[%s3 + $0xc0] sm:$0xff] %v802
    %819 = vst [vmem:[%s3 + $0xd8] sm:$0xff] %v803
    %820 = vst [vmem:[%s3 + $0xf0] sm:$0xff] %v804
    %821 = vst [vmem:[%s3 + $0x108] sm:$0xff] %v805
    %822 = vst [vmem:[%s3 + $0x120] sm:$0xff] %v806
    %823 = vst [vmem:[%s3 + $0x138] sm:$0xff] %v807
    %824 = vst [vmem:[%s3 + $0x150] sm:$0xff] %v808
    %825 = vst [vmem:[%s3 + $0x168] sm:$0xff] %v809
    %s826 = scalar_lea.vmem %s2, 128
    %v827 = vld [vmem:[%s826] sm:$0xff]
    %v828 = vld [vmem:[%s826 + $0x8] sm:$0xff]
    %v829 = vld [vmem:[%s826 + $0x10] sm:$0xff]
    %v830 = vld [vmem:[%s826 + $0x18] sm:$0xff]
    %v831 = vld [vmem:[%s826 + $0x20] sm:$0xff]
    %v832 = vld [vmem:[%s826 + $0x28] sm:$0xff]
    %v833 = vld [vmem:[%s826 + $0x30] sm:$0xff]
    %v834 = vld [vmem:[%s826 + $0x38] sm:$0xff]
    %v835 = vld [vmem:[%s826 + $0x40] sm:$0xff]
    %v836 = vld [vmem:[%s826 + $0x48] sm:$0xff]
    %v837 = vld [vmem:[%s826 + $0x50] sm:$0xff]
    %v838 = vld [vmem:[%s826 + $0x58] sm:$0xff]
    %v839 = vld [vmem:[%s826 + $0x60] sm:$0xff]
    %v840 = vld [vmem:[%s826 + $0x68] sm:$0xff]
    %v841 = vld [vmem:[%s826 + $0x70] sm:$0xff]
    %v842 = vld [vmem:[%s826 + $0x78] sm:$0xff]
    %844 = vset.pattern.permute.xlu0 0
    %845 = vperm.xlu0 %844, %v827
    %v846 = vpop.permute.xlu0 %845
    %849 = vset.pattern.permute.xlu0 0
    %850 = vperm.xlu0 %849, %v828
    %v851 = vpop.permute.xlu0 %850
    %854 = vset.pattern.permute.xlu0 0
    %855 = vperm.xlu0 %854, %v829
    %v856 = vpop.permute.xlu0 %855
    %859 = vset.pattern.permute.xlu0 0
    %860 = vperm.xlu0 %859, %v830
    %v861 = vpop.permute.xlu0 %860
    %864 = vset.pattern.permute.xlu0 0
    %865 = vperm.xlu0 %864, %v831
    %v866 = vpop.permute.xlu0 %865
    %869 = vset.pattern.permute.xlu0 0
    %870 = vperm.xlu0 %869, %v832
    %v871 = vpop.permute.xlu0 %870
    %874 = vset.pattern.permute.xlu0 0
    %875 = vperm.xlu0 %874, %v833
    %v876 = vpop.permute.xlu0 %875
    %879 = vset.pattern.permute.xlu0 0
    %880 = vperm.xlu0 %879, %v834
    %v881 = vpop.permute.xlu0 %880
    %884 = vset.pattern.permute.xlu0 0
    %885 = vperm.xlu0 %884, %v835
    %v886 = vpop.permute.xlu0 %885
    %889 = vset.pattern.permute.xlu0 0
    %890 = vperm.xlu0 %889, %v836
    %v891 = vpop.permute.xlu0 %890
    %894 = vset.pattern.permute.xlu0 0
    %895 = vperm.xlu0 %894, %v837
    %v896 = vpop.permute.xlu0 %895
    %899 = vset.pattern.permute.xlu0 0
    %900 = vperm.xlu0 %899, %v838
    %v901 = vpop.permute.xlu0 %900
    %904 = vset.pattern.permute.xlu0 0
    %905 = vperm.xlu0 %904, %v839
    %v906 = vpop.permute.xlu0 %905
    %909 = vset.pattern.permute.xlu0 0
    %910 = vperm.xlu0 %909, %v840
    %v911 = vpop.permute.xlu0 %910
    %914 = vset.pattern.permute.xlu0 0
    %915 = vperm.xlu0 %914, %v841
    %v916 = vpop.permute.xlu0 %915
    %919 = vset.pattern.permute.xlu0 0
    %920 = vperm.xlu0 %919, %v842
    %v921 = vpop.permute.xlu0 %920
    %v923 = vmul.f32 %v651, %v846
    %v924 = vmul.f32 %v654, %v851
    %v925 = vmul.f32 %v657, %v856
    %v926 = vmul.f32 %v660, %v861
    %v927 = vmul.f32 %v663, %v866
    %v928 = vmul.f32 %v666, %v871
    %v929 = vmul.f32 %v669, %v876
    %v930 = vmul.f32 %v672, %v881
    %v931 = vmul.f32 %v675, %v886
    %v932 = vmul.f32 %v678, %v891
    %v933 = vmul.f32 %v681, %v896
    %v934 = vmul.f32 %v684, %v901
    %v935 = vmul.f32 %v687, %v906
    %v936 = vmul.f32 %v690, %v911
    %v937 = vmul.f32 %v693, %v916
    %v938 = vmul.f32 %v696, %v921
    %939 = vst [vmem:[%s3 + $0x8] sm:$0xff] %v923
    %940 = vst [vmem:[%s3 + $0x20] sm:$0xff] %v924
    %941 = vst [vmem:[%s3 + $0x38] sm:$0xff] %v925
    %942 = vst [vmem:[%s3 + $0x50] sm:$0xff] %v926
    %943 = vst [vmem:[%s3 + $0x68] sm:$0xff] %v927
    %944 = vst [vmem:[%s3 + $0x80] sm:$0xff] %v928
    %945 = vst [vmem:[%s3 + $0x98] sm:$0xff] %v929
    %946 = vst [vmem:[%s3 + $0xb0] sm:$0xff] %v930
    %947 = vst [vmem:[%s3 + $0xc8] sm:$0xff] %v931
    %948 = vst [vmem:[%s3 + $0xe0] sm:$0xff] %v932
    %949 = vst [vmem:[%s3 + $0xf8] sm:$0xff] %v933
    %950 = vst [vmem:[%s3 + $0x110] sm:$0xff] %v934
    %951 = vst [vmem:[%s3 + $0x128] sm:$0xff] %v935
    %952 = vst [vmem:[%s3 + $0x140] sm:$0xff] %v936
    %953 = vst [vmem:[%s3 + $0x158] sm:$0xff] %v937
    %954 = vst [vmem:[%s3 + $0x170] sm:$0xff] %v938
    %v955 = vadd.f32 %v794, %v923
    %v956 = vadd.f32 %v795, %v924
    %v957 = vadd.f32 %v796, %v925
    %v958 = vadd.f32 %v797, %v926
    %v959 = vadd.f32 %v798, %v927
    %v960 = vadd.f32 %v799, %v928
    %v961 = vadd.f32 %v800, %v929
    %v962 = vadd.f32 %v801, %v930
    %v963 = vadd.f32 %v802, %v931
    %v964 = vadd.f32 %v803, %v932
    %v965 = vadd.f32 %v804, %v933
    %v966 = vadd.f32 %v805, %v934
    %v967 = vadd.f32 %v806, %v935
    %v968 = vadd.f32 %v807, %v936
    %v969 = vadd.f32 %v808, %v937
    %v970 = vadd.f32 %v809, %v938
    %s971 = scalar_lea.vmem %s2, 256
    %v972 = vld [vmem:[%s971] sm:$0xff]
    %v973 = vld [vmem:[%s971 + $0x8] sm:$0xff]
    %v974 = vld [vmem:[%s971 + $0x10] sm:$0xff]
    %v975 = vld [vmem:[%s971 + $0x18] sm:$0xff]
    %v976 = vld [vmem:[%s971 + $0x20] sm:$0xff]
    %v977 = vld [vmem:[%s971 + $0x28] sm:$0xff]
    %v978 = vld [vmem:[%s971 + $0x30] sm:$0xff]
    %v979 = vld [vmem:[%s971 + $0x38] sm:$0xff]
    %v980 = vld [vmem:[%s971 + $0x40] sm:$0xff]
    %v981 = vld [vmem:[%s971 + $0x48] sm:$0xff]
    %v982 = vld [vmem:[%s971 + $0x50] sm:$0xff]
    %v983 = vld [vmem:[%s971 + $0x58] sm:$0xff]
    %v984 = vld [vmem:[%s971 + $0x60] sm:$0xff]
    %v985 = vld [vmem:[%s971 + $0x68] sm:$0xff]
    %v986 = vld [vmem:[%s971 + $0x70] sm:$0xff]
    %v987 = vld [vmem:[%s971 + $0x78] sm:$0xff]
    %989 = vset.pattern.permute.xlu0 0
    %990 = vperm.xlu0 %989, %v972
    %v991 = vpop.permute.xlu0 %990
    %994 = vset.pattern.permute.xlu0 0
    %995 = vperm.xlu0 %994, %v973
    %v996 = vpop.permute.xlu0 %995
    %999 = vset.pattern.permute.xlu0 0
    %1000 = vperm.xlu0 %999, %v974
    %v1001 = vpop.permute.xlu0 %1000
    %1004 = vset.pattern.permute.xlu0 0
    %1005 = vperm.xlu0 %1004, %v975
    %v1006 = vpop.permute.xlu0 %1005
    %1009 = vset.pattern.permute.xlu0 0
    %1010 = vperm.xlu0 %1009, %v976
    %v1011 = vpop.permute.xlu0 %1010
    %1014 = vset.pattern.permute.xlu0 0
    %1015 = vperm.xlu0 %1014, %v977
    %v1016 = vpop.permute.xlu0 %1015
    %1019 = vset.pattern.permute.xlu0 0
    %1020 = vperm.xlu0 %1019, %v978
    %v1021 = vpop.permute.xlu0 %1020
    %1024 = vset.pattern.permute.xlu0 0
    %1025 = vperm.xlu0 %1024, %v979
    %v1026 = vpop.permute.xlu0 %1025
    %1029 = vset.pattern.permute.xlu0 0
    %1030 = vperm.xlu0 %1029, %v980
    %v1031 = vpop.permute.xlu0 %1030
    %1034 = vset.pattern.permute.xlu0 0
    %1035 = vperm.xlu0 %1034, %v981
    %v1036 = vpop.permute.xlu0 %1035
    %1039 = vset.pattern.permute.xlu0 0
    %1040 = vperm.xlu0 %1039, %v982
    %v1041 = vpop.permute.xlu0 %1040
    %1044 = vset.pattern.permute.xlu0 0
    %1045 = vperm.xlu0 %1044, %v983
    %v1046 = vpop.permute.xlu0 %1045
    %1049 = vset.pattern.permute.xlu0 0
    %1050 = vperm.xlu0 %1049, %v984
    %v1051 = vpop.permute.xlu0 %1050
    %1054 = vset.pattern.permute.xlu0 0
    %1055 = vperm.xlu0 %1054, %v985
    %v1056 = vpop.permute.xlu0 %1055
    %1059 = vset.pattern.permute.xlu0 0
    %1060 = vperm.xlu0 %1059, %v986
    %v1061 = vpop.permute.xlu0 %1060
    %1064 = vset.pattern.permute.xlu0 0
    %1065 = vperm.xlu0 %1064, %v987
    %v1066 = vpop.permute.xlu0 %1065
    %v1068 = vmul.f32 %v652, %v991
    %v1069 = vmul.f32 %v655, %v996
    %v1070 = vmul.f32 %v658, %v1001
    %v1071 = vmul.f32 %v661, %v1006
    %v1072 = vmul.f32 %v664, %v1011
    %v1073 = vmul.f32 %v667, %v1016
    %v1074 = vmul.f32 %v670, %v1021
    %v1075 = vmul.f32 %v673, %v1026
    %v1076 = vmul.f32 %v676, %v1031
    %v1077 = vmul.f32 %v679, %v1036
    %v1078 = vmul.f32 %v682, %v1041
    %v1079 = vmul.f32 %v685, %v1046
    %v1080 = vmul.f32 %v688, %v1051
    %v1081 = vmul.f32 %v691, %v1056
    %v1082 = vmul.f32 %v694, %v1061
    %v1083 = vmul.f32 %v697, %v1066
    %1084 = vst [vmem:[%s3 + $0x10] sm:$0xff] %v1068
    %1085 = vst [vmem:[%s3 + $0x28] sm:$0xff] %v1069
    %1086 = vst [vmem:[%s3 + $0x40] sm:$0xff] %v1070
    %1087 = vst [vmem:[%s3 + $0x58] sm:$0xff] %v1071
    %1088 = vst [vmem:[%s3 + $0x70] sm:$0xff] %v1072
    %1089 = vst [vmem:[%s3 + $0x88] sm:$0xff] %v1073
    %1090 = vst [vmem:[%s3 + $0xa0] sm:$0xff] %v1074
    %1091 = vst [vmem:[%s3 + $0xb8] sm:$0xff] %v1075
    %1092 = vst [vmem:[%s3 + $0xd0] sm:$0xff] %v1076
    %1093 = vst [vmem:[%s3 + $0xe8] sm:$0xff] %v1077
    %1094 = vst [vmem:[%s3 + $0x100] sm:$0xff] %v1078
    %1095 = vst [vmem:[%s3 + $0x118] sm:$0xff] %v1079
    %1096 = vst [vmem:[%s3 + $0x130] sm:$0xff] %v1080
    %1097 = vst [vmem:[%s3 + $0x148] sm:$0xff] %v1081
    %1098 = vst [vmem:[%s3 + $0x160] sm:$0xff] %v1082
    %1099 = vst [vmem:[%s3 + $0x178] sm:$0xff] %v1083
    %v1100 = vadd.f32 %v955, %v1068
    %v1101 = vadd.f32 %v956, %v1069
    %v1102 = vadd.f32 %v957, %v1070
    %v1103 = vadd.f32 %v958, %v1071
    %v1104 = vadd.f32 %v959, %v1072
    %v1105 = vadd.f32 %v960, %v1073
    %v1106 = vadd.f32 %v961, %v1074
    %v1107 = vadd.f32 %v962, %v1075
    %v1108 = vadd.f32 %v963, %v1076
    %v1109 = vadd.f32 %v964, %v1077
    %v1110 = vadd.f32 %v965, %v1078
    %v1111 = vadd.f32 %v966, %v1079
    %v1112 = vadd.f32 %v967, %v1080
    %v1113 = vadd.f32 %v968, %v1081
    %v1114 = vadd.f32 %v969, %v1082
    %v1115 = vadd.f32 %v970, %v1083
    %1116 = vst [vmem:[%s4] sm:$0xff] %v1100
    %1117 = vst [vmem:[%s4 + $0x8] sm:$0xff] %v1101
    %1118 = vst [vmem:[%s4 + $0x10] sm:$0xff] %v1102
    %1119 = vst [vmem:[%s4 + $0x18] sm:$0xff] %v1103
    %1120 = vst [vmem:[%s4 + $0x20] sm:$0xff] %v1104
    %1121 = vst [vmem:[%s4 + $0x28] sm:$0xff] %v1105
    %1122 = vst [vmem:[%s4 + $0x30] sm:$0xff] %v1106
    %1123 = vst [vmem:[%s4 + $0x38] sm:$0xff] %v1107
    %1124 = vst [vmem:[%s4 + $0x40] sm:$0xff] %v1108
    %1125 = vst [vmem:[%s4 + $0x48] sm:$0xff] %v1109
    %1126 = vst [vmem:[%s4 + $0x50] sm:$0xff] %v1110
    %1127 = vst [vmem:[%s4 + $0x58] sm:$0xff] %v1111
    %1128 = vst [vmem:[%s4 + $0x60] sm:$0xff] %v1112
    %1129 = vst [vmem:[%s4 + $0x68] sm:$0xff] %v1113
    %1130 = vst [vmem:[%s4 + $0x70] sm:$0xff] %v1114
    %1131 = vst [vmem:[%s4 + $0x78] sm:$0xff] %v1115
  $region21: #{pagcn_forward.10} parent=0 // pred_fallthru
    _
  // Predicated region
  $region22: #{pagcn_forward.10} parent=0 // pred_check
    _
  $region23: #{pagcn_forward.10} parent=0 // pred_check_branch
    %1133 = sbr.rel (0) target = $region25
  $region24: #{pagcn_forward.10} parent=0 // pred_region
    _
  $region25: #{pagcn_forward.10} parent=0 // pred_fallthru
    _
  // Predicated region
  $region26: #{pagcn_forward.10} parent=0 // pred_check
    _
  $region27: #{pagcn_forward.10} parent=0 // pred_check_branch
    %1135 = sbr.rel (0) target = $region29
  $region28: #{pagcn_forward.10} parent=0 // pred_region
    _
  $region29: #{pagcn_forward.10} parent=0 // pred_fallthru
    _
  // Predicated region
  $region30: #{pagcn_forward.10} parent=0 // pred_check
    _
  $region31: #{pagcn_forward.10} parent=0 // pred_check_branch
    %1137 = sbr.rel (0) target = $region33
  $region32: #{pagcn_forward.10} parent=0 // pred_region
    _
  $region33: #{pagcn_forward.10} parent=0 // pred_fallthru
    _
  // Predicated region
  $region34: #{pagcn_forward.10} parent=0 // pred_check
    _
  $region35: #{pagcn_forward.10} parent=0 // pred_check_branch
    %1139 = sbr.rel (0) target = $region37
  $region36: #{pagcn_forward.10} parent=0 // pred_region
    _
  $region37: #{pagcn_forward.10} parent=0 // pred_fallthru
    _

// kernel: pagcn_forward.13
$region0: #{pagcn_forward.13}
  #allocation0 [shape = 'u32[]', space=smem, size = 0x4, offset = 0x4, fixed_abs, tag = 'smem constant byte address 0x4 - core index']
  #allocation1 [shape = 'u32[144,128]{1,0:T(1,128)}', space=vmem, size = 0x12000, scoped, tag = 'internal scratch']
  %s0 = inlined_call_operand.vmem [shape: bf16[128,128], index: 0, kind: input, shape index: {}]
  %s1 = inlined_call_operand.vmem [shape: bf16[128,384], index: 1, kind: input, shape index: {}]
  %s2 = inlined_call_operand.vmem [shape: f32[3,128,1], index: 2, kind: input, shape index: {}]
  %s3 = inlined_call_operand.hbm [shape: f32[128,384], index: 3, kind: output, shape index: {0}]
  %s4 = inlined_call_operand.vmem [shape: f32[128,128], index: 4, kind: output, shape index: {1}]
  %5 = xla_tuple %s3, %s4
  %s6 = sld [smem:[#allocation0]]
  $region38: #{pagcn_forward.13} parent=0
    _
  %s8 = ssub.s32 1, %s6
  %s9 = scalar_select 0, %s8, %s6
  $region1: #{pagcn_forward.13} parent=0
    #allocation2 [shape = 'u8[196608]{0}', space=vmem, size = 0x30000, scoped, tag = 'output window, operand 0, single buffered']
    #allocation3 [shape = 's32[1]{0}', space=sflag, size = 0x4, scoped, tag = 'scoped memory for pagcn_forward.13']
    %10 = vsyncpa [#allocation3], 0
    // Predicated region
    $region2: #{pagcn_forward.13} parent=1 // pred_check
      _
    $region3: #{pagcn_forward.13} parent=1 // pred_check_branch
      %12 = sbr.rel (0) target = $region5
    $region4: #{pagcn_forward.13} parent=1 // pred_region
      _
    $region5: #{pagcn_forward.13} parent=1 // pred_fallthru
      _
    // Predicated region
    $region6: #{pagcn_forward.13} parent=1 // pred_check
      _
    $region7: #{pagcn_forward.13} parent=1 // pred_check_branch
      %14 = sbr.rel (0) target = $region9
    $region8: #{pagcn_forward.13} parent=1 // pred_region
      _
    $region9: #{pagcn_forward.13} parent=1 // pred_fallthru
      _
    // Predicated region
    $region10: #{pagcn_forward.13} parent=1 // pred_check
      _
    $region11: #{pagcn_forward.13} parent=1 // pred_check_branch
      %16 = sbr.rel (0) target = $region13
    $region12: #{pagcn_forward.13} parent=1 // pred_region
      _
    $region13: #{pagcn_forward.13} parent=1 // pred_fallthru
      _
    %p18 = scmp.eq.s32.totalorder 0, 0
    // Predicated region
    $region14: #{pagcn_forward.13} parent=1 // pred_check
      %p19 = pneg %p18
    $region15: #{pagcn_forward.13} parent=1 // pred_check_branch
      %21 = sbr.rel (%p19) target = $region17
    $region16: #{pagcn_forward.13} parent=1 // pred_region
      %22 = vst [vmem:[#allocation2] sm:$0xff] 0.0
      %23 = vst [vmem:[#allocation2 + $0x8] sm:$0xff] 0.0
      %24 = vst [vmem:[#allocation2 + $0x10] sm:$0xff] 0.0
      %25 = vst [vmem:[#allocation2 + $0x18] sm:$0xff] 0.0
      %26 = vst [vmem:[#allocation2 + $0x20] sm:$0xff] 0.0
      %27 = vst [vmem:[#allocation2 + $0x28] sm:$0xff] 0.0
      %28 = vst [vmem:[#allocation2 + $0x30] sm:$0xff] 0.0
      %29 = vst [vmem:[#allocation2 + $0x38] sm:$0xff] 0.0
      %30 = vst [vmem:[#allocation2 + $0x40] sm:$0xff] 0.0
      %31 = vst [vmem:[#allocation2 + $0x48] sm:$0xff] 0.0
      %32 = vst [vmem:[#allocation2 + $0x50] sm:$0xff] 0.0
      %33 = vst [vmem:[#allocation2 + $0x58] sm:$0xff] 0.0
      %34 = vst [vmem:[#allocation2 + $0x60] sm:$0xff] 0.0
      %35 = vst [vmem:[#allocation2 + $0x68] sm:$0xff] 0.0
      %36 = vst [vmem:[#allocation2 + $0x70] sm:$0xff] 0.0
      %37 = vst [vmem:[#allocation2 + $0x78] sm:$0xff] 0.0
      %38 = vst [vmem:[#allocation2 + $0x80] sm:$0xff] 0.0
      %39 = vst [vmem:[#allocation2 + $0x88] sm:$0xff] 0.0
      %40 = vst [vmem:[#allocation2 + $0x90] sm:$0xff] 0.0
      %41 = vst [vmem:[#allocation2 + $0x98] sm:$0xff] 0.0
      %42 = vst [vmem:[#allocation2 + $0xa0] sm:$0xff] 0.0
      %43 = vst [vmem:[#allocation2 + $0xa8] sm:$0xff] 0.0
      %44 = vst [vmem:[#allocation2 + $0xb0] sm:$0xff] 0.0
      %45 = vst [vmem:[#allocation2 + $0xb8] sm:$0xff] 0.0
      %46 = vst [vmem:[#allocation2 + $0xc0] sm:$0xff] 0.0
      %47 = vst [vmem:[#allocation2 + $0xc8] sm:$0xff] 0.0
      %48 = vst [vmem:[#allocation2 + $0xd0] sm:$0xff] 0.0
      %49 = vst [vmem:[#allocation2 + $0xd8] sm:$0xff] 0.0
      %50 = vst [vmem:[#allocation2 + $0xe0] sm:$0xff] 0.0
      %51 = vst [vmem:[#allocation2 + $0xe8] sm:$0xff] 0.0
      %52 = vst [vmem:[#allocation2 + $0xf0] sm:$0xff] 0.0
      %53 = vst [vmem:[#allocation2 + $0xf8] sm:$0xff] 0.0
      %54 = vst [vmem:[#allocation2 + $0x100] sm:$0xff] 0.0
      %55 = vst [vmem:[#allocation2 + $0x108] sm:$0xff] 0.0
      %56 = vst [vmem:[#allocation2 + $0x110] sm:$0xff] 0.0
      %57 = vst [vmem:[#allocation2 + $0x118] sm:$0xff] 0.0
      %58 = vst [vmem:[#allocation2 + $0x120] sm:$0xff] 0.0
      %59 = vst [vmem:[#allocation2 + $0x128] sm:$0xff] 0.0
      %60 = vst [vmem:[#allocation2 + $0x130] sm:$0xff] 0.0
      %61 = vst [vmem:[#allocation2 + $0x138] sm:$0xff] 0.0
      %62 = vst [vmem:[#allocation2 + $0x140] sm:$0xff] 0.0
      %63 = vst [vmem:[#allocation2 + $0x148] sm:$0xff] 0.0
      %64 = vst [vmem:[#allocation2 + $0x150] sm:$0xff] 0.0
      %65 = vst [vmem:[#allocation2 + $0x158] sm:$0xff] 0.0
      %66 = vst [vmem:[#allocation2 + $0x160] sm:$0xff] 0.0
      %67 = vst [vmem:[#allocation2 + $0x168] sm:$0xff] 0.0
      %68 = vst [vmem:[#allocation2 + $0x170] sm:$0xff] 0.0
      %69 = vst [vmem:[#allocation2 + $0x178] sm:$0xff] 0.0
    $region17: #{pagcn_forward.13} parent=1 // pred_fallthru
      _
    %v70 = vld [vmem:[#allocation2] sm:$0xff]
    %v71 = vld [vmem:[#allocation2 + $0x8] sm:$0xff]
    %v72 = vld [vmem:[#allocation2 + $0x10] sm:$0xff]
    %v73 = vld [vmem:[#allocation2 + $0x18] sm:$0xff]
    %v74 = vld [vmem:[#allocation2 + $0x20] sm:$0xff]
    %v75 = vld [vmem:[#allocation2 + $0x28] sm:$0xff]
    %v76 = vld [vmem:[#allocation2 + $0x30] sm:$0xff]
    %v77 = vld [vmem:[#allocation2 + $0x38] sm:$0xff]
    %v78 = vld [vmem:[#allocation2 + $0x40] sm:$0xff]
    %v79 = vld [vmem:[#allocation2 + $0x48] sm:$0xff]
    %v80 = vld [vmem:[#allocation2 + $0x50] sm:$0xff]
    %v81 = vld [vmem:[#allocation2 + $0x58] sm:$0xff]
    %v82 = vld [vmem:[#allocation2 + $0x60] sm:$0xff]
    %v83 = vld [vmem:[#allocation2 + $0x68] sm:$0xff]
    %v84 = vld [vmem:[#allocation2 + $0x70] sm:$0xff]
    %v85 = vld [vmem:[#allocation2 + $0x78] sm:$0xff]
    %v86 = vld [vmem:[#allocation2 + $0x80] sm:$0xff]
    %v87 = vld [vmem:[#allocation2 + $0x88] sm:$0xff]
    %v88 = vld [vmem:[#allocation2 + $0x90] sm:$0xff]
    %v89 = vld [vmem:[#allocation2 + $0x98] sm:$0xff]
    %v90 = vld [vmem:[#allocation2 + $0xa0] sm:$0xff]
    %v91 = vld [vmem:[#allocation2 + $0xa8] sm:$0xff]
    %v92 = vld [vmem:[#allocation2 + $0xb0] sm:$0xff]
    %v93 = vld [vmem:[#allocation2 + $0xb8] sm:$0xff]
    %v94 = vld [vmem:[#allocation2 + $0xc0] sm:$0xff]
    %v95 = vld [vmem:[#allocation2 + $0xc8] sm:$0xff]
    %v96 = vld [vmem:[#allocation2 + $0xd0] sm:$0xff]
    %v97 = vld [vmem:[#allocation2 + $0xd8] sm:$0xff]
    %v98 = vld [vmem:[#allocation2 + $0xe0] sm:$0xff]
    %v99 = vld [vmem:[#allocation2 + $0xe8] sm:$0xff]
    %v100 = vld [vmem:[#allocation2 + $0xf0] sm:$0xff]
    %v101 = vld [vmem:[#allocation2 + $0xf8] sm:$0xff]
    %v102 = vld [vmem:[#allocation2 + $0x100] sm:$0xff]
    %v103 = vld [vmem:[#allocation2 + $0x108] sm:$0xff]
    %v104 = vld [vmem:[#allocation2 + $0x110] sm:$0xff]
    %v105 = vld [vmem:[#allocation2 + $0x118] sm:$0xff]
    %v106 = vld [vmem:[#allocation2 + $0x120] sm:$0xff]
    %v107 = vld [vmem:[#allocation2 + $0x128] sm:$0xff]
    %v108 = vld [vmem:[#allocation2 + $0x130] sm:$0xff]
    %v109 = vld [vmem:[#allocation2 + $0x138] sm:$0xff]
    %v110 = vld [vmem:[#allocation2 + $0x140] sm:$0xff]
    %v111 = vld [vmem:[#allocation2 + $0x148] sm:$0xff]
    %v112 = vld [vmem:[#allocation2 + $0x150] sm:$0xff]
    %v113 = vld [vmem:[#allocation2 + $0x158] sm:$0xff]
    %v114 = vld [vmem:[#allocation2 + $0x160] sm:$0xff]
    %v115 = vld [vmem:[#allocation2 + $0x168] sm:$0xff]
    %v116 = vld [vmem:[#allocation2 + $0x170] sm:$0xff]
    %v117 = vld [vmem:[#allocation2 + $0x178] sm:$0xff]
    %v118 = vld [vmem:[%s0] sm:$0xf]
    %v119 = vld [vmem:[%s0 + $0x4] sm:$0xf]
    %v120 = vld [vmem:[%s0 + $0x8] sm:$0xf]
    %v121 = vld [vmem:[%s0 + $0xc] sm:$0xf]
    %v122 = vld [vmem:[%s0 + $0x10] sm:$0xf]
    %v123 = vld [vmem:[%s0 + $0x14] sm:$0xf]
    %v124 = vld [vmem:[%s0 + $0x18] sm:$0xf]
    %v125 = vld [vmem:[%s0 + $0x1c] sm:$0xf]
    %v126 = vld [vmem:[%s0 + $0x20] sm:$0xf]
    %v127 = vld [vmem:[%s0 + $0x24] sm:$0xf]
    %v128 = vld [vmem:[%s0 + $0x28] sm:$0xf]
    %v129 = vld [vmem:[%s0 + $0x2c] sm:$0xf]
    %v130 = vld [vmem:[%s0 + $0x30] sm:$0xf]
    %v131 = vld [vmem:[%s0 + $0x34] sm:$0xf]
    %v132 = vld [vmem:[%s0 + $0x38] sm:$0xf]
    %v133 = vld [vmem:[%s0 + $0x3c] sm:$0xf]
    %v134 = vld [vmem:[%s1] sm:$0xff]
    %v135 = vld [vmem:[%s1 + $0x8] sm:$0xf]
    %v136 = vld [vmem:[%s1 + $0xc] sm:$0xff]
    %v137 = vld [vmem:[%s1 + $0x14] sm:$0xf]
    %v138 = vld [vmem:[%s1 + $0x18] sm:$0xff]
    %v139 = vld [vmem:[%s1 + $0x20] sm:$0xf]
    %v140 = vld [vmem:[%s1 + $0x24] sm:$0xff]
    %v141 = vld [vmem:[%s1 + $0x2c] sm:$0xf]
    %v142 = vld [vmem:[%s1 + $0x30] sm:$0xff]
    %v143 = vld [vmem:[%s1 + $0x38] sm:$0xf]
    %v144 = vld [vmem:[%s1 + $0x3c] sm:$0xff]
    %v145 = vld [vmem:[%s1 + $0x44] sm:$0xf]
    %v146 = vld [vmem:[%s1 + $0x48] sm:$0xff]
    %v147 = vld [vmem:[%s1 + $0x50] sm:$0xf]
    %v148 = vld [vmem:[%s1 + $0x54] sm:$0xff]
    %v149 = vld [vmem:[%s1 + $0x5c] sm:$0xf]
    %v150 = vld [vmem:[%s1 + $0x60] sm:$0xff]
    %v151 = vld [vmem:[%s1 + $0x68] sm:$0xf]
    %v152 = vld [vmem:[%s1 + $0x6c] sm:$0xff]
    %v153 = vld [vmem:[%s1 + $0x74] sm:$0xf]
    %v154 = vld [vmem:[%s1 + $0x78] sm:$0xff]
    %v155 = vld [vmem:[%s1 + $0x80] sm:$0xf]
    %v156 = vld [vmem:[%s1 + $0x84] sm:$0xff]
    %v157 = vld [vmem:[%s1 + $0x8c] sm:$0xf]
    %v158 = vld [vmem:[%s1 + $0x90] sm:$0xff]
    %v159 = vld [vmem:[%s1 + $0x98] sm:$0xf]
    %v160 = vld [vmem:[%s1 + $0x9c] sm:$0xff]
    %v161 = vld [vmem:[%s1 + $0xa4] sm:$0xf]
    %v162 = vld [vmem:[%s1 + $0xa8] sm:$0xff]
    %v163 = vld [vmem:[%s1 + $0xb0] sm:$0xf]
    %v164 = vld [vmem:[%s1 + $0xb4] sm:$0xff]
    %v165 = vld [vmem:[%s1 + $0xbc] sm:$0xf]
    %v182 = vunpack.c.l.b16 %v118
    %v183 = vunpack.c.l.b16 %v119
    %v184 = vunpack.c.l.b16 %v120
    %v185 = vunpack.c.l.b16 %v121
    %v186 = vunpack.c.l.b16 %v122
    %v187 = vunpack.c.l.b16 %v123
    %v188 = vunpack.c.l.b16 %v124
    %v189 = vunpack.c.l.b16 %v125
    %v190 = vunpack.c.l.b16 %v126
    %v191 = vunpack.c.l.b16 %v127
    %v192 = vunpack.c.l.b16 %v128
    %v193 = vunpack.c.l.b16 %v129
    %v194 = vunpack.c.l.b16 %v130
    %v195 = vunpack.c.l.b16 %v131
    %v196 = vunpack.c.l.b16 %v132
    %v197 = vunpack.c.l.b16 %v133
    %v198 = vpack.c.b16 %v183, %v182
    %v199 = vpack.c.b16 %v185, %v184
    %v200 = vpack.c.b16 %v187, %v186
    %v201 = vpack.c.b16 %v189, %v188
    %v202 = vpack.c.b16 %v191, %v190
    %v203 = vpack.c.b16 %v193, %v192
    %v204 = vpack.c.b16 %v195, %v194
    %v205 = vpack.c.b16 %v197, %v196
    %v246 = vunpack.c.l.b16 %v134
    %v247 = vunpack.c.h.b16 %v134
    %v248 = vunpack.c.l.b16 %v135
    %v249 = vunpack.c.l.b16 %v136
    %v250 = vunpack.c.h.b16 %v136
    %v251 = vunpack.c.l.b16 %v137
    %v252 = vunpack.c.l.b16 %v138
    %v253 = vunpack.c.h.b16 %v138
    %v254 = vunpack.c.l.b16 %v139
    %v255 = vunpack.c.l.b16 %v140
    %v256 = vunpack.c.h.b16 %v140
    %v257 = vunpack.c.l.b16 %v141
    %v258 = vunpack.c.l.b16 %v142
    %v259 = vunpack.c.h.b16 %v142
    %v260 = vunpack.c.l.b16 %v143
    %v261 = vunpack.c.l.b16 %v144
    %v262 = vunpack.c.h.b16 %v144
    %v263 = vunpack.c.l.b16 %v145
    %v264 = vunpack.c.l.b16 %v146
    %v265 = vunpack.c.h.b16 %v146
    %v266 = vunpack.c.l.b16 %v147
    %v267 = vunpack.c.l.b16 %v148
    %v268 = vunpack.c.h.b16 %v148
    %v269 = vunpack.c.l.b16 %v149
    %v270 = vunpack.c.l.b16 %v150
    %v271 = vunpack.c.h.b16 %v150
    %v272 = vunpack.c.l.b16 %v151
    %v273 = vunpack.c.l.b16 %v152
    %v274 = vunpack.c.h.b16 %v152
    %v275 = vunpack.c.l.b16 %v153
    %v276 = vunpack.c.l.b16 %v154
    %v277 = vunpack.c.h.b16 %v154
    %v278 = vunpack.c.l.b16 %v155
    %v279 = vunpack.c.l.b16 %v156
    %v280 = vunpack.c.h.b16 %v156
    %v281 = vunpack.c.l.b16 %v157
    %v282 = vunpack.c.l.b16 %v158
    %v283 = vunpack.c.h.b16 %v158
    %v284 = vunpack.c.l.b16 %v159
    %v285 = vunpack.c.l.b16 %v160
    %v286 = vunpack.c.h.b16 %v160
    %v287 = vunpack.c.l.b16 %v161
    %v288 = vunpack.c.l.b16 %v162
    %v289 = vunpack.c.h.b16 %v162
    %v290 = vunpack.c.l.b16 %v163
    %v291 = vunpack.c.l.b16 %v164
    %v292 = vunpack.c.h.b16 %v164
    %v293 = vunpack.c.l.b16 %v165
    %v294 = vpack.c.b16 %v249, %v246
    %v295 = vpack.c.b16 %v250, %v247
    %v296 = vpack.c.b16 %v251, %v248
    %v297 = vpack.c.b16 %v255, %v252
    %v298 = vpack.c.b16 %v256, %v253
    %v299 = vpack.c.b16 %v257, %v254
    %v300 = vpack.c.b16 %v261, %v258
    %v301 = vpack.c.b16 %v262, %v259
    %v302 = vpack.c.b16 %v263, %v260
    %v303 = vpack.c.b16 %v267, %v264
    %v304 = vpack.c.b16 %v268, %v265
    %v305 = vpack.c.b16 %v269, %v266
    %v306 = vpack.c.b16 %v273, %v270
    %v307 = vpack.c.b16 %v274, %v271
    %v308 = vpack.c.b16 %v275, %v272
    %v309 = vpack.c.b16 %v279, %v276
    %v310 = vpack.c.b16 %v280, %v277
    %v311 = vpack.c.b16 %v281, %v278
    %v312 = vpack.c.b16 %v285, %v282
    %v313 = vpack.c.b16 %v286, %v283
    %v314 = vpack.c.b16 %v287, %v284
    %v315 = vpack.c.b16 %v291, %v288
    %v316 = vpack.c.b16 %v292, %v289
    %v317 = vpack.c.b16 %v293, %v290
    %342 = vmatprep.subr.bf16.mxu0 %v295
    %343 = vmatpush1.bf16.msra.mxu0 %v294
    %344 = vmatprep.subr.bf16.mxu0 %v298
    %345 = vmatpush1.bf16.msra.mxu0 %v297
    %346 = vmatprep.subr.bf16.mxu0 %v301
    %347 = vmatpush1.bf16.msra.mxu0 %v300
    %348 = vmatprep.subr.bf16.mxu0 %v304
    %349 = vmatpush1.bf16.msra.mxu0 %v303
    %350 = vmatprep.subr.bf16.mxu0 %v307
    %351 = vmatpush1.bf16.msra.mxu0 %v306
    %352 = vmatprep.subr.bf16.mxu0 %v310
    %353 = vmatpush1.bf16.msra.mxu0 %v309
    %354 = vmatprep.subr.bf16.mxu0 %v313
    %355 = vmatpush1.bf16.msra.mxu0 %v312
    %356 = vmatprep.subr.bf16.mxu0 %v316
    %357 = vmatpush1.bf16.msra.mxu0 %v315
    %358 = vmatprep.subr.bf16.mxu0 0
    %359 = vmatpush1.bf16.msra.mxu0 0
    %360 = vmatprep.subr.bf16.mxu0 0
    %361 = vmatpush1.bf16.msra.mxu0 0
    %362 = vmatprep.subr.bf16.mxu0 0
    %363 = vmatpush1.bf16.msra.mxu0 0
    %364 = vmatprep.subr.bf16.mxu0 0
    %365 = vmatpush1.bf16.msra.mxu0 0
    %366 = vmatprep.subr.bf16.mxu0 0
    %367 = vmatpush1.bf16.msra.mxu0 0
    %368 = vmatprep.subr.bf16.mxu0 0
    %369 = vmatpush1.bf16.msra.mxu0 0
    %370 = vmatprep.subr.bf16.mxu0 0
    %371 = vmatpush1.bf16.msra.mxu0 0
    %372 = vmatprep.subr.bf16.mxu0 0
    %373 = vmatpush1.bf16.msra.mxu0 0
    %374 = vmatprep.mubr.bf16.mxu0 0
    %375 = vmatmul.mubr.bf16.gmra.mrb[0].mxu0 %v198
    %v376 = vpop.f32.mrb[0].mxu0
    %v377 = vadd.f32 0.0, %v376
    %v378 = vpop.f32.mrb[0].mxu0
    %v379 = vadd.f32 0.0, %v378
    %v380 = vpop.f32.mrb[0].mxu0
    %v381 = vadd.f32 0.0, %v380
    %v382 = vpop.f32.mrb[0].mxu0
    %v383 = vadd.f32 0.0, %v382
    %384 = vmatprep.mubr.bf16.mxu0 0
    %385 = vmatmul.mubr.bf16.gmra.mrb[0].mxu0 %v199
    %v386 = vpop.f32.mrb[0].mxu0
    %v387 = vadd.f32 0.0, %v386
    %v388 = vpop.f32.mrb[0].mxu0
    %v389 = vadd.f32 0.0, %v388
    %v390 = vpop.f32.mrb[0].mxu0
    %v391 = vadd.f32 0.0, %v390
    %v392 = vpop.f32.mrb[0].mxu0
    %v393 = vadd.f32 0.0, %v392
    %394 = vmatprep.mubr.bf16.mxu0 0
    %395 = vmatmul.mubr.bf16.gmra.mrb[0].mxu0 %v200
    %v396 = vpop.f32.mrb[0].mxu0
    %v397 = vadd.f32 0.0, %v396
    %v398 = vpop.f32.mrb[0].mxu0
    %v399 = vadd.f32 0.0, %v398
    %v400 = vpop.f32.mrb[0].mxu0
    %v401 = vadd.f32 0.0, %v400
    %v402 = vpop.f32.mrb[0].mxu0
    %v403 = vadd.f32 0.0, %v402
    %404 = vmatprep.mubr.bf16.mxu0 0
    %405 = vmatmul.mubr.bf16.gmra.mrb[0].mxu0 %v201
    %v406 = vpop.f32.mrb[0].mxu0
    %v407 = vadd.f32 0.0, %v406
    %v408 = vpop.f32.mrb[0].mxu0
    %v409 = vadd.f32 0.0, %v408
    %v410 = vpop.f32.mrb[0].mxu0
    %v411 = vadd.f32 0.0, %v410
    %v412 = vpop.f32.mrb[0].mxu0
    %v413 = vadd.f32 0.0, %v412
    %414 = vmatprep.mubr.bf16.mxu0 0
    %415 = vmatmul.mubr.bf16.gmra.mrb[0].mxu0 %v202
    %v416 = vpop.f32.mrb[0].mxu0
    %v417 = vadd.f32 0.0, %v416
    %v418 = vpop.f32.mrb[0].mxu0
    %v419 = vadd.f32 0.0, %v418
    %v420 = vpop.f32.mrb[0].mxu0
    %v421 = vadd.f32 0.0, %v420
    %v422 = vpop.f32.mrb[0].mxu0
    %v423 = vadd.f32 0.0, %v422
    %424 = vmatprep.mubr.bf16.mxu0 0
    %425 = vmatmul.mubr.bf16.gmra.mrb[0].mxu0 %v203
    %v426 = vpop.f32.mrb[0].mxu0
    %v427 = vadd.f32 0.0, %v426
    %v428 = vpop.f32.mrb[0].mxu0
    %v429 = vadd.f32 0.0, %v428
    %v430 = vpop.f32.mrb[0].mxu0
    %v431 = vadd.f32 0.0, %v430
    %v432 = vpop.f32.mrb[0].mxu0
    %v433 = vadd.f32 0.0, %v432
    %434 = vmatprep.mubr.bf16.mxu0 0
    %435 = vmatmul.mubr.bf16.gmra.mrb[0].mxu0 %v204
    %v436 = vpop.f32.mrb[0].mxu0
    %v437 = vadd.f32 0.0, %v436
    %v438 = vpop.f32.mrb[0].mxu0
    %v439 = vadd.f32 0.0, %v438
    %v440 = vpop.f32.mrb[0].mxu0
    %v441 = vadd.f32 0.0, %v440
    %v442 = vpop.f32.mrb[0].mxu0
    %v443 = vadd.f32 0.0, %v442
    %444 = vmatprep.mubr.bf16.mxu0 0
    %445 = vmatmul.mubr.bf16.gmra.mrb[0].mxu0 %v205
    %v446 = vpop.f32.mrb[0].mxu0
    %v447 = vadd.f32 0.0, %v446
    %v448 = vpop.f32.mrb[0].mxu0
    %v449 = vadd.f32 0.0, %v448
    %v450 = vpop.f32.mrb[0].mxu0
    %v451 = vadd.f32 0.0, %v450
    %v452 = vpop.f32.mrb[0].mxu0
    %v453 = vadd.f32 0.0, %v452
    %454 = vdwg.mxu0
    %455 = vmatprep.subr.bf16.mxu0 0
    %456 = vmatpush1.bf16.msra.mxu0 %v296
    %457 = vmatprep.subr.bf16.mxu0 0
    %458 = vmatpush1.bf16.msra.mxu0 %v299
    %459 = vmatprep.subr.bf16.mxu0 0
    %460 = vmatpush1.bf16.msra.mxu0 %v302
    %461 = vmatprep.subr.bf16.mxu0 0
    %462 = vmatpush1.bf16.msra.mxu0 %v305
    %463 = vmatprep.subr.bf16.mxu0 0
    %464 = vmatpush1.bf16.msra.mxu0 %v308
    %465 = vmatprep.subr.bf16.mxu0 0
    %466 = vmatpush1.bf16.msra.mxu0 %v311
    %467 = vmatprep.subr.bf16.mxu0 0
    %468 = vmatpush1.bf16.msra.mxu0 %v314
    %469 = vmatprep.subr.bf16.mxu0 0
    %470 = vmatpush1.bf16.msra.mxu0 %v317
    %471 = vmatprep.subr.bf16.mxu0 0
    %472 = vmatpush1.bf16.msra.mxu0 0
    %473 = vmatprep.subr.bf16.mxu0 0
    %474 = vmatpush1.bf16.msra.mxu0 0
    %475 = vmatprep.subr.bf16.mxu0 0
    %476 = vmatpush1.bf16.msra.mxu0 0
    %477 = vmatprep.subr.bf16.mxu0 0
    %478 = vmatpush1.bf16.msra.mxu0 0
    %479 = vmatprep.subr.bf16.mxu0 0
    %480 = vmatpush1.bf16.msra.mxu0 0
    %481 = vmatprep.subr.bf16.mxu0 0
    %482 = vmatpush1.bf16.msra.mxu0 0
    %483 = vmatprep.subr.bf16.mxu0 0
    %484 = vmatpush1.bf16.msra.mxu0 0
    %485 = vmatprep.subr.bf16.mxu0 0
    %486 = vmatpush1.bf16.msra.mxu0 0
    %487 = vmatprep.mubr.bf16.mxu0 0
    %488 = vmatmul.mubr.bf16.gmra.mrb[0].mxu0 %v198
    %v489 = vpop.f32.mrb[0].mxu0
    %v490 = vadd.f32 0.0, %v489
    %v491 = vpop.f32.mrb[0].mxu0
    %v492 = vpop.f32.mrb[0].mxu0
    %v493 = vadd.f32 0.0, %v492
    %v494 = vpop.f32.mrb[0].mxu0
    %495 = vmatprep.mubr.bf16.mxu0 0
    %496 = vmatmul.mubr.bf16.gmra.mrb[0].mxu0 %v199
    %v497 = vpop.f32.mrb[0].mxu0
    %v498 = vadd.f32 0.0, %v497
    %v499 = vpop.f32.mrb[0].mxu0
    %v500 = vpop.f32.mrb[0].mxu0
    %v501 = vadd.f32 0.0, %v500
    %v502 = vpop.f32.mrb[0].mxu0
    %503 = vmatprep.mubr.bf16.mxu0 0
    %504 = vmatmul.mubr.bf16.gmra.mrb[0].mxu0 %v200
    %v505 = vpop.f32.mrb[0].mxu0
    %v506 = vadd.f32 0.0, %v505
    %v507 = vpop.f32.mrb[0].mxu0
    %v508 = vpop.f32.mrb[0].mxu0
    %v509 = vadd.f32 0.0, %v508
    %v510 = vpop.f32.mrb[0].mxu0
    %511 = vmatprep.mubr.bf16.mxu0 0
    %512 = vmatmul.mubr.bf16.gmra.mrb[0].mxu0 %v201
    %v513 = vpop.f32.mrb[0].mxu0
    %v514 = vadd.f32 0.0, %v513
    %v515 = vpop.f32.mrb[0].mxu0
    %v516 = vpop.f32.mrb[0].mxu0
    %v517 = vadd.f32 0.0, %v516
    %v518 = vpop.f32.mrb[0].mxu0
    %519 = vmatprep.mubr.bf16.mxu0 0
    %520 = vmatmul.mubr.bf16.gmra.mrb[0].mxu0 %v202
    %v521 = vpop.f32.mrb[0].mxu0
    %v522 = vadd.f32 0.0, %v521
    %v523 = vpop.f32.mrb[0].mxu0
    %v524 = vpop.f32.mrb[0].mxu0
    %v525 = vadd.f32 0.0, %v524
    %v526 = vpop.f32.mrb[0].mxu0
    %527 = vmatprep.mubr.bf16.mxu0 0
    %528 = vmatmul.mubr.bf16.gmra.mrb[0].mxu0 %v203
    %v529 = vpop.f32.mrb[0].mxu0
    %v530 = vadd.f32 0.0, %v529
    %v531 = vpop.f32.mrb[0].mxu0
    %v532 = vpop.f32.mrb[0].mxu0
    %v533 = vadd.f32 0.0, %v532
    %v534 = vpop.f32.mrb[0].mxu0
    %535 = vmatprep.mubr.bf16.mxu0 0
    %536 = vmatmul.mubr.bf16.gmra.mrb[0].mxu0 %v204
    %v537 = vpop.f32.mrb[0].mxu0
    %v538 = vadd.f32 0.0, %v537
    %v539 = vpop.f32.mrb[0].mxu0
    %v540 = vpop.f32.mrb[0].mxu0
    %v541 = vadd.f32 0.0, %v540
    %v542 = vpop.f32.mrb[0].mxu0
    %543 = vmatprep.mubr.bf16.mxu0 0
    %544 = vmatmul.mubr.bf16.gmra.mrb[0].mxu0 %v205
    %v545 = vpop.f32.mrb[0].mxu0
    %v546 = vadd.f32 0.0, %v545
    %v547 = vpop.f32.mrb[0].mxu0
    %v548 = vpop.f32.mrb[0].mxu0
    %v549 = vadd.f32 0.0, %v548
    %v550 = vpop.f32.mrb[0].mxu0
    %551 = vdwg.mxu0
    %v552 = vadd.f32 %v70, %v377
    %v553 = vadd.f32 %v71, %v379
    %v554 = vadd.f32 %v72, %v490
    %v555 = vadd.f32 %v73, %v381
    %v556 = vadd.f32 %v74, %v383
    %v557 = vadd.f32 %v75, %v493
    %v558 = vadd.f32 %v76, %v387
    %v559 = vadd.f32 %v77, %v389
    %v560 = vadd.f32 %v78, %v498
    %v561 = vadd.f32 %v79, %v391
    %v562 = vadd.f32 %v80, %v393
    %v563 = vadd.f32 %v81, %v501
    %v564 = vadd.f32 %v82, %v397
    %v565 = vadd.f32 %v83, %v399
    %v566 = vadd.f32 %v84, %v506
    %v567 = vadd.f32 %v85, %v401
    %v568 = vadd.f32 %v86, %v403
    %v569 = vadd.f32 %v87, %v509
    %v570 = vadd.f32 %v88, %v407
    %v571 = vadd.f32 %v89, %v409
    %v572 = vadd.f32 %v90, %v514
    %v573 = vadd.f32 %v91, %v411
    %v574 = vadd.f32 %v92, %v413
    %v575 = vadd.f32 %v93, %v517
    %v576 = vadd.f32 %v94, %v417
    %v577 = vadd.f32 %v95, %v419
    %v578 = vadd.f32 %v96, %v522
    %v579 = vadd.f32 %v97, %v421
    %v580 = vadd.f32 %v98, %v423
    %v581 = vadd.f32 %v99, %v525
    %v582 = vadd.f32 %v100, %v427
    %v583 = vadd.f32 %v101, %v429
    %v584 = vadd.f32 %v102, %v530
    %v585 = vadd.f32 %v103, %v431
    %v586 = vadd.f32 %v104, %v433
    %v587 = vadd.f32 %v105, %v533
    %v588 = vadd.f32 %v106, %v437
    %v589 = vadd.f32 %v107, %v439
    %v590 = vadd.f32 %v108, %v538
    %v591 = vadd.f32 %v109, %v441
    %v592 = vadd.f32 %v110, %v443
    %v593 = vadd.f32 %v111, %v541
    %v594 = vadd.f32 %v112, %v447
    %v595 = vadd.f32 %v113, %v449
    %v596 = vadd.f32 %v114, %v546
    %v597 = vadd.f32 %v115, %v451
    %v598 = vadd.f32 %v116, %v453
    %v599 = vadd.f32 %v117, %v549
    %600 = vst [vmem:[#allocation2] sm:$0xff] %v552
    %601 = vst [vmem:[#allocation2 + $0x8] sm:$0xff] %v553
    %602 = vst [vmem:[#allocation2 + $0x10] sm:$0xff] %v554
    %603 = vst [vmem:[#allocation2 + $0x18] sm:$0xff] %v555
    %604 = vst [vmem:[#allocation2 + $0x20] sm:$0xff] %v556
    %605 = vst [vmem:[#allocation2 + $0x28] sm:$0xff] %v557
    %606 = vst [vmem:[#allocation2 + $0x30] sm:$0xff] %v558
    %607 = vst [vmem:[#allocation2 + $0x38] sm:$0xff] %v559
    %608 = vst [vmem:[#allocation2 + $0x40] sm:$0xff] %v560
    %609 = vst [vmem:[#allocation2 + $0x48] sm:$0xff] %v561
    %610 = vst [vmem:[#allocation2 + $0x50] sm:$0xff] %v562
    %611 = vst [vmem:[#allocation2 + $0x58] sm:$0xff] %v563
    %612 = vst [vmem:[#allocation2 + $0x60] sm:$0xff] %v564
    %613 = vst [vmem:[#allocation2 + $0x68] sm:$0xff] %v565
    %614 = vst [vmem:[#allocation2 + $0x70] sm:$0xff] %v566
    %615 = vst [vmem:[#allocation2 + $0x78] sm:$0xff] %v567
    %616 = vst [vmem:[#allocation2 + $0x80] sm:$0xff] %v568
    %617 = vst [vmem:[#allocation2 + $0x88] sm:$0xff] %v569
    %618 = vst [vmem:[#allocation2 + $0x90] sm:$0xff] %v570
    %619 = vst [vmem:[#allocation2 + $0x98] sm:$0xff] %v571
    %620 = vst [vmem:[#allocation2 + $0xa0] sm:$0xff] %v572
    %621 = vst [vmem:[#allocation2 + $0xa8] sm:$0xff] %v573
    %622 = vst [vmem:[#allocation2 + $0xb0] sm:$0xff] %v574
    %623 = vst [vmem:[#allocation2 + $0xb8] sm:$0xff] %v575
    %624 = vst [vmem:[#allocation2 + $0xc0] sm:$0xff] %v576
    %625 = vst [vmem:[#allocation2 + $0xc8] sm:$0xff] %v577
    %626 = vst [vmem:[#allocation2 + $0xd0] sm:$0xff] %v578
    %627 = vst [vmem:[#allocation2 + $0xd8] sm:$0xff] %v579
    %628 = vst [vmem:[#allocation2 + $0xe0] sm:$0xff] %v580
    %629 = vst [vmem:[#allocation2 + $0xe8] sm:$0xff] %v581
    %630 = vst [vmem:[#allocation2 + $0xf0] sm:$0xff] %v582
    %631 = vst [vmem:[#allocation2 + $0xf8] sm:$0xff] %v583
    %632 = vst [vmem:[#allocation2 + $0x100] sm:$0xff] %v584
    %633 = vst [vmem:[#allocation2 + $0x108] sm:$0xff] %v585
    %634 = vst [vmem:[#allocation2 + $0x110] sm:$0xff] %v586
    %635 = vst [vmem:[#allocation2 + $0x118] sm:$0xff] %v587
    %636 = vst [vmem:[#allocation2 + $0x120] sm:$0xff] %v588
    %637 = vst [vmem:[#allocation2 + $0x128] sm:$0xff] %v589
    %638 = vst [vmem:[#allocation2 + $0x130] sm:$0xff] %v590
    %639 = vst [vmem:[#allocation2 + $0x138] sm:$0xff] %v591
    %640 = vst [vmem:[#allocation2 + $0x140] sm:$0xff] %v592
    %641 = vst [vmem:[#allocation2 + $0x148] sm:$0xff] %v593
    %642 = vst [vmem:[#allocation2 + $0x150] sm:$0xff] %v594
    %643 = vst [vmem:[#allocation2 + $0x158] sm:$0xff] %v595
    %644 = vst [vmem:[#allocation2 + $0x160] sm:$0xff] %v596
    %645 = vst [vmem:[#allocation2 + $0x168] sm:$0xff] %v597
    %646 = vst [vmem:[#allocation2 + $0x170] sm:$0xff] %v598
    %647 = vst [vmem:[#allocation2 + $0x178] sm:$0xff] %v599
    // Predicated region
    $region18: #{pagcn_forward.13} parent=1 // pred_check
      %p648 = pneg %p18
    $region19: #{pagcn_forward.13} parent=1 // pred_check_branch
      %650 = sbr.rel (%p648) target = $region21
    $region20: #{pagcn_forward.13} parent=1 // pred_region
      %v651 = vld [vmem:[#allocation2] sm:$0xff]
      %v652 = vld [vmem:[#allocation2 + $0x8] sm:$0xff]
      %v653 = vld [vmem:[#allocation2 + $0x10] sm:$0xff]
      %v654 = vld [vmem:[#allocation2 + $0x18] sm:$0xff]
      %v655 = vld [vmem:[#allocation2 + $0x20] sm:$0xff]
      %v656 = vld [vmem:[#allocation2 + $0x28] sm:$0xff]
      %v657 = vld [vmem:[#allocation2 + $0x30] sm:$0xff]
      %v658 = vld [vmem:[#allocation2 + $0x38] sm:$0xff]
      %v659 = vld [vmem:[#allocation2 + $0x40] sm:$0xff]
      %v660 = vld [vmem:[#allocation2 + $0x48] sm:$0xff]
      %v661 = vld [vmem:[#allocation2 + $0x50] sm:$0xff]
      %v662 = vld [vmem:[#allocation2 + $0x58] sm:$0xff]
      %v663 = vld [vmem:[#allocation2 + $0x60] sm:$0xff]
      %v664 = vld [vmem:[#allocation2 + $0x68] sm:$0xff]
      %v665 = vld [vmem:[#allocation2 + $0x70] sm:$0xff]
      %v666 = vld [vmem:[#allocation2 + $0x78] sm:$0xff]
      %v667 = vld [vmem:[#allocation2 + $0x80] sm:$0xff]
      %v668 = vld [vmem:[#allocation2 + $0x88] sm:$0xff]
      %v669 = vld [vmem:[#allocation2 + $0x90] sm:$0xff]
      %v670 = vld [vmem:[#allocation2 + $0x98] sm:$0xff]
      %v671 = vld [vmem:[#allocation2 + $0xa0] sm:$0xff]
      %v672 = vld [vmem:[#allocation2 + $0xa8] sm:$0xff]
      %v673 = vld [vmem:[#allocation2 + $0xb0] sm:$0xff]
      %v674 = vld [vmem:[#allocation2 + $0xb8] sm:$0xff]
      %v675 = vld [vmem:[#allocation2 + $0xc0] sm:$0xff]
      %v676 = vld [vmem:[#allocation2 + $0xc8] sm:$0xff]
      %v677 = vld [vmem:[#allocation2 + $0xd0] sm:$0xff]
      %v678 = vld [vmem:[#allocation2 + $0xd8] sm:$0xff]
      %v679 = vld [vmem:[#allocation2 + $0xe0] sm:$0xff]
      %v680 = vld [vmem:[#allocation2 + $0xe8] sm:$0xff]
      %v681 = vld [vmem:[#allocation2 + $0xf0] sm:$0xff]
      %v682 = vld [vmem:[#allocation2 + $0xf8] sm:$0xff]
      %v683 = vld [vmem:[#allocation2 + $0x100] sm:$0xff]
      %v684 = vld [vmem:[#allocation2 + $0x108] sm:$0xff]
      %v685 = vld [vmem:[#allocation2 + $0x110] sm:$0xff]
      %v686 = vld [vmem:[#allocation2 + $0x118] sm:$0xff]
      %v687 = vld [vmem:[#allocation2 + $0x120] sm:$0xff]
      %v688 = vld [vmem:[#allocation2 + $0x128] sm:$0xff]
      %v689 = vld [vmem:[#allocation2 + $0x130] sm:$0xff]
      %v690 = vld [vmem:[#allocation2 + $0x138] sm:$0xff]
      %v691 = vld [vmem:[#allocation2 + $0x140] sm:$0xff]
      %v692 = vld [vmem:[#allocation2 + $0x148] sm:$0xff]
      %v693 = vld [vmem:[#allocation2 + $0x150] sm:$0xff]
      %v694 = vld [vmem:[#allocation2 + $0x158] sm:$0xff]
      %v695 = vld [vmem:[#allocation2 + $0x160] sm:$0xff]
      %v696 = vld [vmem:[#allocation2 + $0x168] sm:$0xff]
      %v697 = vld [vmem:[#allocation2 + $0x170] sm:$0xff]
      %v698 = vld [vmem:[#allocation2 + $0x178] sm:$0xff]
      %v699 = vld [vmem:[%s2] sm:$0xff]
      %v700 = vld [vmem:[%s2 + $0x8] sm:$0xff]
      %v701 = vld [vmem:[%s2 + $0x10] sm:$0xff]
      %v702 = vld [vmem:[%s2 + $0x18] sm:$0xff]
      %v703 = vld [vmem:[%s2 + $0x20] sm:$0xff]
      %v704 = vld [vmem:[%s2 + $0x28] sm:$0xff]
      %v705 = vld [vmem:[%s2 + $0x30] sm:$0xff]
      %v706 = vld [vmem:[%s2 + $0x38] sm:$0xff]
      %v707 = vld [vmem:[%s2 + $0x40] sm:$0xff]
      %v708 = vld [vmem:[%s2 + $0x48] sm:$0xff]
      %v709 = vld [vmem:[%s2 + $0x50] sm:$0xff]
      %v710 = vld [vmem:[%s2 + $0x58] sm:$0xff]
      %v711 = vld [vmem:[%s2 + $0x60] sm:$0xff]
      %v712 = vld [vmem:[%s2 + $0x68] sm:$0xff]
      %v713 = vld [vmem:[%s2 + $0x70] sm:$0xff]
      %v714 = vld [vmem:[%s2 + $0x78] sm:$0xff]
      %716 = vset.pattern.permute.xlu0 0
      %717 = vperm.xlu0 %716, %v699
      %v718 = vpop.permute.xlu0 %717
      %721 = vset.pattern.permute.xlu0 0
      %722 = vperm.xlu0 %721, %v700
      %v723 = vpop.permute.xlu0 %722
      %726 = vset.pattern.permute.xlu0 0
      %727 = vperm.xlu0 %726, %v701
      %v728 = vpop.permute.xlu0 %727
      %731 = vset.pattern.permute.xlu0 0
      %732 = vperm.xlu0 %731, %v702
      %v733 = vpop.permute.xlu0 %732
      %736 = vset.pattern.permute.xlu0 0
      %737 = vperm.xlu0 %736, %v703
      %v738 = vpop.permute.xlu0 %737
      %741 = vset.pattern.permute.xlu0 0
      %742 = vperm.xlu0 %741, %v704
      %v743 = vpop.permute.xlu0 %742
      %746 = vset.pattern.permute.xlu0 0
      %747 = vperm.xlu0 %746, %v705
      %v748 = vpop.permute.xlu0 %747
      %751 = vset.pattern.permute.xlu0 0
      %752 = vperm.xlu0 %751, %v706
      %v753 = vpop.permute.xlu0 %752
      %756 = vset.pattern.permute.xlu0 0
      %757 = vperm.xlu0 %756, %v707
      %v758 = vpop.permute.xlu0 %757
      %761 = vset.pattern.permute.xlu0 0
      %762 = vperm.xlu0 %761, %v708
      %v763 = vpop.permute.xlu0 %762
      %766 = vset.pattern.permute.xlu0 0
      %767 = vperm.xlu0 %766, %v709
      %v768 = vpop.permute.xlu0 %767
      %771 = vset.pattern.permute.xlu0 0
      %772 = vperm.xlu0 %771, %v710
      %v773 = vpop.permute.xlu0 %772
      %776 = vset.pattern.permute.xlu0 0
      %777 = vperm.xlu0 %776, %v711
      %v778 = vpop.permute.xlu0 %777
      %781 = vset.pattern.permute.xlu0 0
      %782 = vperm.xlu0 %781, %v712
      %v783 = vpop.permute.xlu0 %782
      %786 = vset.pattern.permute.xlu0 0
      %787 = vperm.xlu0 %786, %v713
      %v788 = vpop.permute.xlu0 %787
      %791 = vset.pattern.permute.xlu0 0
      %792 = vperm.xlu0 %791, %v714
      %v793 = vpop.permute.xlu0 %792
      %v795 = vmul.f32 %v651, %v718
      %v796 = vmul.f32 %v654, %v723
      %v797 = vmul.f32 %v657, %v728
      %v798 = vmul.f32 %v660, %v733
      %v799 = vmul.f32 %v663, %v738
      %v800 = vmul.f32 %v666, %v743
      %v801 = vmul.f32 %v669, %v748
      %v802 = vmul.f32 %v672, %v753
      %v803 = vmul.f32 %v675, %v758
      %v804 = vmul.f32 %v678, %v763
      %v805 = vmul.f32 %v681, %v768
      %v806 = vmul.f32 %v684, %v773
      %v807 = vmul.f32 %v687, %v778
      %v808 = vmul.f32 %v690, %v783
      %v809 = vmul.f32 %v693, %v788
      %v810 = vmul.f32 %v696, %v793
      %811 = vst [vmem:[#allocation2] sm:$0xff] %v795
      %812 = vst [vmem:[#allocation2 + $0x18] sm:$0xff] %v796
      %813 = vst [vmem:[#allocation2 + $0x30] sm:$0xff] %v797
      %814 = vst [vmem:[#allocation2 + $0x48] sm:$0xff] %v798
      %815 = vst [vmem:[#allocation2 + $0x60] sm:$0xff] %v799
      %816 = vst [vmem:[#allocation2 + $0x78] sm:$0xff] %v800
      %817 = vst [vmem:[#allocation2 + $0x90] sm:$0xff] %v801
      %818 = vst [vmem:[#allocation2 + $0xa8] sm:$0xff] %v802
      %819 = vst [vmem:[#allocation2 + $0xc0] sm:$0xff] %v803
      %820 = vst [vmem:[#allocation2 + $0xd8] sm:$0xff] %v804
      %821 = vst [vmem:[#allocation2 + $0xf0] sm:$0xff] %v805
      %822 = vst [vmem:[#allocation2 + $0x108] sm:$0xff] %v806
      %823 = vst [vmem:[#allocation2 + $0x120] sm:$0xff] %v807
      %824 = vst [vmem:[#allocation2 + $0x138] sm:$0xff] %v808
      %825 = vst [vmem:[#allocation2 + $0x150] sm:$0xff] %v809
      %826 = vst [vmem:[#allocation2 + $0x168] sm:$0xff] %v810
      %s827 = scalar_lea.vmem %s2, 128
      %v828 = vld [vmem:[%s827] sm:$0xff]
      %v829 = vld [vmem:[%s827 + $0x8] sm:$0xff]
      %v830 = vld [vmem:[%s827 + $0x10] sm:$0xff]
      %v831 = vld [vmem:[%s827 + $0x18] sm:$0xff]
      %v832 = vld [vmem:[%s827 + $0x20] sm:$0xff]
      %v833 = vld [vmem:[%s827 + $0x28] sm:$0xff]
      %v834 = vld [vmem:[%s827 + $0x30] sm:$0xff]
      %v835 = vld [vmem:[%s827 + $0x38] sm:$0xff]
      %v836 = vld [vmem:[%s827 + $0x40] sm:$0xff]
      %v837 = vld [vmem:[%s827 + $0x48] sm:$0xff]
      %v838 = vld [vmem:[%s827 + $0x50] sm:$0xff]
      %v839 = vld [vmem:[%s827 + $0x58] sm:$0xff]
      %v840 = vld [vmem:[%s827 + $0x60] sm:$0xff]
      %v841 = vld [vmem:[%s827 + $0x68] sm:$0xff]
      %v842 = vld [vmem:[%s827 + $0x70] sm:$0xff]
      %v843 = vld [vmem:[%s827 + $0x78] sm:$0xff]
      %845 = vset.pattern.permute.xlu0 0
      %846 = vperm.xlu0 %845, %v828
      %v847 = vpop.permute.xlu0 %846
      %850 = vset.pattern.permute.xlu0 0
      %851 = vperm.xlu0 %850, %v829
      %v852 = vpop.permute.xlu0 %851
      %855 = vset.pattern.permute.xlu0 0
      %856 = vperm.xlu0 %855, %v830
      %v857 = vpop.permute.xlu0 %856
      %860 = vset.pattern.permute.xlu0 0
      %861 = vperm.xlu0 %860, %v831
      %v862 = vpop.permute.xlu0 %861
      %865 = vset.pattern.permute.xlu0 0
      %866 = vperm.xlu0 %865, %v832
      %v867 = vpop.permute.xlu0 %866
      %870 = vset.pattern.permute.xlu0 0
      %871 = vperm.xlu0 %870, %v833
      %v872 = vpop.permute.xlu0 %871
      %875 = vset.pattern.permute.xlu0 0
      %876 = vperm.xlu0 %875, %v834
      %v877 = vpop.permute.xlu0 %876
      %880 = vset.pattern.permute.xlu0 0
      %881 = vperm.xlu0 %880, %v835
      %v882 = vpop.permute.xlu0 %881
      %885 = vset.pattern.permute.xlu0 0
      %886 = vperm.xlu0 %885, %v836
      %v887 = vpop.permute.xlu0 %886
      %890 = vset.pattern.permute.xlu0 0
      %891 = vperm.xlu0 %890, %v837
      %v892 = vpop.permute.xlu0 %891
      %895 = vset.pattern.permute.xlu0 0
      %896 = vperm.xlu0 %895, %v838
      %v897 = vpop.permute.xlu0 %896
      %900 = vset.pattern.permute.xlu0 0
      %901 = vperm.xlu0 %900, %v839
      %v902 = vpop.permute.xlu0 %901
      %905 = vset.pattern.permute.xlu0 0
      %906 = vperm.xlu0 %905, %v840
      %v907 = vpop.permute.xlu0 %906
      %910 = vset.pattern.permute.xlu0 0
      %911 = vperm.xlu0 %910, %v841
      %v912 = vpop.permute.xlu0 %911
      %915 = vset.pattern.permute.xlu0 0
      %916 = vperm.xlu0 %915, %v842
      %v917 = vpop.permute.xlu0 %916
      %920 = vset.pattern.permute.xlu0 0
      %921 = vperm.xlu0 %920, %v843
      %v922 = vpop.permute.xlu0 %921
      %v924 = vmul.f32 %v652, %v847
      %v925 = vmul.f32 %v655, %v852
      %v926 = vmul.f32 %v658, %v857
      %v927 = vmul.f32 %v661, %v862
      %v928 = vmul.f32 %v664, %v867
      %v929 = vmul.f32 %v667, %v872
      %v930 = vmul.f32 %v670, %v877
      %v931 = vmul.f32 %v673, %v882
      %v932 = vmul.f32 %v676, %v887
      %v933 = vmul.f32 %v679, %v892
      %v934 = vmul.f32 %v682, %v897
      %v935 = vmul.f32 %v685, %v902
      %v936 = vmul.f32 %v688, %v907
      %v937 = vmul.f32 %v691, %v912
      %v938 = vmul.f32 %v694, %v917
      %v939 = vmul.f32 %v697, %v922
      %940 = vst [vmem:[#allocation2 + $0x8] sm:$0xff] %v924
      %941 = vst [vmem:[#allocation2 + $0x20] sm:$0xff] %v925
      %942 = vst [vmem:[#allocation2 + $0x38] sm:$0xff] %v926
      %943 = vst [vmem:[#allocation2 + $0x50] sm:$0xff] %v927
      %944 = vst [vmem:[#allocation2 + $0x68] sm:$0xff] %v928
      %945 = vst [vmem:[#allocation2 + $0x80] sm:$0xff] %v929
      %946 = vst [vmem:[#allocation2 + $0x98] sm:$0xff] %v930
      %947 = vst [vmem:[#allocation2 + $0xb0] sm:$0xff] %v931
      %948 = vst [vmem:[#allocation2 + $0xc8] sm:$0xff] %v932
      %949 = vst [vmem:[#allocation2 + $0xe0] sm:$0xff] %v933
      %950 = vst [vmem:[#allocation2 + $0xf8] sm:$0xff] %v934
      %951 = vst [vmem:[#allocation2 + $0x110] sm:$0xff] %v935
      %952 = vst [vmem:[#allocation2 + $0x128] sm:$0xff] %v936
      %953 = vst [vmem:[#allocation2 + $0x140] sm:$0xff] %v937
      %954 = vst [vmem:[#allocation2 + $0x158] sm:$0xff] %v938
      %955 = vst [vmem:[#allocation2 + $0x170] sm:$0xff] %v939
      %v956 = vadd.f32 %v795, %v924
      %v957 = vadd.f32 %v796, %v925
      %v958 = vadd.f32 %v797, %v926
      %v959 = vadd.f32 %v798, %v927
      %v960 = vadd.f32 %v799, %v928
      %v961 = vadd.f32 %v800, %v929
      %v962 = vadd.f32 %v801, %v930
      %v963 = vadd.f32 %v802, %v931
      %v964 = vadd.f32 %v803, %v932
      %v965 = vadd.f32 %v804, %v933
      %v966 = vadd.f32 %v805, %v934
      %v967 = vadd.f32 %v806, %v935
      %v968 = vadd.f32 %v807, %v936
      %v969 = vadd.f32 %v808, %v937
      %v970 = vadd.f32 %v809, %v938
      %v971 = vadd.f32 %v810, %v939
      %s972 = scalar_lea.vmem %s2, 256
      %v973 = vld [vmem:[%s972] sm:$0xff]
      %v974 = vld [vmem:[%s972 + $0x8] sm:$0xff]
      %v975 = vld [vmem:[%s972 + $0x10] sm:$0xff]
      %v976 = vld [vmem:[%s972 + $0x18] sm:$0xff]
      %v977 = vld [vmem:[%s972 + $0x20] sm:$0xff]
      %v978 = vld [vmem:[%s972 + $0x28] sm:$0xff]
      %v979 = vld [vmem:[%s972 + $0x30] sm:$0xff]
      %v980 = vld [vmem:[%s972 + $0x38] sm:$0xff]
      %v981 = vld [vmem:[%s972 + $0x40] sm:$0xff]
      %v982 = vld [vmem:[%s972 + $0x48] sm:$0xff]
      %v983 = vld [vmem:[%s972 + $0x50] sm:$0xff]
      %v984 = vld [vmem:[%s972 + $0x58] sm:$0xff]
      %v985 = vld [vmem:[%s972 + $0x60] sm:$0xff]
      %v986 = vld [vmem:[%s972 + $0x68] sm:$0xff]
      %v987 = vld [vmem:[%s972 + $0x70] sm:$0xff]
      %v988 = vld [vmem:[%s972 + $0x78] sm:$0xff]
      %990 = vset.pattern.permute.xlu0 0
      %991 = vperm.xlu0 %990, %v973
      %v992 = vpop.permute.xlu0 %991
      %995 = vset.pattern.permute.xlu0 0
      %996 = vperm.xlu0 %995, %v974
      %v997 = vpop.permute.xlu0 %996
      %1000 = vset.pattern.permute.xlu0 0
      %1001 = vperm.xlu0 %1000, %v975
      %v1002 = vpop.permute.xlu0 %1001
      %1005 = vset.pattern.permute.xlu0 0
      %1006 = vperm.xlu0 %1005, %v976
      %v1007 = vpop.permute.xlu0 %1006
      %1010 = vset.pattern.permute.xlu0 0
      %1011 = vperm.xlu0 %1010, %v977
      %v1012 = vpop.permute.xlu0 %1011
      %1015 = vset.pattern.permute.xlu0 0
      %1016 = vperm.xlu0 %1015, %v978
      %v1017 = vpop.permute.xlu0 %1016
      %1020 = vset.pattern.permute.xlu0 0
      %1021 = vperm.xlu0 %1020, %v979
      %v1022 = vpop.permute.xlu0 %1021
      %1025 = vset.pattern.permute.xlu0 0
      %1026 = vperm.xlu0 %1025, %v980
      %v1027 = vpop.permute.xlu0 %1026
      %1030 = vset.pattern.permute.xlu0 0
      %1031 = vperm.xlu0 %1030, %v981
      %v1032 = vpop.permute.xlu0 %1031
      %1035 = vset.pattern.permute.xlu0 0
      %1036 = vperm.xlu0 %1035, %v982
      %v1037 = vpop.permute.xlu0 %1036
      %1040 = vset.pattern.permute.xlu0 0
      %1041 = vperm.xlu0 %1040, %v983
      %v1042 = vpop.permute.xlu0 %1041
      %1045 = vset.pattern.permute.xlu0 0
      %1046 = vperm.xlu0 %1045, %v984
      %v1047 = vpop.permute.xlu0 %1046
      %1050 = vset.pattern.permute.xlu0 0
      %1051 = vperm.xlu0 %1050, %v985
      %v1052 = vpop.permute.xlu0 %1051
      %1055 = vset.pattern.permute.xlu0 0
      %1056 = vperm.xlu0 %1055, %v986
      %v1057 = vpop.permute.xlu0 %1056
      %1060 = vset.pattern.permute.xlu0 0
      %1061 = vperm.xlu0 %1060, %v987
      %v1062 = vpop.permute.xlu0 %1061
      %1065 = vset.pattern.permute.xlu0 0
      %1066 = vperm.xlu0 %1065, %v988
      %v1067 = vpop.permute.xlu0 %1066
      %v1069 = vmul.f32 %v653, %v992
      %v1070 = vmul.f32 %v656, %v997
      %v1071 = vmul.f32 %v659, %v1002
      %v1072 = vmul.f32 %v662, %v1007
      %v1073 = vmul.f32 %v665, %v1012
      %v1074 = vmul.f32 %v668, %v1017
      %v1075 = vmul.f32 %v671, %v1022
      %v1076 = vmul.f32 %v674, %v1027
      %v1077 = vmul.f32 %v677, %v1032
      %v1078 = vmul.f32 %v680, %v1037
      %v1079 = vmul.f32 %v683, %v1042
      %v1080 = vmul.f32 %v686, %v1047
      %v1081 = vmul.f32 %v689, %v1052
      %v1082 = vmul.f32 %v692, %v1057
      %v1083 = vmul.f32 %v695, %v1062
      %v1084 = vmul.f32 %v698, %v1067
      %1085 = vst [vmem:[#allocation2 + $0x10] sm:$0xff] %v1069
      %1086 = vst [vmem:[#allocation2 + $0x28] sm:$0xff] %v1070
      %1087 = vst [vmem:[#allocation2 + $0x40] sm:$0xff] %v1071
      %1088 = vst [vmem:[#allocation2 + $0x58] sm:$0xff] %v1072
      %1089 = vst [vmem:[#allocation2 + $0x70] sm:$0xff] %v1073
      %1090 = vst [vmem:[#allocation2 + $0x88] sm:$0xff] %v1074
      %1091 = vst [vmem:[#allocation2 + $0xa0] sm:$0xff] %v1075
      %1092 = vst [vmem:[#allocation2 + $0xb8] sm:$0xff] %v1076
      %1093 = vst [vmem:[#allocation2 + $0xd0] sm:$0xff] %v1077
      %1094 = vst [vmem:[#allocation2 + $0xe8] sm:$0xff] %v1078
      %1095 = vst [vmem:[#allocation2 + $0x100] sm:$0xff] %v1079
      %1096 = vst [vmem:[#allocation2 + $0x118] sm:$0xff] %v1080
      %1097 = vst [vmem:[#allocation2 + $0x130] sm:$0xff] %v1081
      %1098 = vst [vmem:[#allocation2 + $0x148] sm:$0xff] %v1082
      %1099 = vst [vmem:[#allocation2 + $0x160] sm:$0xff] %v1083
      %1100 = vst [vmem:[#allocation2 + $0x178] sm:$0xff] %v1084
      %v1101 = vadd.f32 %v956, %v1069
      %v1102 = vadd.f32 %v957, %v1070
      %v1103 = vadd.f32 %v958, %v1071
      %v1104 = vadd.f32 %v959, %v1072
      %v1105 = vadd.f32 %v960, %v1073
      %v1106 = vadd.f32 %v961, %v1074
      %v1107 = vadd.f32 %v962, %v1075
      %v1108 = vadd.f32 %v963, %v1076
      %v1109 = vadd.f32 %v964, %v1077
      %v1110 = vadd.f32 %v965, %v1078
      %v1111 = vadd.f32 %v966, %v1079
      %v1112 = vadd.f32 %v967, %v1080
      %v1113 = vadd.f32 %v968, %v1081
      %v1114 = vadd.f32 %v969, %v1082
      %v1115 = vadd.f32 %v970, %v1083
      %v1116 = vadd.f32 %v971, %v1084
      %1117 = vst [vmem:[%s4] sm:$0xff] %v1101
      %1118 = vst [vmem:[%s4 + $0x8] sm:$0xff] %v1102
      %1119 = vst [vmem:[%s4 + $0x10] sm:$0xff] %v1103
      %1120 = vst [vmem:[%s4 + $0x18] sm:$0xff] %v1104
      %1121 = vst [vmem:[%s4 + $0x20] sm:$0xff] %v1105
      %1122 = vst [vmem:[%s4 + $0x28] sm:$0xff] %v1106
      %1123 = vst [vmem:[%s4 + $0x30] sm:$0xff] %v1107
      %1124 = vst [vmem:[%s4 + $0x38] sm:$0xff] %v1108
      %1125 = vst [vmem:[%s4 + $0x40] sm:$0xff] %v1109
      %1126 = vst [vmem:[%s4 + $0x48] sm:$0xff] %v1110
      %1127 = vst [vmem:[%s4 + $0x50] sm:$0xff] %v1111
      %1128 = vst [vmem:[%s4 + $0x58] sm:$0xff] %v1112
      %1129 = vst [vmem:[%s4 + $0x60] sm:$0xff] %v1113
      %1130 = vst [vmem:[%s4 + $0x68] sm:$0xff] %v1114
      %1131 = vst [vmem:[%s4 + $0x70] sm:$0xff] %v1115
      %1132 = vst [vmem:[%s4 + $0x78] sm:$0xff] %v1116
    $region21: #{pagcn_forward.13} parent=1 // pred_fallthru
      _
    // Predicated region
    $region22: #{pagcn_forward.13} parent=1 // pred_check
      _
    $region23: #{pagcn_forward.13} parent=1 // pred_check_branch
      %1134 = sbr.rel (0) target = $region25
    $region24: #{pagcn_forward.13} parent=1 // pred_region
      %s1136 = ssub.s32 6144, 6144
      %1137 = vsyncadd [#allocation3], %s1136
      %s1138 = sshll.u32 [#allocation2], 4
      %s1139 = int_to_ptr.vmem [resolvable:$true] %s1138
      %1144 = dma.vmem_to_hbm [thread:$0]  %s1139, 6144, %s3, [#allocation3], 384, 384, 24
    $region25: #{pagcn_forward.13} parent=1 // pred_fallthru
      _
    // Predicated region
    $region26: #{pagcn_forward.13} parent=1 // pred_check
      _
    $region27: #{pagcn_forward.13} parent=1 // pred_check_branch
      %1146 = sbr.rel (0) target = $region29
    $region28: #{pagcn_forward.13} parent=1 // pred_region
      _
    $region29: #{pagcn_forward.13} parent=1 // pred_fallthru
      _
    // Predicated region
    $region30: #{pagcn_forward.13} parent=1 // pred_check
      _
    $region31: #{pagcn_forward.13} parent=1 // pred_check_branch
      %1148 = sbr.rel (0) target = $region33
    $region32: #{pagcn_forward.13} parent=1 // pred_region
      %1149 = dma.done [#allocation3], 6144
    $region33: #{pagcn_forward.13} parent=1 // pred_fallthru
      _
    // Predicated region
    $region34: #{pagcn_forward.13} parent=1 // pred_check
      _
    $region35: #{pagcn_forward.13} parent=1 // pred_check_branch
      %1151 = sbr.rel (0) target = $region37
    $region36: #{pagcn_forward.13} parent=1 // pred_region
      _
    $region37: #{pagcn_forward.13} parent=1 // pred_fallthru
      _
    %1152 = vsyncpa [#allocation3], 1

</llo_original>
